<compile_context>
chip_gen: v7x
topology: tpu7x:2x2x1
jax: 0.10.0
libtpu: 0.0.40
codegen_flags: <defaults>
</compile_context>

<pallas_src>
import jax
import jax.numpy as jnp
from jax.experimental import pallas as pl
from jax.experimental.pallas import tpu as pltpu


def _vae_kernel(
    x_ref, eps_ref,
    w1_ref, b1_ref,
    w2_ref, b2_ref,        # fused (h_dim, 2*z_dim) head: [mu | logvar]
    w3_ref, b3_ref,
    w4_ref, b4_ref,
    recon_ref, mulogvar_ref,
):
    # --- encode: h1 = relu(x @ W1 + b1); bf16 matmul, f32 accumulate ---
    # x arrives f32; cast at the matmul input (free VPU op, hidden under MXU).
    x = x_ref[...].astype(jnp.bfloat16)               # (TILE_B, 784) bf16
    h1 = jnp.dot(x, w1_ref[...], preferred_element_type=jnp.float32) + b1_ref[...]
    h1 = jnp.maximum(h1, 0.0)                          # f32

    # --- fused latent heads: [mu | logvar] = h1 @ W2 + b2 (one MXU pass) ---
    ml = jnp.dot(h1.astype(jnp.bfloat16), w2_ref[...],
                 preferred_element_type=jnp.float32) + b2_ref[...]
    z_dim = ml.shape[-1] // 2
    mu = ml[:, :z_dim]
    logvar = ml[:, z_dim:]

    # --- reparametrize (f32 elementwise): z = eps * exp(0.5*logvar) + mu ---
    std = jnp.exp(0.5 * logvar)
    z = eps_ref[...] * std + mu

    # --- decode: h3 = relu(z @ W3 + b3); recon = sigmoid(h3 @ W4 + b4) ---
    h3 = jnp.dot(z.astype(jnp.bfloat16), w3_ref[...],
                 preferred_element_type=jnp.float32) + b3_ref[...]
    h3 = jnp.maximum(h3, 0.0)
    logits = jnp.dot(h3.astype(jnp.bfloat16), w4_ref[...],
                     preferred_element_type=jnp.float32) + b4_ref[...]

    # sigmoid = 1 / (1 + exp(-x)); exp and reciprocal both go to the EUP slot,
    # keeping the VALU slots free for the bias-add / relu / cast filler.
    e = jnp.exp(-logits)
    sig = pl.reciprocal(1.0 + e, approx=True)

    recon_ref[...] = sig.astype(recon_ref.dtype)       # bf16 store (half bytes)
    mulogvar_ref[...] = ml                             # f32 (narrow, few KB)


def _pick_tile_b(B):
    """Largest tile in {512, 256, 128} that divides B while keeping grid >= 2
    (v7x megacore + per-core double-buffering); otherwise one full-batch block
    (grid=1 is the right call on single-TC v5e/v6e for small batches)."""
    for t in (512, 256, 128):
        if B % t == 0 and B // t >= 2:
            return t
    return B


@jax.jit
def vae_forward(x, eps, params):
    B, in_dim = x.shape
    z2 = params["w2"].shape[1]          # 2 * z_dim
    z_dim = z2 // 2

    TILE_B = _pick_tile_b(B)
    grid = (B // TILE_B,)

    # Tiled (per-grid-step) operands.
    x_spec = pl.BlockSpec((TILE_B, in_dim), lambda i: (i, 0))
    eps_spec = pl.BlockSpec((TILE_B, z_dim), lambda i: (i, 0))
    recon_spec = pl.BlockSpec((TILE_B, in_dim), lambda i: (i, 0))
    ml_spec = pl.BlockSpec((TILE_B, z2), lambda i: (i, 0))

    # Weights / biases: full-array block, constant index_map -> VMEM-resident
    # across all grid steps (loaded once).
    def wspec(arr):
        return pl.BlockSpec(arr.shape, lambda i: (0, 0))

    args = (
        x, eps,
        params["w1"], params["b1"],
        params["w2"], params["b2"],
        params["w3"], params["b3"],
        params["w4"], params["b4"],
    )
    in_specs = [x_spec, eps_spec] + [wspec(a) for a in args[2:]]

    out_shape = (
        jax.ShapeDtypeStruct((B, in_dim), jnp.bfloat16),  # recon (bf16 writeback)
        jax.ShapeDtypeStruct((B, z2), jnp.float32),       # [mu | logvar]
    )

    recon, mulogvar = pl.pallas_call(
        _vae_kernel,
        out_shape=out_shape,
        grid=grid,
        in_specs=in_specs,
        out_specs=(recon_spec, ml_spec),
        compiler_params=pltpu.CompilerParams(
            dimension_semantics=("parallel",)),
    )(*args)

    mu = mulogvar[:, :z_dim]
    logvar = mulogvar[:, z_dim:]
    return recon, mu, logvar


def init_params(key, in_dim, h_dim, z_dim):
    """Deterministic init mirroring nn.Linear's U(-1/sqrt(fan_in), 1/sqrt(fan_in)).

    Weights stored as (in_features, out_features), bf16 (matmul operands).
    Biases stored as (1, out_features), f32 (added to the f32 accumulator).
    fc21/fc22 are fused into a single (h_dim, 2*z_dim) weight w2 / bias b2."""
    def linear(k, fan_in, fan_out):
        kw, kb = jax.random.split(k)
        bound = 1.0 / jnp.sqrt(fan_in)
        w = jax.random.uniform(kw, (fan_in, fan_out), jnp.float32, -bound, bound)
        b = jax.random.uniform(kb, (1, fan_out), jnp.float32, -bound, bound)
        return w, b

    k1, k21, k22, k3, k4 = jax.random.split(key, 5)
    w1, b1 = linear(k1, in_dim, h_dim)
    w21, b21 = linear(k21, h_dim, z_dim)
    w22, b22 = linear(k22, h_dim, z_dim)
    w3, b3 = linear(k3, z_dim, h_dim)
    w4, b4 = linear(k4, h_dim, in_dim)

    w2 = jnp.concatenate([w21, w22], axis=1)   # (h_dim, 2*z_dim)
    b2 = jnp.concatenate([b21, b22], axis=1)   # (1, 2*z_dim)

    to_bf16 = lambda w: w.astype(jnp.bfloat16)
    return dict(
        w1=to_bf16(w1), b1=b1,
        w2=to_bf16(w2), b2=b2,
        w3=to_bf16(w3), b3=b3,
        w4=to_bf16(w4), b4=b4,
    )


def vae_reference(x, eps, p):
    """Pure-JAX reference of the same forward pass (bf16 matmuls, f32 accum)."""
    xb = x.astype(jnp.bfloat16)
    h1 = jnp.maximum(
        jnp.dot(xb, p["w1"], preferred_element_type=jnp.float32) + p["b1"], 0.0)
    ml = jnp.dot(h1.astype(jnp.bfloat16), p["w2"],
                 preferred_element_type=jnp.float32) + p["b2"]
    z_dim = ml.shape[-1] // 2
    mu, logvar = ml[:, :z_dim], ml[:, z_dim:]
    z = eps * jnp.exp(0.5 * logvar) + mu
    h3 = jnp.maximum(
        jnp.dot(z.astype(jnp.bfloat16), p["w3"],
                preferred_element_type=jnp.float32) + p["b3"], 0.0)
    recon = jax.nn.sigmoid(
        jnp.dot(h3.astype(jnp.bfloat16), p["w4"],
                preferred_element_type=jnp.float32) + p["b4"])
    return recon, mu, logvar


if __name__ == "__main__":
    # 784 input features are fixed by the module; batch 256 exercises the
    # 2-step parallel batch grid (TILE_B=128) while staying small.
    B, IN_DIM, H_DIM, Z_DIM = 256, 784, 64, 16

    key = jax.random.PRNGKey(0)
    kx, keps, kp = jax.random.split(key, 3)

    x = jax.random.uniform(kx, (B, IN_DIM), jnp.float32)      # MNIST-like [0,1]
    eps = jax.random.normal(keps, (B, Z_DIM), jnp.float32)    # reparam noise
    params = init_params(kp, IN_DIM, H_DIM, Z_DIM)

    recon, mu, logvar = vae_forward(x, eps, params)
    jax.block_until_ready((recon, mu, logvar))

    # correctness check against pure-JAX reference (same bf16 matmul precision;
    # recon is stored bf16 by the kernel -> compare in f32 with 1e-2 tolerance)
    recon_r, mu_r, logvar_r = vae_reference(x, eps, params)
    assert recon.shape == (B, IN_DIM) and recon.dtype == jnp.bfloat16
    assert mu.shape == (B, Z_DIM) and logvar.shape == (B, Z_DIM)
    assert jnp.allclose(recon.astype(jnp.float32), recon_r, atol=1e-2, rtol=1e-2)
    assert jnp.allclose(mu, mu_r, atol=1e-2, rtol=1e-2)
    assert jnp.allclose(logvar, logvar_r, atol=1e-2, rtol=1e-2)

    print("KERNEL_OK")
</pallas_src>

<mosaic_0001>
module attributes {stable_mosaic.version = 11 : i64} {
  func.func @_vae_kernel(%arg0: i32, %arg1: memref<128x784xf32, #tpu.memory_space<vmem>>, %arg2: memref<128x16xf32, #tpu.memory_space<vmem>>, %arg3: memref<784x64xbf16, #tpu.memory_space<vmem>>, %arg4: memref<1x64xf32, #tpu.memory_space<vmem>>, %arg5: memref<64x32xbf16, #tpu.memory_space<vmem>>, %arg6: memref<1x32xf32, #tpu.memory_space<vmem>>, %arg7: memref<16x64xbf16, #tpu.memory_space<vmem>>, %arg8: memref<1x64xf32, #tpu.memory_space<vmem>>, %arg9: memref<64x784xbf16, #tpu.memory_space<vmem>>, %arg10: memref<1x784xf32, #tpu.memory_space<vmem>>, %arg11: memref<128x784xbf16, #tpu.memory_space<vmem>>, %arg12: memref<128x32xf32, #tpu.memory_space<vmem>>) attributes {dimension_semantics = [#tpu.dimension_semantics<parallel>], iteration_bounds = array<i64: 2>, scalar_prefetch = 0 : i64, scratch_operands = 0 : i64, tpu.core_type = #tpu.core_type<tc>, window_params = [{transform_indices = @transform_0, window_bounds = array<i64: 128, 784>}, {transform_indices = @transform_1, window_bounds = array<i64: 128, 16>}, {pipeline_mode = #tpu.pipeline_mode<synchronous>, transform_indices = @transform_2, window_bounds = array<i64: 784, 64>}, {pipeline_mode = #tpu.pipeline_mode<synchronous>, transform_indices = @transform_3, window_bounds = array<i64: 1, 64>}, {pipeline_mode = #tpu.pipeline_mode<synchronous>, transform_indices = @transform_4, window_bounds = array<i64: 64, 32>}, {pipeline_mode = #tpu.pipeline_mode<synchronous>, transform_indices = @transform_5, window_bounds = array<i64: 1, 32>}, {pipeline_mode = #tpu.pipeline_mode<synchronous>, transform_indices = @transform_6, window_bounds = array<i64: 16, 64>}, {pipeline_mode = #tpu.pipeline_mode<synchronous>, transform_indices = @transform_7, window_bounds = array<i64: 1, 64>}, {pipeline_mode = #tpu.pipeline_mode<synchronous>, transform_indices = @transform_8, window_bounds = array<i64: 64, 784>}, {pipeline_mode = #tpu.pipeline_mode<synchronous>, transform_indices = @transform_9, window_bounds = array<i64: 1, 784>}, {transform_indices = @transform_10, window_bounds = array<i64: 128, 784>}, {transform_indices = @transform_11, window_bounds = array<i64: 128, 32>}]} {
    %c0 = arith.constant 0 : index
    %c0_0 = arith.constant 0 : index
    %0 = vector.load %arg1[%c0, %c0_0] : memref<128x784xf32, #tpu.memory_space<vmem>>, vector<128x784xf32>
    %1 = arith.truncf %0 : vector<128x784xf32> to vector<128x784xbf16>
    %c0_1 = arith.constant 0 : index
    %c0_2 = arith.constant 0 : index
    %2 = vector.load %arg3[%c0_1, %c0_2] : memref<784x64xbf16, #tpu.memory_space<vmem>>, vector<784x64xbf16>
    %cst = arith.constant dense<0.000000e+00> : vector<128x64xf32>
    %3 = tpu.matmul %1, %2, %cst {dimension_numbers = #tpu.dot_dimension_numbers<[1], [0], [0], [1], [0, 0, 1, 1], [], []>} : vector<128x784xbf16>, vector<784x64xbf16>, vector<128x64xf32> -> vector<128x64xf32>
    %c0_3 = arith.constant 0 : index
    %c0_4 = arith.constant 0 : index
    %4 = vector.load %arg4[%c0_3, %c0_4] : memref<1x64xf32, #tpu.memory_space<vmem>>, vector<1x64xf32>
    %5 = vector.broadcast %4 : vector<1x64xf32> to vector<128x64xf32>
    %6 = arith.addf %3, %5 : vector<128x64xf32>
    %cst_5 = arith.constant 0.000000e+00 : f32
    %7 = vector.broadcast %cst_5 : f32 to vector<128x64xf32>
    %8 = arith.maximumf %6, %7 : vector<128x64xf32>
    %9 = arith.truncf %8 : vector<128x64xf32> to vector<128x64xbf16>
    %c0_6 = arith.constant 0 : index
    %c0_7 = arith.constant 0 : index
    %10 = vector.load %arg5[%c0_6, %c0_7] : memref<64x32xbf16, #tpu.memory_space<vmem>>, vector<64x32xbf16>
    %cst_8 = arith.constant dense<0.000000e+00> : vector<128x32xf32>
    %11 = tpu.matmul %9, %10, %cst_8 {dimension_numbers = #tpu.dot_dimension_numbers<[1], [0], [0], [1], [0, 0, 1, 1], [], []>} : vector<128x64xbf16>, vector<64x32xbf16>, vector<128x32xf32> -> vector<128x32xf32>
    %c0_9 = arith.constant 0 : index
    %c0_10 = arith.constant 0 : index
    %12 = vector.load %arg6[%c0_9, %c0_10] : memref<1x32xf32, #tpu.memory_space<vmem>>, vector<1x32xf32>
    %13 = vector.broadcast %12 : vector<1x32xf32> to vector<128x32xf32>
    %14 = arith.addf %11, %13 : vector<128x32xf32>
    %15 = vector.extract_strided_slice %14 {offsets = [0, 0], sizes = [128, 16], strides = [1, 1]} : vector<128x32xf32> to vector<128x16xf32>
    %16 = vector.extract_strided_slice %14 {offsets = [0, 16], sizes = [128, 16], strides = [1, 1]} : vector<128x32xf32> to vector<128x16xf32>
    %cst_11 = arith.constant 5.000000e-01 : f32
    %17 = vector.broadcast %cst_11 : f32 to vector<128x16xf32>
    %18 = arith.mulf %17, %16 : vector<128x16xf32>
    %19 = math.exp %18 : vector<128x16xf32>
    %c0_12 = arith.constant 0 : index
    %c0_13 = arith.constant 0 : index
    %20 = vector.load %arg2[%c0_12, %c0_13] : memref<128x16xf32, #tpu.memory_space<vmem>>, vector<128x16xf32>
    %21 = arith.mulf %20, %19 : vector<128x16xf32>
    %22 = arith.addf %21, %15 : vector<128x16xf32>
    %23 = arith.truncf %22 : vector<128x16xf32> to vector<128x16xbf16>
    %c0_14 = arith.constant 0 : index
    %c0_15 = arith.constant 0 : index
    %24 = vector.load %arg7[%c0_14, %c0_15] : memref<16x64xbf16, #tpu.memory_space<vmem>>, vector<16x64xbf16>
    %cst_16 = arith.constant dense<0.000000e+00> : vector<128x64xf32>
    %25 = tpu.matmul %23, %24, %cst_16 {dimension_numbers = #tpu.dot_dimension_numbers<[1], [0], [0], [1], [0, 0, 1, 1], [], []>} : vector<128x16xbf16>, vector<16x64xbf16>, vector<128x64xf32> -> vector<128x64xf32>
    %c0_17 = arith.constant 0 : index
    %c0_18 = arith.constant 0 : index
    %26 = vector.load %arg8[%c0_17, %c0_18] : memref<1x64xf32, #tpu.memory_space<vmem>>, vector<1x64xf32>
    %27 = vector.broadcast %26 : vector<1x64xf32> to vector<128x64xf32>
    %28 = arith.addf %25, %27 : vector<128x64xf32>
    %cst_19 = arith.constant 0.000000e+00 : f32
    %29 = vector.broadcast %cst_19 : f32 to vector<128x64xf32>
    %30 = arith.maximumf %28, %29 : vector<128x64xf32>
    %31 = arith.truncf %30 : vector<128x64xf32> to vector<128x64xbf16>
    %c0_20 = arith.constant 0 : index
    %c0_21 = arith.constant 0 : index
    %32 = vector.load %arg9[%c0_20, %c0_21] : memref<64x784xbf16, #tpu.memory_space<vmem>>, vector<64x784xbf16>
    %cst_22 = arith.constant dense<0.000000e+00> : vector<128x784xf32>
    %33 = tpu.matmul %31, %32, %cst_22 {dimension_numbers = #tpu.dot_dimension_numbers<[1], [0], [0], [1], [0, 0, 1, 1], [], []>} : vector<128x64xbf16>, vector<64x784xbf16>, vector<128x784xf32> -> vector<128x784xf32>
    %c0_23 = arith.constant 0 : index
    %c0_24 = arith.constant 0 : index
    %34 = vector.load %arg10[%c0_23, %c0_24] : memref<1x784xf32, #tpu.memory_space<vmem>>, vector<1x784xf32>
    %35 = vector.broadcast %34 : vector<1x784xf32> to vector<128x784xf32>
    %36 = arith.addf %33, %35 : vector<128x784xf32>
    %cst_25 = arith.constant 0.000000e+00 : f32
    %37 = vector.broadcast %cst_25 : f32 to vector<128x784xf32>
    %38 = arith.subf %37, %36 : vector<128x784xf32>
    %39 = math.exp %38 : vector<128x784xf32>
    %cst_26 = arith.constant 1.000000e+00 : f32
    %40 = vector.broadcast %cst_26 : f32 to vector<128x784xf32>
    %41 = arith.addf %40, %39 : vector<128x784xf32>
    %42 = tpu.reciprocal %41 {approx = true} : vector<128x784xf32> -> vector<128x784xf32>
    %43 = arith.truncf %42 : vector<128x784xf32> to vector<128x784xbf16>
    %c0_27 = arith.constant 0 : index
    %c0_28 = arith.constant 0 : index
    %44 = vector.load %arg11[%c0_27, %c0_28] : memref<128x784xbf16, #tpu.memory_space<vmem>>, vector<128x784xbf16>
    tpu.vector_store %arg11[%c0_27, %c0_28], %43 {strides = array<i32>} : memref<128x784xbf16, #tpu.memory_space<vmem>>, vector<128x784xbf16>,
    %c0_29 = arith.constant 0 : index
    %c0_30 = arith.constant 0 : index
    %45 = vector.load %arg12[%c0_29, %c0_30] : memref<128x32xf32, #tpu.memory_space<vmem>>, vector<128x32xf32>
    tpu.vector_store %arg12[%c0_29, %c0_30], %14 {strides = array<i32>} : memref<128x32xf32, #tpu.memory_space<vmem>>, vector<128x32xf32>,
    return
  }
  func.func @transform_0(%arg0: i32) -> (i32, i32) {
    %c0_i32 = arith.constant 0 : i32
    %c0_i32_0 = arith.constant 0 : i32
    return %arg0, %c0_i32 : i32, i32
  }
  func.func @transform_1(%arg0: i32) -> (i32, i32) {
    %c0_i32 = arith.constant 0 : i32
    %c0_i32_0 = arith.constant 0 : i32
    return %arg0, %c0_i32 : i32, i32
  }
  func.func @transform_2(%arg0: i32) -> (i32, i32) {
    %c0_i32 = arith.constant 0 : i32
    %c0_i32_0 = arith.constant 0 : i32
    %c0_i32_1 = arith.constant 0 : i32
    return %c0_i32, %c0_i32_0 : i32, i32
  }
  func.func @transform_3(%arg0: i32) -> (i32, i32) {
    %c0_i32 = arith.constant 0 : i32
    %c0_i32_0 = arith.constant 0 : i32
    %c0_i32_1 = arith.constant 0 : i32
    return %c0_i32, %c0_i32_0 : i32, i32
  }
  func.func @transform_4(%arg0: i32) -> (i32, i32) {
    %c0_i32 = arith.constant 0 : i32
    %c0_i32_0 = arith.constant 0 : i32
    %c0_i32_1 = arith.constant 0 : i32
    return %c0_i32, %c0_i32_0 : i32, i32
  }
  func.func @transform_5(%arg0: i32) -> (i32, i32) {
    %c0_i32 = arith.constant 0 : i32
    %c0_i32_0 = arith.constant 0 : i32
    %c0_i32_1 = arith.constant 0 : i32
    return %c0_i32, %c0_i32_0 : i32, i32
  }
  func.func @transform_6(%arg0: i32) -> (i32, i32) {
    %c0_i32 = arith.constant 0 : i32
    %c0_i32_0 = arith.constant 0 : i32
    %c0_i32_1 = arith.constant 0 : i32
    return %c0_i32, %c0_i32_0 : i32, i32
  }
  func.func @transform_7(%arg0: i32) -> (i32, i32) {
    %c0_i32 = arith.constant 0 : i32
    %c0_i32_0 = arith.constant 0 : i32
    %c0_i32_1 = arith.constant 0 : i32
    return %c0_i32, %c0_i32_0 : i32, i32
  }
  func.func @transform_8(%arg0: i32) -> (i32, i32) {
    %c0_i32 = arith.constant 0 : i32
    %c0_i32_0 = arith.constant 0 : i32
    %c0_i32_1 = arith.constant 0 : i32
    return %c0_i32, %c0_i32_0 : i32, i32
  }
  func.func @transform_9(%arg0: i32) -> (i32, i32) {
    %c0_i32 = arith.constant 0 : i32
    %c0_i32_0 = arith.constant 0 : i32
    %c0_i32_1 = arith.constant 0 : i32
    return %c0_i32, %c0_i32_0 : i32, i32
  }
  func.func @transform_10(%arg0: i32) -> (i32, i32) {
    %c0_i32 = arith.constant 0 : i32
    %c0_i32_0 = arith.constant 0 : i32
    return %arg0, %c0_i32 : i32, i32
  }
  func.func @transform_11(%arg0: i32) -> (i32, i32) {
    %c0_i32 = arith.constant 0 : i32
    %c0_i32_0 = arith.constant 0 : i32
    return %arg0, %c0_i32 : i32, i32
  }
}

</mosaic_0001>

<llo_original>
// kernel: vae_forward.1
$region0: #{vae_forward.1}
  #allocation0 [shape = 'u32[]', space=smem, size = 0x4, offset = 0x4, fixed_abs, tag = 'smem constant byte address 0x4 - core index']
  #allocation1 [shape = 'u32[144,128]{1,0:T(1,128)}', space=vmem, size = 0x12000, scoped, tag = 'internal scratch']
  %s0 = inlined_call_operand.vmem [shape: f32[256,784], index: 0, kind: input, shape index: {}]
  %s1 = inlined_call_operand.vmem [shape: f32[256,16], index: 1, kind: input, shape index: {}]
  %s2 = inlined_call_operand.vmem [shape: bf16[784,64], index: 2, kind: input, shape index: {}]
  %s3 = inlined_call_operand.vmem [shape: f32[1,64], index: 3, kind: input, shape index: {}]
  %s4 = inlined_call_operand.vmem [shape: bf16[64,32], index: 4, kind: input, shape index: {}]
  %s5 = inlined_call_operand.vmem [shape: f32[1,32], index: 5, kind: input, shape index: {}]
  %s6 = inlined_call_operand.vmem [shape: bf16[16,64], index: 6, kind: input, shape index: {}]
  %s7 = inlined_call_operand.vmem [shape: f32[1,64], index: 7, kind: input, shape index: {}]
  %s8 = inlined_call_operand.vmem [shape: bf16[64,784], index: 8, kind: input, shape index: {}]
  %s9 = inlined_call_operand.vmem [shape: f32[1,784], index: 9, kind: input, shape index: {}]
  %s10 = inlined_call_operand.vmem [shape: bf16[256,784], index: 10, kind: output, shape index: {0}]
  %s11 = inlined_call_operand.vmem [shape: f32[256,32], index: 11, kind: output, shape index: {1}]
  %12 = xla_tuple %s10, %s11
  %s13 = sld [smem:[#allocation0]]
  $region81: #{vae_forward.1} parent=0
    _
  %s15 = ssub.s32 1, %s13
  %s16 = scalar_select 0, %s15, %s13
  loop: start=0, step=1, limit=4
  $region2: #{vae_forward.1} parent=0 // loop_pre_header
    _
  $region3: #{vae_forward.1} parent=0 // loop_header
    %s18 = sphi 0, %s22
    %p19 = scmp.ge.s32.totalorder %s18, 4
    %s28 = sphi 0, %s30
    %s31 = sphi 0, %s28
    %s32 = sphi 0, %s31
    %s48 = sphi 0, %s32
    %s54 = sphi 0, %s56
    %s57 = sphi 0, %s54
    %s58 = sphi 0, %s57
    %s74 = sphi 0, %s58
    %s78 = sphi 0, %s78
    %s80 = sphi 0, %s78
    %s81 = sphi 0, %s80
    %s95 = sphi 0, %s81
    %s99 = sphi 0, %s99
    %s101 = sphi 0, %s99
    %s102 = sphi 0, %s101
    %s116 = sphi 0, %s102
    %s120 = sphi 0, %s120
    %s122 = sphi 0, %s120
    %s123 = sphi 0, %s122
    %s137 = sphi 0, %s123
    %s141 = sphi 0, %s141
    %s143 = sphi 0, %s141
    %s144 = sphi 0, %s143
    %s158 = sphi 0, %s144
    %s162 = sphi 0, %s162
    %s164 = sphi 0, %s162
    %s165 = sphi 0, %s164
    %s179 = sphi 0, %s165
    %s183 = sphi 0, %s183
    %s185 = sphi 0, %s183
    %s186 = sphi 0, %s185
    %s200 = sphi 0, %s186
    %s204 = sphi 0, %s204
    %s206 = sphi 0, %s204
    %s207 = sphi 0, %s206
    %s221 = sphi 0, %s207
    %s225 = sphi 0, %s225
    %s227 = sphi 0, %s225
    %s228 = sphi 0, %s227
    %s242 = sphi 0, %s228
    %s248 = sphi 0, %s250
    %s251 = sphi 0, %s248
    %s252 = sphi 0, %s251
    %s268 = sphi 0, %s252
    %s274 = sphi 0, %s276
    %s277 = sphi 0, %s274
    %s278 = sphi 0, %s277
    %s294 = sphi 0, %s278
  $region4: #{vae_forward.1} parent=0 // loop_header_branch
    %21 = sbr.rel (%p19) target = $region8
  $region5: #{vae_forward.1} parent=0 // loop_body
    %s23 = ssub.s32 %s18, 1
    %s24 = ssub.s32 %s18, 2
    %s25 = sadd.s32 %s18, 1
    %s26 = ssub.s32 %s18, %s25
    %p27 = scmp.eq.s32.totalorder %s26, 0
    %s29 = sadd.s32 %s28, 1
    %s30 = scalar_select %p27, %s28, %s29
    %p33 = pneg %p27
    %p34 = scmp.eq.s32.totalorder %s18, 1
    %p35 = por %p33, %p34
    %p36 = scmp.ne.s32.totalorder %s28, %s31
    %p37 = scmp.eq.s32.totalorder %s18, 0
    %p38 = por %p36, %p37
    %p39 = scmp.ne.s32.totalorder %s28, %s31
    %p40 = scmp.eq.s32.totalorder %s23, 1
    %p41 = por %p39, %p40
    %p42 = scmp.ne.s32.totalorder %s31, %s32
    %p43 = scmp.eq.s32.totalorder %s23, 0
    %p44 = por %p42, %p43
    %p45 = scmp.ne.s32.totalorder %s31, %s32
    %p46 = scmp.eq.s32.totalorder %s24, 1
    %p47 = por %p45, %p46
    %p49 = scmp.ne.s32.totalorder %s32, %s48
    %p50 = scmp.eq.s32.totalorder %s24, 0
    %p51 = por %p49, %p50
    %s52 = ssub.s32 %s18, %s25
    %p53 = scmp.eq.s32.totalorder %s52, 0
    %s55 = sadd.s32 %s54, 1
    %s56 = scalar_select %p53, %s54, %s55
    %p59 = pneg %p53
    %p60 = scmp.eq.s32.totalorder %s18, 1
    %p61 = por %p59, %p60
    %p62 = scmp.ne.s32.totalorder %s54, %s57
    %p63 = scmp.eq.s32.totalorder %s18, 0
    %p64 = por %p62, %p63
    %p65 = scmp.ne.s32.totalorder %s54, %s57
    %p66 = scmp.eq.s32.totalorder %s23, 1
    %p67 = por %p65, %p66
    %p68 = scmp.ne.s32.totalorder %s57, %s58
    %p69 = scmp.eq.s32.totalorder %s23, 0
    %p70 = por %p68, %p69
    %p71 = scmp.ne.s32.totalorder %s57, %s58
    %p72 = scmp.eq.s32.totalorder %s24, 1
    %p73 = por %p71, %p72
    %p75 = scmp.ne.s32.totalorder %s58, %s74
    %p76 = scmp.eq.s32.totalorder %s24, 0
    %p77 = por %p75, %p76
    %s79 = sadd.s32 %s78, 1
    %p82 = scmp.eq.s32.totalorder %s18, 1
    %p83 = scmp.ne.s32.totalorder %s78, %s80
    %p84 = scmp.eq.s32.totalorder %s18, 0
    %p85 = por %p83, %p84
    %p86 = scmp.ne.s32.totalorder %s78, %s80
    %p87 = scmp.eq.s32.totalorder %s23, 1
    %p88 = por %p86, %p87
    %p89 = scmp.ne.s32.totalorder %s80, %s81
    %p90 = scmp.eq.s32.totalorder %s23, 0
    %p91 = por %p89, %p90
    %p92 = scmp.ne.s32.totalorder %s80, %s81
    %p93 = scmp.eq.s32.totalorder %s24, 1
    %p94 = por %p92, %p93
    %p96 = scmp.ne.s32.totalorder %s81, %s95
    %p97 = scmp.eq.s32.totalorder %s24, 0
    %p98 = por %p96, %p97
    %s100 = sadd.s32 %s99, 1
    %p103 = scmp.eq.s32.totalorder %s18, 1
    %p104 = scmp.ne.s32.totalorder %s99, %s101
    %p105 = scmp.eq.s32.totalorder %s18, 0
    %p106 = por %p104, %p105
    %p107 = scmp.ne.s32.totalorder %s99, %s101
    %p108 = scmp.eq.s32.totalorder %s23, 1
    %p109 = por %p107, %p108
    %p110 = scmp.ne.s32.totalorder %s101, %s102
    %p111 = scmp.eq.s32.totalorder %s23, 0
    %p112 = por %p110, %p111
    %p113 = scmp.ne.s32.totalorder %s101, %s102
    %p114 = scmp.eq.s32.totalorder %s24, 1
    %p115 = por %p113, %p114
    %p117 = scmp.ne.s32.totalorder %s102, %s116
    %p118 = scmp.eq.s32.totalorder %s24, 0
    %p119 = por %p117, %p118
    %s121 = sadd.s32 %s120, 1
    %p124 = scmp.eq.s32.totalorder %s18, 1
    %p125 = scmp.ne.s32.totalorder %s120, %s122
    %p126 = scmp.eq.s32.totalorder %s18, 0
    %p127 = por %p125, %p126
    %p128 = scmp.ne.s32.totalorder %s120, %s122
    %p129 = scmp.eq.s32.totalorder %s23, 1
    %p130 = por %p128, %p129
    %p131 = scmp.ne.s32.totalorder %s122, %s123
    %p132 = scmp.eq.s32.totalorder %s23, 0
    %p133 = por %p131, %p132
    %p134 = scmp.ne.s32.totalorder %s122, %s123
    %p135 = scmp.eq.s32.totalorder %s24, 1
    %p136 = por %p134, %p135
    %p138 = scmp.ne.s32.totalorder %s123, %s137
    %p139 = scmp.eq.s32.totalorder %s24, 0
    %p140 = por %p138, %p139
    %s142 = sadd.s32 %s141, 1
    %p145 = scmp.eq.s32.totalorder %s18, 1
    %p146 = scmp.ne.s32.totalorder %s141, %s143
    %p147 = scmp.eq.s32.totalorder %s18, 0
    %p148 = por %p146, %p147
    %p149 = scmp.ne.s32.totalorder %s141, %s143
    %p150 = scmp.eq.s32.totalorder %s23, 1
    %p151 = por %p149, %p150
    %p152 = scmp.ne.s32.totalorder %s143, %s144
    %p153 = scmp.eq.s32.totalorder %s23, 0
    %p154 = por %p152, %p153
    %p155 = scmp.ne.s32.totalorder %s143, %s144
    %p156 = scmp.eq.s32.totalorder %s24, 1
    %p157 = por %p155, %p156
    %p159 = scmp.ne.s32.totalorder %s144, %s158
    %p160 = scmp.eq.s32.totalorder %s24, 0
    %p161 = por %p159, %p160
    %s163 = sadd.s32 %s162, 1
    %p166 = scmp.eq.s32.totalorder %s18, 1
    %p167 = scmp.ne.s32.totalorder %s162, %s164
    %p168 = scmp.eq.s32.totalorder %s18, 0
    %p169 = por %p167, %p168
    %p170 = scmp.ne.s32.totalorder %s162, %s164
    %p171 = scmp.eq.s32.totalorder %s23, 1
    %p172 = por %p170, %p171
    %p173 = scmp.ne.s32.totalorder %s164, %s165
    %p174 = scmp.eq.s32.totalorder %s23, 0
    %p175 = por %p173, %p174
    %p176 = scmp.ne.s32.totalorder %s164, %s165
    %p177 = scmp.eq.s32.totalorder %s24, 1
    %p178 = por %p176, %p177
    %p180 = scmp.ne.s32.totalorder %s165, %s179
    %p181 = scmp.eq.s32.totalorder %s24, 0
    %p182 = por %p180, %p181
    %s184 = sadd.s32 %s183, 1
    %p187 = scmp.eq.s32.totalorder %s18, 1
    %p188 = scmp.ne.s32.totalorder %s183, %s185
    %p189 = scmp.eq.s32.totalorder %s18, 0
    %p190 = por %p188, %p189
    %p191 = scmp.ne.s32.totalorder %s183, %s185
    %p192 = scmp.eq.s32.totalorder %s23, 1
    %p193 = por %p191, %p192
    %p194 = scmp.ne.s32.totalorder %s185, %s186
    %p195 = scmp.eq.s32.totalorder %s23, 0
    %p196 = por %p194, %p195
    %p197 = scmp.ne.s32.totalorder %s185, %s186
    %p198 = scmp.eq.s32.totalorder %s24, 1
    %p199 = por %p197, %p198
    %p201 = scmp.ne.s32.totalorder %s186, %s200
    %p202 = scmp.eq.s32.totalorder %s24, 0
    %p203 = por %p201, %p202
    %s205 = sadd.s32 %s204, 1
    %p208 = scmp.eq.s32.totalorder %s18, 1
    %p209 = scmp.ne.s32.totalorder %s204, %s206
    %p210 = scmp.eq.s32.totalorder %s18, 0
    %p211 = por %p209, %p210
    %p212 = scmp.ne.s32.totalorder %s204, %s206
    %p213 = scmp.eq.s32.totalorder %s23, 1
    %p214 = por %p212, %p213
    %p215 = scmp.ne.s32.totalorder %s206, %s207
    %p216 = scmp.eq.s32.totalorder %s23, 0
    %p217 = por %p215, %p216
    %p218 = scmp.ne.s32.totalorder %s206, %s207
    %p219 = scmp.eq.s32.totalorder %s24, 1
    %p220 = por %p218, %p219
    %p222 = scmp.ne.s32.totalorder %s207, %s221
    %p223 = scmp.eq.s32.totalorder %s24, 0
    %p224 = por %p222, %p223
    %s226 = sadd.s32 %s225, 1
    %p229 = scmp.eq.s32.totalorder %s18, 1
    %p230 = scmp.ne.s32.totalorder %s225, %s227
    %p231 = scmp.eq.s32.totalorder %s18, 0
    %p232 = por %p230, %p231
    %p233 = scmp.ne.s32.totalorder %s225, %s227
    %p234 = scmp.eq.s32.totalorder %s23, 1
    %p235 = por %p233, %p234
    %p236 = scmp.ne.s32.totalorder %s227, %s228
    %p237 = scmp.eq.s32.totalorder %s23, 0
    %p238 = por %p236, %p237
    %p239 = scmp.ne.s32.totalorder %s227, %s228
    %p240 = scmp.eq.s32.totalorder %s24, 1
    %p241 = por %p239, %p240
    %p243 = scmp.ne.s32.totalorder %s228, %s242
    %p244 = scmp.eq.s32.totalorder %s24, 0
    %p245 = por %p243, %p244
    %s246 = ssub.s32 %s18, %s25
    %p247 = scmp.eq.s32.totalorder %s246, 0
    %s249 = sadd.s32 %s248, 1
    %s250 = scalar_select %p247, %s248, %s249
    %p253 = pneg %p247
    %p254 = scmp.eq.s32.totalorder %s18, 1
    %p255 = por %p253, %p254
    %p256 = scmp.ne.s32.totalorder %s248, %s251
    %p257 = scmp.eq.s32.totalorder %s18, 0
    %p258 = por %p256, %p257
    %p259 = scmp.ne.s32.totalorder %s248, %s251
    %p260 = scmp.eq.s32.totalorder %s23, 1
    %p261 = por %p259, %p260
    %p262 = scmp.ne.s32.totalorder %s251, %s252
    %p263 = scmp.eq.s32.totalorder %s23, 0
    %p264 = por %p262, %p263
    %p265 = scmp.ne.s32.totalorder %s251, %s252
    %p266 = scmp.eq.s32.totalorder %s24, 1
    %p267 = por %p265, %p266
    %p269 = scmp.ne.s32.totalorder %s252, %s268
    %p270 = scmp.eq.s32.totalorder %s24, 0
    %p271 = por %p269, %p270
    %s272 = ssub.s32 %s18, %s25
    %p273 = scmp.eq.s32.totalorder %s272, 0
    %s275 = sadd.s32 %s274, 1
    %s276 = scalar_select %p273, %s274, %s275
    %p279 = pneg %p273
    %p280 = scmp.eq.s32.totalorder %s18, 1
    %p281 = por %p279, %p280
    %p282 = scmp.ne.s32.totalorder %s274, %s277
    %p283 = scmp.eq.s32.totalorder %s18, 0
    %p284 = por %p282, %p283
    %p285 = scmp.ne.s32.totalorder %s274, %s277
    %p286 = scmp.eq.s32.totalorder %s23, 1
    %p287 = por %p285, %p286
    %p288 = scmp.ne.s32.totalorder %s277, %s278
    %p289 = scmp.eq.s32.totalorder %s23, 0
    %p290 = por %p288, %p289
    %p291 = scmp.ne.s32.totalorder %s277, %s278
    %p292 = scmp.eq.s32.totalorder %s24, 1
    %p293 = por %p291, %p292
    %p295 = scmp.ne.s32.totalorder %s278, %s294
    %p296 = scmp.eq.s32.totalorder %s24, 0
    %p297 = por %p295, %p296
    %p298 = scmp.le.s32.totalorder 1, %s18
    %p299 = scmp.lt.s32.totalorder %s18, 3
    %p300 = pnand %p298, %p299
    %p301 = pneg %p300
    // Predicated region
    $region9: #{vae_forward.1} parent=5 // pred_check
      _
    $region10: #{vae_forward.1} parent=5 // pred_check_branch
      %303 = sbr.rel (%p300) target = $region12
    $region11: #{vae_forward.1} parent=5 // pred_region
      %s304 = ssub.s32 %s18, 1
      // Predicated region
      $region13: #{vae_forward.1} parent=11 // pred_check
        %p305 = pneg %p91
      $region14: #{vae_forward.1} parent=11 // pred_check_branch
        %307 = sbr.rel (%p305) target = $region16
      $region15: #{vae_forward.1} parent=11 // pred_region
        _
      $region16: #{vae_forward.1} parent=11 // pred_fallthru
        _
      // Predicated region
      $region17: #{vae_forward.1} parent=11 // pred_check
        %p308 = pneg %p112
      $region18: #{vae_forward.1} parent=11 // pred_check_branch
        %310 = sbr.rel (%p308) target = $region20
      $region19: #{vae_forward.1} parent=11 // pred_region
        _
      $region20: #{vae_forward.1} parent=11 // pred_fallthru
        _
      // Predicated region
      $region21: #{vae_forward.1} parent=11 // pred_check
        %p311 = pneg %p133
      $region22: #{vae_forward.1} parent=11 // pred_check_branch
        %313 = sbr.rel (%p311) target = $region24
      $region23: #{vae_forward.1} parent=11 // pred_region
        _
      $region24: #{vae_forward.1} parent=11 // pred_fallthru
        _
      // Predicated region
      $region25: #{vae_forward.1} parent=11 // pred_check
        %p314 = pneg %p154
      $region26: #{vae_forward.1} parent=11 // pred_check_branch
        %316 = sbr.rel (%p314) target = $region28
      $region27: #{vae_forward.1} parent=11 // pred_region
        _
      $region28: #{vae_forward.1} parent=11 // pred_fallthru
        _
      // Predicated region
      $region29: #{vae_forward.1} parent=11 // pred_check
        %p317 = pneg %p175
      $region30: #{vae_forward.1} parent=11 // pred_check_branch
        %319 = sbr.rel (%p317) target = $region32
      $region31: #{vae_forward.1} parent=11 // pred_region
        _
      $region32: #{vae_forward.1} parent=11 // pred_fallthru
        _
      // Predicated region
      $region33: #{vae_forward.1} parent=11 // pred_check
        %p320 = pneg %p196
      $region34: #{vae_forward.1} parent=11 // pred_check_branch
        %322 = sbr.rel (%p320) target = $region36
      $region35: #{vae_forward.1} parent=11 // pred_region
        _
      $region36: #{vae_forward.1} parent=11 // pred_fallthru
        _
      // Predicated region
      $region37: #{vae_forward.1} parent=11 // pred_check
        %p323 = pneg %p217
      $region38: #{vae_forward.1} parent=11 // pred_check_branch
        %325 = sbr.rel (%p323) target = $region40
      $region39: #{vae_forward.1} parent=11 // pred_region
        _
      $region40: #{vae_forward.1} parent=11 // pred_fallthru
        _
      // Predicated region
      $region41: #{vae_forward.1} parent=11 // pred_check
        %p326 = pneg %p238
      $region42: #{vae_forward.1} parent=11 // pred_check_branch
        %328 = sbr.rel (%p326) target = $region44
      $region43: #{vae_forward.1} parent=11 // pred_region
        _
      $region44: #{vae_forward.1} parent=11 // pred_fallthru
        _
    $region12: #{vae_forward.1} parent=5 // pred_fallthru
      _
    %p329 = scmp.lt.s32.totalorder %s18, 2
    // Predicated region
    $region45: #{vae_forward.1} parent=5 // pred_check
      %p330 = pneg %p329
    $region46: #{vae_forward.1} parent=5 // pred_check_branch
      %332 = sbr.rel (%p330) target = $region48
    $region47: #{vae_forward.1} parent=5 // pred_region
      // Predicated region
      $region49: #{vae_forward.1} parent=47 // pred_check
        %p333 = pneg %p38
      $region50: #{vae_forward.1} parent=47 // pred_check_branch
        %335 = sbr.rel (%p333) target = $region52
      $region51: #{vae_forward.1} parent=47 // pred_region
        %s336 = smul.u32 16, %s18
        %p337 = scmp.lt.s32.totalorder %s336, 31
        %s338 = scalar_select %p337, %s336, 31
        %s339 = smul.addr %s338, 7
        %s340 = smul.addr %s339, 8
        %s341 = scalar_lea.vmem %s0, %s340
        %s342 = smul.u32 16, %s18
      $region52: #{vae_forward.1} parent=47 // pred_fallthru
        _
      // Predicated region
      $region53: #{vae_forward.1} parent=47 // pred_check
        %p343 = pneg %p64
      $region54: #{vae_forward.1} parent=47 // pred_check_branch
        %345 = sbr.rel (%p343) target = $region56
      $region55: #{vae_forward.1} parent=47 // pred_region
        %s346 = smul.u32 16, %s18
        %p347 = scmp.lt.s32.totalorder %s346, 31
        %s348 = scalar_select %p347, %s346, 31
        %s349 = smul.addr %s348, 8
        %s350 = scalar_lea.vmem %s1, %s349
        %s351 = smul.u32 16, %s18
      $region56: #{vae_forward.1} parent=47 // pred_fallthru
        _
    $region48: #{vae_forward.1} parent=5 // pred_fallthru
      _
    %p352 = scmp.le.s32.totalorder 1, %s18
    %p353 = scmp.lt.s32.totalorder %s18, 3
    %p354 = pnand %p352, %p353
    %p355 = pneg %p354
    // Predicated region
    $region57: #{vae_forward.1} parent=5 // pred_check
      _
    $region58: #{vae_forward.1} parent=5 // pred_check_branch
      %357 = sbr.rel (%p354) target = $region60
    $region59: #{vae_forward.1} parent=5 // pred_region
      %s358 = ssub.s32 %s18, 1
      %s359 = smul.u32 16, %s23
      %p360 = scmp.lt.s32.totalorder %s359, 31
      %s361 = scalar_select %p360, %s359, 31
      %s362 = smul.addr %s361, 7
      %s363 = smul.addr %s362, 8
      %s364 = scalar_lea.vmem %s0, %s363
      %p365 = pneg %p44
      %p366 = pneg %p41
      %s367 = smul.u32 16, %s23
      %p368 = scmp.lt.s32.totalorder %s367, 31
      %s369 = scalar_select %p368, %s367, 31
      %s370 = smul.addr %s369, 8
      %s371 = scalar_lea.vmem %s1, %s370
      %p372 = pneg %p70
      %p373 = pneg %p67
      %p374 = pneg %p91
      %p375 = pneg %p88
      %p376 = pneg %p112
      %p377 = pneg %p109
      %p378 = pneg %p133
      %p379 = pneg %p130
      %p380 = pneg %p154
      %p381 = pneg %p151
      %p382 = pneg %p175
      %p383 = pneg %p172
      %p384 = pneg %p196
      %p385 = pneg %p193
      %p386 = pneg %p217
      %p387 = pneg %p214
      %p388 = pneg %p238
      %p389 = pneg %p235
      %p390 = pneg %p264
      %p391 = pneg %p261
      %s392 = smul.u32 16, %s23
      %p393 = scmp.lt.s32.totalorder %s392, 31
      %s394 = scalar_select %p393, %s392, 31
      %s395 = smul.addr %s394, 7
      %s396 = smul.addr %s395, 4
      %s397 = scalar_lea.vmem %s10, %s396
      %p398 = pneg %p290
      %p399 = pneg %p287
      %s400 = smul.u32 16, %s23
      %p401 = scmp.lt.s32.totalorder %s400, 31
      %s402 = scalar_select %p401, %s400, 31
      %s403 = smul.addr %s402, 8
      %s404 = scalar_lea.vmem %s11, %s403
      %s405 = smul.u32 16, %s23
      %p406 = scmp.lt.s32.totalorder %s405, 31
      %s407 = scalar_select %p406, %s405, 31
      %s408 = smul.addr %s407, 7
      %s409 = smul.addr %s408, 8
      %s410 = scalar_lea.vmem %s0, %s409
      %s411 = smul.u32 16, %s23
      %s412 = smul.u32 16, %s23
      %p413 = scmp.lt.s32.totalorder %s412, 31
      %s414 = scalar_select %p413, %s412, 31
      %s415 = smul.addr %s414, 8
      %s416 = scalar_lea.vmem %s1, %s415
      %s417 = smul.u32 16, %s23
      %s418 = smul.u32 16, %s23
      %p419 = scmp.lt.s32.totalorder %s418, 31
      %s420 = scalar_select %p419, %s418, 31
      %s421 = smul.addr %s420, 7
      %s422 = smul.addr %s421, 4
      %s423 = scalar_lea.vmem %s10, %s422
      %s424 = smul.u32 16, %s23
      %s425 = smul.u32 16, %s23
      %p426 = scmp.lt.s32.totalorder %s425, 31
      %s427 = scalar_select %p426, %s425, 31
      %s428 = smul.addr %s427, 8
      %s429 = scalar_lea.vmem %s11, %s428
      %s430 = smul.u32 16, %s23
      %v432 = vld [vmem:[%s410] sm:$0xff]
      %v433 = vld [vmem:[%s410 + $0x8] sm:$0xff]
      %v434 = vld [vmem:[%s410 + $0x10] sm:$0xff]
      %v435 = vld [vmem:[%s410 + $0x18] sm:$0xff]
      %v436 = vld [vmem:[%s410 + $0x20] sm:$0xff]
      %v437 = vld [vmem:[%s410 + $0x28] sm:$0xff]
      %v438 = vld [vmem:[%s410 + $0x30] sm:$0xff]
      %v439 = vld [vmem:[%s410 + $0x38] sm:$0xff]
      %v440 = vld [vmem:[%s410 + $0x40] sm:$0xff]
      %v441 = vld [vmem:[%s410 + $0x48] sm:$0xff]
      %v442 = vld [vmem:[%s410 + $0x50] sm:$0xff]
      %v443 = vld [vmem:[%s410 + $0x58] sm:$0xff]
      %v444 = vld [vmem:[%s410 + $0x60] sm:$0xff]
      %v445 = vld [vmem:[%s410 + $0x68] sm:$0xff]
      %v446 = vld [vmem:[%s410 + $0x70] sm:$0xff]
      %v447 = vld [vmem:[%s410 + $0x78] sm:$0xff]
      %v448 = vld [vmem:[%s410 + $0x80] sm:$0xff]
      %v449 = vld [vmem:[%s410 + $0x88] sm:$0xff]
      %v450 = vld [vmem:[%s410 + $0x90] sm:$0xff]
      %v451 = vld [vmem:[%s410 + $0x98] sm:$0xff]
      %v452 = vld [vmem:[%s410 + $0xa0] sm:$0xff]
      %v453 = vld [vmem:[%s410 + $0xa8] sm:$0xff]
      %v454 = vld [vmem:[%s410 + $0xb0] sm:$0xff]
      %v455 = vld [vmem:[%s410 + $0xb8] sm:$0xff]
      %v456 = vld [vmem:[%s410 + $0xc0] sm:$0xff]
      %v457 = vld [vmem:[%s410 + $0xc8] sm:$0xff]
      %v458 = vld [vmem:[%s410 + $0xd0] sm:$0xff]
      %v459 = vld [vmem:[%s410 + $0xd8] sm:$0xff]
      %v460 = vld [vmem:[%s410 + $0xe0] sm:$0xff]
      %v461 = vld [vmem:[%s410 + $0xe8] sm:$0xff]
      %v462 = vld [vmem:[%s410 + $0xf0] sm:$0xff]
      %v463 = vld [vmem:[%s410 + $0xf8] sm:$0xff]
      %v464 = vld [vmem:[%s410 + $0x100] sm:$0xff]
      %v465 = vld [vmem:[%s410 + $0x108] sm:$0xff]
      %v466 = vld [vmem:[%s410 + $0x110] sm:$0xff]
      %v467 = vld [vmem:[%s410 + $0x118] sm:$0xff]
      %v468 = vld [vmem:[%s410 + $0x120] sm:$0xff]
      %v469 = vld [vmem:[%s410 + $0x128] sm:$0xff]
      %v470 = vld [vmem:[%s410 + $0x130] sm:$0xff]
      %v471 = vld [vmem:[%s410 + $0x138] sm:$0xff]
      %v472 = vld [vmem:[%s410 + $0x140] sm:$0xff]
      %v473 = vld [vmem:[%s410 + $0x148] sm:$0xff]
      %v474 = vld [vmem:[%s410 + $0x150] sm:$0xff]
      %v475 = vld [vmem:[%s410 + $0x158] sm:$0xff]
      %v476 = vld [vmem:[%s410 + $0x160] sm:$0xff]
      %v477 = vld [vmem:[%s410 + $0x168] sm:$0xff]
      %v478 = vld [vmem:[%s410 + $0x170] sm:$0xff]
      %v479 = vld [vmem:[%s410 + $0x178] sm:$0xff]
      %v480 = vld [vmem:[%s410 + $0x180] sm:$0xff]
      %v481 = vld [vmem:[%s410 + $0x188] sm:$0xff]
      %v482 = vld [vmem:[%s410 + $0x190] sm:$0xff]
      %v483 = vld [vmem:[%s410 + $0x198] sm:$0xff]
      %v484 = vld [vmem:[%s410 + $0x1a0] sm:$0xff]
      %v485 = vld [vmem:[%s410 + $0x1a8] sm:$0xff]
      %v486 = vld [vmem:[%s410 + $0x1b0] sm:$0xff]
      %v487 = vld [vmem:[%s410 + $0x1b8] sm:$0xff]
      %v488 = vld [vmem:[%s410 + $0x1c0] sm:$0xff]
      %v489 = vld [vmem:[%s410 + $0x1c8] sm:$0xff]
      %v490 = vld [vmem:[%s410 + $0x1d0] sm:$0xff]
      %v491 = vld [vmem:[%s410 + $0x1d8] sm:$0xff]
      %v492 = vld [vmem:[%s410 + $0x1e0] sm:$0xff]
      %v493 = vld [vmem:[%s410 + $0x1e8] sm:$0xff]
      %v494 = vld [vmem:[%s410 + $0x1f0] sm:$0xff]
      %v495 = vld [vmem:[%s410 + $0x1f8] sm:$0xff]
      %v496 = vld [vmem:[%s410 + $0x200] sm:$0xff]
      %v497 = vld [vmem:[%s410 + $0x208] sm:$0xff]
      %v498 = vld [vmem:[%s410 + $0x210] sm:$0xff]
      %v499 = vld [vmem:[%s410 + $0x218] sm:$0xff]
      %v500 = vld [vmem:[%s410 + $0x220] sm:$0xff]
      %v501 = vld [vmem:[%s410 + $0x228] sm:$0xff]
      %v502 = vld [vmem:[%s410 + $0x230] sm:$0xff]
      %v503 = vld [vmem:[%s410 + $0x238] sm:$0xff]
      %v504 = vld [vmem:[%s410 + $0x240] sm:$0xff]
      %v505 = vld [vmem:[%s410 + $0x248] sm:$0xff]
      %v506 = vld [vmem:[%s410 + $0x250] sm:$0xff]
      %v507 = vld [vmem:[%s410 + $0x258] sm:$0xff]
      %v508 = vld [vmem:[%s410 + $0x260] sm:$0xff]
      %v509 = vld [vmem:[%s410 + $0x268] sm:$0xff]
      %v510 = vld [vmem:[%s410 + $0x270] sm:$0xff]
      %v511 = vld [vmem:[%s410 + $0x278] sm:$0xff]
      %v512 = vld [vmem:[%s410 + $0x280] sm:$0xff]
      %v513 = vld [vmem:[%s410 + $0x288] sm:$0xff]
      %v514 = vld [vmem:[%s410 + $0x290] sm:$0xff]
      %v515 = vld [vmem:[%s410 + $0x298] sm:$0xff]
      %v516 = vld [vmem:[%s410 + $0x2a0] sm:$0xff]
      %v517 = vld [vmem:[%s410 + $0x2a8] sm:$0xff]
      %v518 = vld [vmem:[%s410 + $0x2b0] sm:$0xff]
      %v519 = vld [vmem:[%s410 + $0x2b8] sm:$0xff]
      %v520 = vld [vmem:[%s410 + $0x2c0] sm:$0xff]
      %v521 = vld [vmem:[%s410 + $0x2c8] sm:$0xff]
      %v522 = vld [vmem:[%s410 + $0x2d0] sm:$0xff]
      %v523 = vld [vmem:[%s410 + $0x2d8] sm:$0xff]
      %v524 = vld [vmem:[%s410 + $0x2e0] sm:$0xff]
      %v525 = vld [vmem:[%s410 + $0x2e8] sm:$0xff]
      %v526 = vld [vmem:[%s410 + $0x2f0] sm:$0xff]
      %v527 = vld [vmem:[%s410 + $0x2f8] sm:$0xff]
      %v528 = vld [vmem:[%s410 + $0x300] sm:$0xff]
      %v529 = vld [vmem:[%s410 + $0x308] sm:$0xff]
      %v530 = vld [vmem:[%s410 + $0x310] sm:$0xff]
      %v531 = vld [vmem:[%s410 + $0x318] sm:$0xff]
      %v532 = vld [vmem:[%s410 + $0x320] sm:$0xff]
      %v533 = vld [vmem:[%s410 + $0x328] sm:$0xff]
      %v534 = vld [vmem:[%s410 + $0x330] sm:$0xff]
      %v535 = vld [vmem:[%s410 + $0x338] sm:$0xff]
      %v536 = vld [vmem:[%s410 + $0x340] sm:$0xff]
      %v537 = vld [vmem:[%s410 + $0x348] sm:$0xff]
      %v538 = vld [vmem:[%s410 + $0x350] sm:$0xff]
      %v539 = vld [vmem:[%s410 + $0x358] sm:$0xff]
      %v540 = vld [vmem:[%s410 + $0x360] sm:$0xff]
      %v541 = vld [vmem:[%s410 + $0x368] sm:$0xff]
      %v542 = vld [vmem:[%s410 + $0x370] sm:$0xff]
      %v543 = vld [vmem:[%s410 + $0x378] sm:$0xff]
      %v544 = vpack.c.bf16 %v439, %v432
      %v545 = vpack.c.bf16 %v440, %v433
      %v546 = vpack.c.bf16 %v441, %v434
      %v547 = vpack.c.bf16 %v442, %v435
      %v548 = vpack.c.bf16 %v443, %v436
      %v549 = vpack.c.bf16 %v444, %v437
      %v550 = vpack.c.bf16 %v445, %v438
      %v551 = vpack.c.bf16 %v453, %v446
      %v552 = vpack.c.bf16 %v454, %v447
      %v553 = vpack.c.bf16 %v455, %v448
      %v554 = vpack.c.bf16 %v456, %v449
      %v555 = vpack.c.bf16 %v457, %v450
      %v556 = vpack.c.bf16 %v458, %v451
      %v557 = vpack.c.bf16 %v459, %v452
      %v558 = vpack.c.bf16 %v467, %v460
      %v559 = vpack.c.bf16 %v468, %v461
      %v560 = vpack.c.bf16 %v469, %v462
      %v561 = vpack.c.bf16 %v470, %v463
      %v562 = vpack.c.bf16 %v471, %v464
      %v563 = vpack.c.bf16 %v472, %v465
      %v564 = vpack.c.bf16 %v473, %v466
      %v565 = vpack.c.bf16 %v481, %v474
      %v566 = vpack.c.bf16 %v482, %v475
      %v567 = vpack.c.bf16 %v483, %v476
      %v568 = vpack.c.bf16 %v484, %v477
      %v569 = vpack.c.bf16 %v485, %v478
      %v570 = vpack.c.bf16 %v486, %v479
      %v571 = vpack.c.bf16 %v487, %v480
      %v572 = vpack.c.bf16 %v495, %v488
      %v573 = vpack.c.bf16 %v496, %v489
      %v574 = vpack.c.bf16 %v497, %v490
      %v575 = vpack.c.bf16 %v498, %v491
      %v576 = vpack.c.bf16 %v499, %v492
      %v577 = vpack.c.bf16 %v500, %v493
      %v578 = vpack.c.bf16 %v501, %v494
      %v579 = vpack.c.bf16 %v509, %v502
      %v580 = vpack.c.bf16 %v510, %v503
      %v581 = vpack.c.bf16 %v511, %v504
      %v582 = vpack.c.bf16 %v512, %v505
      %v583 = vpack.c.bf16 %v513, %v506
      %v584 = vpack.c.bf16 %v514, %v507
      %v585 = vpack.c.bf16 %v515, %v508
      %v586 = vpack.c.bf16 %v523, %v516
      %v587 = vpack.c.bf16 %v524, %v517
      %v588 = vpack.c.bf16 %v525, %v518
      %v589 = vpack.c.bf16 %v526, %v519
      %v590 = vpack.c.bf16 %v527, %v520
      %v591 = vpack.c.bf16 %v528, %v521
      %v592 = vpack.c.bf16 %v529, %v522
      %v593 = vpack.c.bf16 %v537, %v530
      %v594 = vpack.c.bf16 %v538, %v531
      %v595 = vpack.c.bf16 %v539, %v532
      %v596 = vpack.c.bf16 %v540, %v533
      %v597 = vpack.c.bf16 %v541, %v534
      %v598 = vpack.c.bf16 %v542, %v535
      %v599 = vpack.c.bf16 %v543, %v536
      %v600 = vld [vmem:[%s2] sm:$0xf]
      %v601 = vld [vmem:[%s2 + $0x4] sm:$0xf]
      %v602 = vld [vmem:[%s2 + $0x8] sm:$0xf]
      %v603 = vld [vmem:[%s2 + $0xc] sm:$0xf]
      %v604 = vld [vmem:[%s2 + $0x10] sm:$0xf]
      %v605 = vld [vmem:[%s2 + $0x14] sm:$0xf]
      %v606 = vld [vmem:[%s2 + $0x18] sm:$0xf]
      %v607 = vld [vmem:[%s2 + $0x1c] sm:$0xf]
      %v608 = vld [vmem:[%s2 + $0x20] sm:$0xf]
      %v609 = vld [vmem:[%s2 + $0x24] sm:$0xf]
      %v610 = vld [vmem:[%s2 + $0x28] sm:$0xf]
      %v611 = vld [vmem:[%s2 + $0x2c] sm:$0xf]
      %v612 = vld [vmem:[%s2 + $0x30] sm:$0xf]
      %v613 = vld [vmem:[%s2 + $0x34] sm:$0xf]
      %v614 = vld [vmem:[%s2 + $0x38] sm:$0xf]
      %v615 = vld [vmem:[%s2 + $0x3c] sm:$0xf]
      %v616 = vld [vmem:[%s2 + $0x40] sm:$0xf]
      %v617 = vld [vmem:[%s2 + $0x44] sm:$0xf]
      %v618 = vld [vmem:[%s2 + $0x48] sm:$0xf]
      %v619 = vld [vmem:[%s2 + $0x4c] sm:$0xf]
      %v620 = vld [vmem:[%s2 + $0x50] sm:$0xf]
      %v621 = vld [vmem:[%s2 + $0x54] sm:$0xf]
      %v622 = vld [vmem:[%s2 + $0x58] sm:$0xf]
      %v623 = vld [vmem:[%s2 + $0x5c] sm:$0xf]
      %v624 = vld [vmem:[%s2 + $0x60] sm:$0xf]
      %v625 = vld [vmem:[%s2 + $0x64] sm:$0xf]
      %v626 = vld [vmem:[%s2 + $0x68] sm:$0xf]
      %v627 = vld [vmem:[%s2 + $0x6c] sm:$0xf]
      %v628 = vld [vmem:[%s2 + $0x70] sm:$0xf]
      %v629 = vld [vmem:[%s2 + $0x74] sm:$0xf]
      %v630 = vld [vmem:[%s2 + $0x78] sm:$0xf]
      %v631 = vld [vmem:[%s2 + $0x7c] sm:$0xf]
      %v632 = vld [vmem:[%s2 + $0x80] sm:$0xf]
      %v633 = vld [vmem:[%s2 + $0x84] sm:$0xf]
      %v634 = vld [vmem:[%s2 + $0x88] sm:$0xf]
      %v635 = vld [vmem:[%s2 + $0x8c] sm:$0xf]
      %v636 = vld [vmem:[%s2 + $0x90] sm:$0xf]
      %v637 = vld [vmem:[%s2 + $0x94] sm:$0xf]
      %v638 = vld [vmem:[%s2 + $0x98] sm:$0xf]
      %v639 = vld [vmem:[%s2 + $0x9c] sm:$0xf]
      %v640 = vld [vmem:[%s2 + $0xa0] sm:$0xf]
      %v641 = vld [vmem:[%s2 + $0xa4] sm:$0xf]
      %v642 = vld [vmem:[%s2 + $0xa8] sm:$0xf]
      %v643 = vld [vmem:[%s2 + $0xac] sm:$0xf]
      %v644 = vld [vmem:[%s2 + $0xb0] sm:$0xf]
      %v645 = vld [vmem:[%s2 + $0xb4] sm:$0xf]
      %v646 = vld [vmem:[%s2 + $0xb8] sm:$0xf]
      %v647 = vld [vmem:[%s2 + $0xbc] sm:$0xf]
      %v648 = vld [vmem:[%s2 + $0xc0] sm:$0xf]
      %v649 = vld [vmem:[%s2 + $0xc4] sm:$0xf]
      %v650 = vld [vmem:[%s2 + $0xc8] sm:$0xf]
      %v651 = vld [vmem:[%s2 + $0xcc] sm:$0xf]
      %v652 = vld [vmem:[%s2 + $0xd0] sm:$0xf]
      %v653 = vld [vmem:[%s2 + $0xd4] sm:$0xf]
      %v654 = vld [vmem:[%s2 + $0xd8] sm:$0xf]
      %v655 = vld [vmem:[%s2 + $0xdc] sm:$0xf]
      %v656 = vld [vmem:[%s2 + $0xe0] sm:$0xf]
      %v657 = vld [vmem:[%s2 + $0xe4] sm:$0xf]
      %v658 = vld [vmem:[%s2 + $0xe8] sm:$0xf]
      %v659 = vld [vmem:[%s2 + $0xec] sm:$0xf]
      %v660 = vld [vmem:[%s2 + $0xf0] sm:$0xf]
      %v661 = vld [vmem:[%s2 + $0xf4] sm:$0xf]
      %v662 = vld [vmem:[%s2 + $0xf8] sm:$0xf]
      %v663 = vld [vmem:[%s2 + $0xfc] sm:$0xf]
      %v664 = vld [vmem:[%s2 + $0x100] sm:$0xf]
      %v665 = vld [vmem:[%s2 + $0x104] sm:$0xf]
      %v666 = vld [vmem:[%s2 + $0x108] sm:$0xf]
      %v667 = vld [vmem:[%s2 + $0x10c] sm:$0xf]
      %v668 = vld [vmem:[%s2 + $0x110] sm:$0xf]
      %v669 = vld [vmem:[%s2 + $0x114] sm:$0xf]
      %v670 = vld [vmem:[%s2 + $0x118] sm:$0xf]
      %v671 = vld [vmem:[%s2 + $0x11c] sm:$0xf]
      %v672 = vld [vmem:[%s2 + $0x120] sm:$0xf]
      %v673 = vld [vmem:[%s2 + $0x124] sm:$0xf]
      %v674 = vld [vmem:[%s2 + $0x128] sm:$0xf]
      %v675 = vld [vmem:[%s2 + $0x12c] sm:$0xf]
      %v676 = vld [vmem:[%s2 + $0x130] sm:$0xf]
      %v677 = vld [vmem:[%s2 + $0x134] sm:$0xf]
      %v678 = vld [vmem:[%s2 + $0x138] sm:$0xf]
      %v679 = vld [vmem:[%s2 + $0x13c] sm:$0xf]
      %v680 = vld [vmem:[%s2 + $0x140] sm:$0xf]
      %v681 = vld [vmem:[%s2 + $0x144] sm:$0xf]
      %v682 = vld [vmem:[%s2 + $0x148] sm:$0xf]
      %v683 = vld [vmem:[%s2 + $0x14c] sm:$0xf]
      %v684 = vld [vmem:[%s2 + $0x150] sm:$0xf]
      %v685 = vld [vmem:[%s2 + $0x154] sm:$0xf]
      %v686 = vld [vmem:[%s2 + $0x158] sm:$0xf]
      %v687 = vld [vmem:[%s2 + $0x15c] sm:$0xf]
      %v688 = vld [vmem:[%s2 + $0x160] sm:$0xf]
      %v689 = vld [vmem:[%s2 + $0x164] sm:$0xf]
      %v690 = vld [vmem:[%s2 + $0x168] sm:$0xf]
      %v691 = vld [vmem:[%s2 + $0x16c] sm:$0xf]
      %v692 = vld [vmem:[%s2 + $0x170] sm:$0xf]
      %v693 = vld [vmem:[%s2 + $0x174] sm:$0xf]
      %v694 = vld [vmem:[%s2 + $0x178] sm:$0xf]
      %v695 = vld [vmem:[%s2 + $0x17c] sm:$0xf]
      %v696 = vld [vmem:[%s2 + $0x180] sm:$0xf]
      %v697 = vld [vmem:[%s2 + $0x184] sm:$0xf]
      %v698 = vld [vmem:[%s3] sm:$0x1]
      %v700 = vlaneseq
      %v701 = vshrl.u32 %v700, 7
      %v702 = vsub.s32 0, %v701
      %v703 = vrot.slane %v698, %v702
      %v803 = vunpack.c.l.b16 %v600
      %v804 = vunpack.c.l.b16 %v601
      %v805 = vunpack.c.l.b16 %v602
      %v806 = vunpack.c.l.b16 %v603
      %v807 = vunpack.c.l.b16 %v604
      %v808 = vunpack.c.l.b16 %v605
      %v809 = vunpack.c.l.b16 %v606
      %v810 = vunpack.c.l.b16 %v607
      %v811 = vunpack.c.l.b16 %v608
      %v812 = vunpack.c.l.b16 %v609
      %v813 = vunpack.c.l.b16 %v610
      %v814 = vunpack.c.l.b16 %v611
      %v815 = vunpack.c.l.b16 %v612
      %v816 = vunpack.c.l.b16 %v613
      %v817 = vunpack.c.l.b16 %v614
      %v818 = vunpack.c.l.b16 %v615
      %v819 = vunpack.c.l.b16 %v616
      %v820 = vunpack.c.l.b16 %v617
      %v821 = vunpack.c.l.b16 %v618
      %v822 = vunpack.c.l.b16 %v619
      %v823 = vunpack.c.l.b16 %v620
      %v824 = vunpack.c.l.b16 %v621
      %v825 = vunpack.c.l.b16 %v622
      %v826 = vunpack.c.l.b16 %v623
      %v827 = vunpack.c.l.b16 %v624
      %v828 = vunpack.c.l.b16 %v625
      %v829 = vunpack.c.l.b16 %v626
      %v830 = vunpack.c.l.b16 %v627
      %v831 = vunpack.c.l.b16 %v628
      %v832 = vunpack.c.l.b16 %v629
      %v833 = vunpack.c.l.b16 %v630
      %v834 = vunpack.c.l.b16 %v631
      %v835 = vunpack.c.l.b16 %v632
      %v836 = vunpack.c.l.b16 %v633
      %v837 = vunpack.c.l.b16 %v634
      %v838 = vunpack.c.l.b16 %v635
      %v839 = vunpack.c.l.b16 %v636
      %v840 = vunpack.c.l.b16 %v637
      %v841 = vunpack.c.l.b16 %v638
      %v842 = vunpack.c.l.b16 %v639
      %v843 = vunpack.c.l.b16 %v640
      %v844 = vunpack.c.l.b16 %v641
      %v845 = vunpack.c.l.b16 %v642
      %v846 = vunpack.c.l.b16 %v643
      %v847 = vunpack.c.l.b16 %v644
      %v848 = vunpack.c.l.b16 %v645
      %v849 = vunpack.c.l.b16 %v646
      %v850 = vunpack.c.l.b16 %v647
      %v851 = vunpack.c.l.b16 %v648
      %v852 = vunpack.c.l.b16 %v649
      %v853 = vunpack.c.l.b16 %v650
      %v854 = vunpack.c.l.b16 %v651
      %v855 = vunpack.c.l.b16 %v652
      %v856 = vunpack.c.l.b16 %v653
      %v857 = vunpack.c.l.b16 %v654
      %v858 = vunpack.c.l.b16 %v655
      %v859 = vunpack.c.l.b16 %v656
      %v860 = vunpack.c.l.b16 %v657
      %v861 = vunpack.c.l.b16 %v658
      %v862 = vunpack.c.l.b16 %v659
      %v863 = vunpack.c.l.b16 %v660
      %v864 = vunpack.c.l.b16 %v661
      %v865 = vunpack.c.l.b16 %v662
      %v866 = vunpack.c.l.b16 %v663
      %v867 = vunpack.c.l.b16 %v664
      %v868 = vunpack.c.l.b16 %v665
      %v869 = vunpack.c.l.b16 %v666
      %v870 = vunpack.c.l.b16 %v667
      %v871 = vunpack.c.l.b16 %v668
      %v872 = vunpack.c.l.b16 %v669
      %v873 = vunpack.c.l.b16 %v670
      %v874 = vunpack.c.l.b16 %v671
      %v875 = vunpack.c.l.b16 %v672
      %v876 = vunpack.c.l.b16 %v673
      %v877 = vunpack.c.l.b16 %v674
      %v878 = vunpack.c.l.b16 %v675
      %v879 = vunpack.c.l.b16 %v676
      %v880 = vunpack.c.l.b16 %v677
      %v881 = vunpack.c.l.b16 %v678
      %v882 = vunpack.c.l.b16 %v679
      %v883 = vunpack.c.l.b16 %v680
      %v884 = vunpack.c.l.b16 %v681
      %v885 = vunpack.c.l.b16 %v682
      %v886 = vunpack.c.l.b16 %v683
      %v887 = vunpack.c.l.b16 %v684
      %v888 = vunpack.c.l.b16 %v685
      %v889 = vunpack.c.l.b16 %v686
      %v890 = vunpack.c.l.b16 %v687
      %v891 = vunpack.c.l.b16 %v688
      %v892 = vunpack.c.l.b16 %v689
      %v893 = vunpack.c.l.b16 %v690
      %v894 = vunpack.c.l.b16 %v691
      %v895 = vunpack.c.l.b16 %v692
      %v896 = vunpack.c.l.b16 %v693
      %v897 = vunpack.c.l.b16 %v694
      %v898 = vunpack.c.l.b16 %v695
      %v899 = vunpack.c.l.b16 %v696
      %v900 = vunpack.c.l.b16 %v697
      %v901 = vpack.c.b16 %v804, %v803
      %v902 = vpack.c.b16 %v806, %v805
      %v903 = vpack.c.b16 %v808, %v807
      %v904 = vpack.c.b16 %v810, %v809
      %v905 = vpack.c.b16 %v812, %v811
      %v906 = vpack.c.b16 %v814, %v813
      %v907 = vpack.c.b16 %v816, %v815
      %v908 = vpack.c.b16 %v818, %v817
      %v909 = vpack.c.b16 %v820, %v819
      %v910 = vpack.c.b16 %v822, %v821
      %v911 = vpack.c.b16 %v824, %v823
      %v912 = vpack.c.b16 %v826, %v825
      %v913 = vpack.c.b16 %v828, %v827
      %v914 = vpack.c.b16 %v830, %v829
      %v915 = vpack.c.b16 %v832, %v831
      %v916 = vpack.c.b16 %v834, %v833
      %v917 = vpack.c.b16 %v836, %v835
      %v918 = vpack.c.b16 %v838, %v837
      %v919 = vpack.c.b16 %v840, %v839
      %v920 = vpack.c.b16 %v842, %v841
      %v921 = vpack.c.b16 %v844, %v843
      %v922 = vpack.c.b16 %v846, %v845
      %v923 = vpack.c.b16 %v848, %v847
      %v924 = vpack.c.b16 %v850, %v849
      %v925 = vpack.c.b16 %v852, %v851
      %v926 = vpack.c.b16 %v854, %v853
      %v927 = vpack.c.b16 %v856, %v855
      %v928 = vpack.c.b16 %v858, %v857
      %v929 = vpack.c.b16 %v860, %v859
      %v930 = vpack.c.b16 %v862, %v861
      %v931 = vpack.c.b16 %v864, %v863
      %v932 = vpack.c.b16 %v866, %v865
      %v933 = vpack.c.b16 %v868, %v867
      %v934 = vpack.c.b16 %v870, %v869
      %v935 = vpack.c.b16 %v872, %v871
      %v936 = vpack.c.b16 %v874, %v873
      %v937 = vpack.c.b16 %v876, %v875
      %v938 = vpack.c.b16 %v878, %v877
      %v939 = vpack.c.b16 %v880, %v879
      %v940 = vpack.c.b16 %v882, %v881
      %v941 = vpack.c.b16 %v884, %v883
      %v942 = vpack.c.b16 %v886, %v885
      %v943 = vpack.c.b16 %v888, %v887
      %v944 = vpack.c.b16 %v890, %v889
      %v945 = vpack.c.b16 %v892, %v891
      %v946 = vpack.c.b16 %v894, %v893
      %v947 = vpack.c.b16 %v896, %v895
      %v948 = vpack.c.b16 %v898, %v897
      %v949 = vpack.c.b16 %v900, %v899
      %vm999 = vcmask 130048
      %v1001 = vsel %vm999, %v550, 0
      %v1004 = vsel %vm999, %v557, 0
      %v1007 = vsel %vm999, %v564, 0
      %v1010 = vsel %vm999, %v571, 0
      %v1013 = vsel %vm999, %v578, 0
      %v1016 = vsel %vm999, %v585, 0
      %v1019 = vsel %vm999, %v592, 0
      %v1022 = vsel %vm999, %v599, 0
      %1024 = vmatprep.subr.bf16.mxu0 0
      %1025 = vmatpush1.bf16.msra.mxu0 %v901
      %1026 = vmatprep.subr.bf16.mxu0 0
      %1027 = vmatpush1.bf16.msra.mxu0 %v902
      %1028 = vmatprep.subr.bf16.mxu0 0
      %1029 = vmatpush1.bf16.msra.mxu0 %v903
      %1030 = vmatprep.subr.bf16.mxu0 0
      %1031 = vmatpush1.bf16.msra.mxu0 %v904
      %1032 = vmatprep.subr.bf16.mxu0 0
      %1033 = vmatpush1.bf16.msra.mxu0 %v905
      %1034 = vmatprep.subr.bf16.mxu0 0
      %1035 = vmatpush1.bf16.msra.mxu0 %v906
      %1036 = vmatprep.subr.bf16.mxu0 0
      %1037 = vmatpush1.bf16.msra.mxu0 %v907
      %1038 = vmatprep.subr.bf16.mxu0 0
      %1039 = vmatpush1.bf16.msra.mxu0 %v908
      %1040 = vmatprep.subr.bf16.mxu0 0
      %1041 = vmatpush1.bf16.msra.mxu0 %v909
      %1042 = vmatprep.subr.bf16.mxu0 0
      %1043 = vmatpush1.bf16.msra.mxu0 %v910
      %1044 = vmatprep.subr.bf16.mxu0 0
      %1045 = vmatpush1.bf16.msra.mxu0 %v911
      %1046 = vmatprep.subr.bf16.mxu0 0
      %1047 = vmatpush1.bf16.msra.mxu0 %v912
      %1048 = vmatprep.subr.bf16.mxu0 0
      %1049 = vmatpush1.bf16.msra.mxu0 %v913
      %1050 = vmatprep.subr.bf16.mxu0 0
      %1051 = vmatpush1.bf16.msra.mxu0 %v914
      %1052 = vmatprep.subr.bf16.mxu0 0
      %1053 = vmatpush1.bf16.msra.mxu0 %v915
      %1054 = vmatprep.subr.bf16.mxu0 0
      %1055 = vmatpush1.bf16.msra.mxu0 %v916
      %1056 = vmatprep.mubr.bf16.mxu0 %v545
      %1057 = vmatmul.mubr.bf16.gmra.mrb[0].mxu0 %v544
      %v1058 = vpop.f32.mrb[0].mxu0
      %v1059 = vadd.f32 %v703, %v1058
      %v1060 = vpop.f32.mrb[0].mxu0
      %v1061 = vpop.f32.mrb[0].mxu0
      %v1062 = vadd.f32 %v703, %v1061
      %v1063 = vpop.f32.mrb[0].mxu0
      %1064 = vmatprep.mubr.bf16.mxu0 %v552
      %1065 = vmatmul.mubr.bf16.gmra.mrb[0].mxu0 %v551
      %v1066 = vpop.f32.mrb[0].mxu0
      %v1067 = vadd.f32 %v703, %v1066
      %v1068 = vpop.f32.mrb[0].mxu0
      %v1069 = vpop.f32.mrb[0].mxu0
      %v1070 = vadd.f32 %v703, %v1069
      %v1071 = vpop.f32.mrb[0].mxu0
      %1072 = vmatprep.mubr.bf16.mxu0 %v559
      %1073 = vmatmul.mubr.bf16.gmra.mrb[0].mxu0 %v558
      %v1074 = vpop.f32.mrb[0].mxu0
      %v1075 = vadd.f32 %v703, %v1074
      %v1076 = vpop.f32.mrb[0].mxu0
      %v1077 = vpop.f32.mrb[0].mxu0
      %v1078 = vadd.f32 %v703, %v1077
      %v1079 = vpop.f32.mrb[0].mxu0
      %1080 = vmatprep.mubr.bf16.mxu0 %v566
      %1081 = vmatmul.mubr.bf16.gmra.mrb[0].mxu0 %v565
      %v1082 = vpop.f32.mrb[0].mxu0
      %v1083 = vadd.f32 %v703, %v1082
      %v1084 = vpop.f32.mrb[0].mxu0
      %v1085 = vpop.f32.mrb[0].mxu0
      %v1086 = vadd.f32 %v703, %v1085
      %v1087 = vpop.f32.mrb[0].mxu0
      %1088 = vmatprep.mubr.bf16.mxu0 %v573
      %1089 = vmatmul.mubr.bf16.gmra.mrb[0].mxu0 %v572
      %v1090 = vpop.f32.mrb[0].mxu0
      %v1091 = vadd.f32 %v703, %v1090
      %v1092 = vpop.f32.mrb[0].mxu0
      %v1093 = vpop.f32.mrb[0].mxu0
      %v1094 = vadd.f32 %v703, %v1093
      %v1095 = vpop.f32.mrb[0].mxu0
      %1096 = vmatprep.mubr.bf16.mxu0 %v580
      %1097 = vmatmul.mubr.bf16.gmra.mrb[0].mxu0 %v579
      %v1098 = vpop.f32.mrb[0].mxu0
      %v1099 = vadd.f32 %v703, %v1098
      %v1100 = vpop.f32.mrb[0].mxu0
      %v1101 = vpop.f32.mrb[0].mxu0
      %v1102 = vadd.f32 %v703, %v1101
      %v1103 = vpop.f32.mrb[0].mxu0
      %1104 = vmatprep.mubr.bf16.mxu0 %v587
      %1105 = vmatmul.mubr.bf16.gmra.mrb[0].mxu0 %v586
      %v1106 = vpop.f32.mrb[0].mxu0
      %v1107 = vadd.f32 %v703, %v1106
      %v1108 = vpop.f32.mrb[0].mxu0
      %v1109 = vpop.f32.mrb[0].mxu0
      %v1110 = vadd.f32 %v703, %v1109
      %v1111 = vpop.f32.mrb[0].mxu0
      %1112 = vmatprep.mubr.bf16.mxu0 %v594
      %1113 = vmatmul.mubr.bf16.gmra.mrb[0].mxu0 %v593
      %v1114 = vpop.f32.mrb[0].mxu0
      %v1115 = vadd.f32 %v703, %v1114
      %v1116 = vpop.f32.mrb[0].mxu0
      %v1117 = vpop.f32.mrb[0].mxu0
      %v1118 = vadd.f32 %v703, %v1117
      %v1119 = vpop.f32.mrb[0].mxu0
      %1120 = vdwg.mxu0
      %1121 = vmatprep.subr.bf16.mxu0 0
      %1122 = vmatpush1.bf16.msra.mxu0 %v917
      %1123 = vmatprep.subr.bf16.mxu0 0
      %1124 = vmatpush1.bf16.msra.mxu0 %v918
      %1125 = vmatprep.subr.bf16.mxu0 0
      %1126 = vmatpush1.bf16.msra.mxu0 %v919
      %1127 = vmatprep.subr.bf16.mxu0 0
      %1128 = vmatpush1.bf16.msra.mxu0 %v920
      %1129 = vmatprep.subr.bf16.mxu0 0
      %1130 = vmatpush1.bf16.msra.mxu0 %v921
      %1131 = vmatprep.subr.bf16.mxu0 0
      %1132 = vmatpush1.bf16.msra.mxu0 %v922
      %1133 = vmatprep.subr.bf16.mxu0 0
      %1134 = vmatpush1.bf16.msra.mxu0 %v923
      %1135 = vmatprep.subr.bf16.mxu0 0
      %1136 = vmatpush1.bf16.msra.mxu0 %v924
      %1137 = vmatprep.subr.bf16.mxu0 0
      %1138 = vmatpush1.bf16.msra.mxu0 %v925
      %1139 = vmatprep.subr.bf16.mxu0 0
      %1140 = vmatpush1.bf16.msra.mxu0 %v926
      %1141 = vmatprep.subr.bf16.mxu0 0
      %1142 = vmatpush1.bf16.msra.mxu0 %v927
      %1143 = vmatprep.subr.bf16.mxu0 0
      %1144 = vmatpush1.bf16.msra.mxu0 %v928
      %1145 = vmatprep.subr.bf16.mxu0 0
      %1146 = vmatpush1.bf16.msra.mxu0 %v929
      %1147 = vmatprep.subr.bf16.mxu0 0
      %1148 = vmatpush1.bf16.msra.mxu0 %v930
      %1149 = vmatprep.subr.bf16.mxu0 0
      %1150 = vmatpush1.bf16.msra.mxu0 %v931
      %1151 = vmatprep.subr.bf16.mxu0 0
      %1152 = vmatpush1.bf16.msra.mxu0 %v932
      %1153 = vmatprep.mubr.bf16.mxu0 %v547
      %1154 = vmatmul.mubr.bf16.gmra.mrb[0].mxu0 %v546
      %v1155 = vpop.f32.mrb[0].mxu0
      %v1156 = vadd.f32 %v1059, %v1155
      %v1157 = vpop.f32.mrb[0].mxu0
      %v1158 = vpop.f32.mrb[0].mxu0
      %v1159 = vadd.f32 %v1062, %v1158
      %v1160 = vpop.f32.mrb[0].mxu0
      %1161 = vmatprep.mubr.bf16.mxu0 %v554
      %1162 = vmatmul.mubr.bf16.gmra.mrb[0].mxu0 %v553
      %v1163 = vpop.f32.mrb[0].mxu0
      %v1164 = vadd.f32 %v1067, %v1163
      %v1165 = vpop.f32.mrb[0].mxu0
      %v1166 = vpop.f32.mrb[0].mxu0
      %v1167 = vadd.f32 %v1070, %v1166
      %v1168 = vpop.f32.mrb[0].mxu0
      %1169 = vmatprep.mubr.bf16.mxu0 %v561
      %1170 = vmatmul.mubr.bf16.gmra.mrb[0].mxu0 %v560
      %v1171 = vpop.f32.mrb[0].mxu0
      %v1172 = vadd.f32 %v1075, %v1171
      %v1173 = vpop.f32.mrb[0].mxu0
      %v1174 = vpop.f32.mrb[0].mxu0
      %v1175 = vadd.f32 %v1078, %v1174
      %v1176 = vpop.f32.mrb[0].mxu0
      %1177 = vmatprep.mubr.bf16.mxu0 %v568
      %1178 = vmatmul.mubr.bf16.gmra.mrb[0].mxu0 %v567
      %v1179 = vpop.f32.mrb[0].mxu0
      %v1180 = vadd.f32 %v1083, %v1179
      %v1181 = vpop.f32.mrb[0].mxu0
      %v1182 = vpop.f32.mrb[0].mxu0
      %v1183 = vadd.f32 %v1086, %v1182
      %v1184 = vpop.f32.mrb[0].mxu0
      %1185 = vmatprep.mubr.bf16.mxu0 %v575
      %1186 = vmatmul.mubr.bf16.gmra.mrb[0].mxu0 %v574
      %v1187 = vpop.f32.mrb[0].mxu0
      %v1188 = vadd.f32 %v1091, %v1187
      %v1189 = vpop.f32.mrb[0].mxu0
      %v1190 = vpop.f32.mrb[0].mxu0
      %v1191 = vadd.f32 %v1094, %v1190
      %v1192 = vpop.f32.mrb[0].mxu0
      %1193 = vmatprep.mubr.bf16.mxu0 %v582
      %1194 = vmatmul.mubr.bf16.gmra.mrb[0].mxu0 %v581
      %v1195 = vpop.f32.mrb[0].mxu0
      %v1196 = vadd.f32 %v1099, %v1195
      %v1197 = vpop.f32.mrb[0].mxu0
      %v1198 = vpop.f32.mrb[0].mxu0
      %v1199 = vadd.f32 %v1102, %v1198
      %v1200 = vpop.f32.mrb[0].mxu0
      %1201 = vmatprep.mubr.bf16.mxu0 %v589
      %1202 = vmatmul.mubr.bf16.gmra.mrb[0].mxu0 %v588
      %v1203 = vpop.f32.mrb[0].mxu0
      %v1204 = vadd.f32 %v1107, %v1203
      %v1205 = vpop.f32.mrb[0].mxu0
      %v1206 = vpop.f32.mrb[0].mxu0
      %v1207 = vadd.f32 %v1110, %v1206
      %v1208 = vpop.f32.mrb[0].mxu0
      %1209 = vmatprep.mubr.bf16.mxu0 %v596
      %1210 = vmatmul.mubr.bf16.gmra.mrb[0].mxu0 %v595
      %v1211 = vpop.f32.mrb[0].mxu0
      %v1212 = vadd.f32 %v1115, %v1211
      %v1213 = vpop.f32.mrb[0].mxu0
      %v1214 = vpop.f32.mrb[0].mxu0
      %v1215 = vadd.f32 %v1118, %v1214
      %v1216 = vpop.f32.mrb[0].mxu0
      %1217 = vdwg.mxu0
      %1218 = vmatprep.subr.bf16.mxu0 0
      %1219 = vmatpush1.bf16.msra.mxu0 %v933
      %1220 = vmatprep.subr.bf16.mxu0 0
      %1221 = vmatpush1.bf16.msra.mxu0 %v934
      %1222 = vmatprep.subr.bf16.mxu0 0
      %1223 = vmatpush1.bf16.msra.mxu0 %v935
      %1224 = vmatprep.subr.bf16.mxu0 0
      %1225 = vmatpush1.bf16.msra.mxu0 %v936
      %1226 = vmatprep.subr.bf16.mxu0 0
      %1227 = vmatpush1.bf16.msra.mxu0 %v937
      %1228 = vmatprep.subr.bf16.mxu0 0
      %1229 = vmatpush1.bf16.msra.mxu0 %v938
      %1230 = vmatprep.subr.bf16.mxu0 0
      %1231 = vmatpush1.bf16.msra.mxu0 %v939
      %1232 = vmatprep.subr.bf16.mxu0 0
      %1233 = vmatpush1.bf16.msra.mxu0 %v940
      %1234 = vmatprep.subr.bf16.mxu0 0
      %1235 = vmatpush1.bf16.msra.mxu0 %v941
      %1236 = vmatprep.subr.bf16.mxu0 0
      %1237 = vmatpush1.bf16.msra.mxu0 %v942
      %1238 = vmatprep.subr.bf16.mxu0 0
      %1239 = vmatpush1.bf16.msra.mxu0 %v943
      %1240 = vmatprep.subr.bf16.mxu0 0
      %1241 = vmatpush1.bf16.msra.mxu0 %v944
      %1242 = vmatprep.subr.bf16.mxu0 0
      %1243 = vmatpush1.bf16.msra.mxu0 %v945
      %1244 = vmatprep.subr.bf16.mxu0 0
      %1245 = vmatpush1.bf16.msra.mxu0 %v946
      %1246 = vmatprep.subr.bf16.mxu0 0
      %1247 = vmatpush1.bf16.msra.mxu0 %v947
      %1248 = vmatprep.subr.bf16.mxu0 0
      %1249 = vmatpush1.bf16.msra.mxu0 %v948
      %1250 = vmatprep.mubr.bf16.mxu0 %v549
      %1251 = vmatmul.mubr.bf16.gmra.mrb[0].mxu0 %v548
      %v1252 = vpop.f32.mrb[0].mxu0
      %v1253 = vadd.f32 %v1156, %v1252
      %v1254 = vpop.f32.mrb[0].mxu0
      %v1255 = vpop.f32.mrb[0].mxu0
      %v1256 = vadd.f32 %v1159, %v1255
      %v1257 = vpop.f32.mrb[0].mxu0
      %1258 = vmatprep.mubr.bf16.mxu0 %v556
      %1259 = vmatmul.mubr.bf16.gmra.mrb[0].mxu0 %v555
      %v1260 = vpop.f32.mrb[0].mxu0
      %v1261 = vadd.f32 %v1164, %v1260
      %v1262 = vpop.f32.mrb[0].mxu0
      %v1263 = vpop.f32.mrb[0].mxu0
      %v1264 = vadd.f32 %v1167, %v1263
      %v1265 = vpop.f32.mrb[0].mxu0
      %1266 = vmatprep.mubr.bf16.mxu0 %v563
      %1267 = vmatmul.mubr.bf16.gmra.mrb[0].mxu0 %v562
      %v1268 = vpop.f32.mrb[0].mxu0
      %v1269 = vadd.f32 %v1172, %v1268
      %v1270 = vpop.f32.mrb[0].mxu0
      %v1271 = vpop.f32.mrb[0].mxu0
      %v1272 = vadd.f32 %v1175, %v1271
      %v1273 = vpop.f32.mrb[0].mxu0
      %1274 = vmatprep.mubr.bf16.mxu0 %v570
      %1275 = vmatmul.mubr.bf16.gmra.mrb[0].mxu0 %v569
      %v1276 = vpop.f32.mrb[0].mxu0
      %v1277 = vadd.f32 %v1180, %v1276
      %v1278 = vpop.f32.mrb[0].mxu0
      %v1279 = vpop.f32.mrb[0].mxu0
      %v1280 = vadd.f32 %v1183, %v1279
      %v1281 = vpop.f32.mrb[0].mxu0
      %1282 = vmatprep.mubr.bf16.mxu0 %v577
      %1283 = vmatmul.mubr.bf16.gmra.mrb[0].mxu0 %v576
      %v1284 = vpop.f32.mrb[0].mxu0
      %v1285 = vadd.f32 %v1188, %v1284
      %v1286 = vpop.f32.mrb[0].mxu0
      %v1287 = vpop.f32.mrb[0].mxu0
      %v1288 = vadd.f32 %v1191, %v1287
      %v1289 = vpop.f32.mrb[0].mxu0
      %1290 = vmatprep.mubr.bf16.mxu0 %v584
      %1291 = vmatmul.mubr.bf16.gmra.mrb[0].mxu0 %v583
      %v1292 = vpop.f32.mrb[0].mxu0
      %v1293 = vadd.f32 %v1196, %v1292
      %v1294 = vpop.f32.mrb[0].mxu0
      %v1295 = vpop.f32.mrb[0].mxu0
      %v1296 = vadd.f32 %v1199, %v1295
      %v1297 = vpop.f32.mrb[0].mxu0
      %1298 = vmatprep.mubr.bf16.mxu0 %v591
      %1299 = vmatmul.mubr.bf16.gmra.mrb[0].mxu0 %v590
      %v1300 = vpop.f32.mrb[0].mxu0
      %v1301 = vadd.f32 %v1204, %v1300
      %v1302 = vpop.f32.mrb[0].mxu0
      %v1303 = vpop.f32.mrb[0].mxu0
      %v1304 = vadd.f32 %v1207, %v1303
      %v1305 = vpop.f32.mrb[0].mxu0
      %1306 = vmatprep.mubr.bf16.mxu0 %v598
      %1307 = vmatmul.mubr.bf16.gmra.mrb[0].mxu0 %v597
      %v1308 = vpop.f32.mrb[0].mxu0
      %v1309 = vadd.f32 %v1212, %v1308
      %v1310 = vpop.f32.mrb[0].mxu0
      %v1311 = vpop.f32.mrb[0].mxu0
      %v1312 = vadd.f32 %v1215, %v1311
      %v1313 = vpop.f32.mrb[0].mxu0
      %1314 = vdwg.mxu0
      %1315 = vmatprep.subr.bf16.mxu0 0
      %1316 = vmatpush1.bf16.msra.mxu0 %v949
      %1317 = vmatprep.subr.bf16.mxu0 0
      %1318 = vmatpush1.bf16.msra.mxu0 0
      %1319 = vmatprep.subr.bf16.mxu0 0
      %1320 = vmatpush1.bf16.msra.mxu0 0
      %1321 = vmatprep.subr.bf16.mxu0 0
      %1322 = vmatpush1.bf16.msra.mxu0 0
      %1323 = vmatprep.subr.bf16.mxu0 0
      %1324 = vmatpush1.bf16.msra.mxu0 0
      %1325 = vmatprep.subr.bf16.mxu0 0
      %1326 = vmatpush1.bf16.msra.mxu0 0
      %1327 = vmatprep.subr.bf16.mxu0 0
      %1328 = vmatpush1.bf16.msra.mxu0 0
      %1329 = vmatprep.subr.bf16.mxu0 0
      %1330 = vmatpush1.bf16.msra.mxu0 0
      %1331 = vmatprep.subr.bf16.mxu0 0
      %1332 = vmatpush1.bf16.msra.mxu0 0
      %1333 = vmatprep.subr.bf16.mxu0 0
      %1334 = vmatpush1.bf16.msra.mxu0 0
      %1335 = vmatprep.subr.bf16.mxu0 0
      %1336 = vmatpush1.bf16.msra.mxu0 0
      %1337 = vmatprep.subr.bf16.mxu0 0
      %1338 = vmatpush1.bf16.msra.mxu0 0
      %1339 = vmatprep.subr.bf16.mxu0 0
      %1340 = vmatpush1.bf16.msra.mxu0 0
      %1341 = vmatprep.subr.bf16.mxu0 0
      %1342 = vmatpush1.bf16.msra.mxu0 0
      %1343 = vmatprep.subr.bf16.mxu0 0
      %1344 = vmatpush1.bf16.msra.mxu0 0
      %1345 = vmatprep.subr.bf16.mxu0 0
      %1346 = vmatpush1.bf16.msra.mxu0 0
      %1347 = vmatprep.mubr.bf16.mxu0 0
      %1348 = vmatmul.mubr.bf16.gmra.mrb[0].mxu0 %v1001
      %v1349 = vpop.f32.mrb[0].mxu0
      %v1350 = vadd.f32 %v1253, %v1349
      %v1351 = vpop.f32.mrb[0].mxu0
      %v1352 = vpop.f32.mrb[0].mxu0
      %v1353 = vadd.f32 %v1256, %v1352
      %v1354 = vpop.f32.mrb[0].mxu0
      %1355 = vmatprep.mubr.bf16.mxu0 0
      %1356 = vmatmul.mubr.bf16.gmra.mrb[0].mxu0 %v1004
      %v1357 = vpop.f32.mrb[0].mxu0
      %v1358 = vadd.f32 %v1261, %v1357
      %v1359 = vpop.f32.mrb[0].mxu0
      %v1360 = vpop.f32.mrb[0].mxu0
      %v1361 = vadd.f32 %v1264, %v1360
      %v1362 = vpop.f32.mrb[0].mxu0
      %1363 = vmatprep.mubr.bf16.mxu0 0
      %1364 = vmatmul.mubr.bf16.gmra.mrb[0].mxu0 %v1007
      %v1365 = vpop.f32.mrb[0].mxu0
      %v1366 = vadd.f32 %v1269, %v1365
      %v1367 = vpop.f32.mrb[0].mxu0
      %v1368 = vpop.f32.mrb[0].mxu0
      %v1369 = vadd.f32 %v1272, %v1368
      %v1370 = vpop.f32.mrb[0].mxu0
      %1371 = vmatprep.mubr.bf16.mxu0 0
      %1372 = vmatmul.mubr.bf16.gmra.mrb[0].mxu0 %v1010
      %v1373 = vpop.f32.mrb[0].mxu0
      %v1374 = vadd.f32 %v1277, %v1373
      %v1375 = vpop.f32.mrb[0].mxu0
      %v1376 = vpop.f32.mrb[0].mxu0
      %v1377 = vadd.f32 %v1280, %v1376
      %v1378 = vpop.f32.mrb[0].mxu0
      %1379 = vmatprep.mubr.bf16.mxu0 0
      %1380 = vmatmul.mubr.bf16.gmra.mrb[0].mxu0 %v1013
      %v1381 = vpop.f32.mrb[0].mxu0
      %v1382 = vadd.f32 %v1285, %v1381
      %v1383 = vpop.f32.mrb[0].mxu0
      %v1384 = vpop.f32.mrb[0].mxu0
      %v1385 = vadd.f32 %v1288, %v1384
      %v1386 = vpop.f32.mrb[0].mxu0
      %1387 = vmatprep.mubr.bf16.mxu0 0
      %1388 = vmatmul.mubr.bf16.gmra.mrb[0].mxu0 %v1016
      %v1389 = vpop.f32.mrb[0].mxu0
      %v1390 = vadd.f32 %v1293, %v1389
      %v1391 = vpop.f32.mrb[0].mxu0
      %v1392 = vpop.f32.mrb[0].mxu0
      %v1393 = vadd.f32 %v1296, %v1392
      %v1394 = vpop.f32.mrb[0].mxu0
      %1395 = vmatprep.mubr.bf16.mxu0 0
      %1396 = vmatmul.mubr.bf16.gmra.mrb[0].mxu0 %v1019
      %v1397 = vpop.f32.mrb[0].mxu0
      %v1398 = vadd.f32 %v1301, %v1397
      %v1399 = vpop.f32.mrb[0].mxu0
      %v1400 = vpop.f32.mrb[0].mxu0
      %v1401 = vadd.f32 %v1304, %v1400
      %v1402 = vpop.f32.mrb[0].mxu0
      %1403 = vmatprep.mubr.bf16.mxu0 0
      %1404 = vmatmul.mubr.bf16.gmra.mrb[0].mxu0 %v1022
      %v1405 = vpop.f32.mrb[0].mxu0
      %v1406 = vadd.f32 %v1309, %v1405
      %v1407 = vpop.f32.mrb[0].mxu0
      %v1408 = vpop.f32.mrb[0].mxu0
      %v1409 = vadd.f32 %v1312, %v1408
      %v1410 = vpop.f32.mrb[0].mxu0
      %1411 = vdwg.mxu0
      %v1412 = vmax.f32 %v1350, 0.0
      %v1413 = vmax.f32 %v1353, 0.0
      %v1414 = vmax.f32 %v1358, 0.0
      %v1415 = vmax.f32 %v1361, 0.0
      %v1416 = vmax.f32 %v1366, 0.0
      %v1417 = vmax.f32 %v1369, 0.0
      %v1418 = vmax.f32 %v1374, 0.0
      %v1419 = vmax.f32 %v1377, 0.0
      %v1420 = vmax.f32 %v1382, 0.0
      %v1421 = vmax.f32 %v1385, 0.0
      %v1422 = vmax.f32 %v1390, 0.0
      %v1423 = vmax.f32 %v1393, 0.0
      %v1424 = vmax.f32 %v1398, 0.0
      %v1425 = vmax.f32 %v1401, 0.0
      %v1426 = vmax.f32 %v1406, 0.0
      %v1427 = vmax.f32 %v1409, 0.0
      %v1428 = vpack.c.bf16 %v1413, %v1412
      %v1429 = vpack.c.bf16 %v1415, %v1414
      %v1430 = vpack.c.bf16 %v1417, %v1416
      %v1431 = vpack.c.bf16 %v1419, %v1418
      %v1432 = vpack.c.bf16 %v1421, %v1420
      %v1433 = vpack.c.bf16 %v1423, %v1422
      %v1434 = vpack.c.bf16 %v1425, %v1424
      %v1435 = vpack.c.bf16 %v1427, %v1426
      %v1436 = vld [vmem:[%s4] sm:$0xf]
      %v1437 = vld [vmem:[%s4 + $0x4] sm:$0xf]
      %v1438 = vld [vmem:[%s4 + $0x8] sm:$0xf]
      %v1439 = vld [vmem:[%s4 + $0xc] sm:$0xf]
      %v1440 = vld [vmem:[%s4 + $0x10] sm:$0xf]
      %v1441 = vld [vmem:[%s4 + $0x14] sm:$0xf]
      %v1442 = vld [vmem:[%s4 + $0x18] sm:$0xf]
      %v1443 = vld [vmem:[%s4 + $0x1c] sm:$0xf]
      %v1444 = vld [vmem:[%s5] sm:$0x1]
      %v1446 = vlaneseq
      %v1447 = vshrl.u32 %v1446, 7
      %v1448 = vsub.s32 0, %v1447
      %v1449 = vrot.slane %v1444, %v1448
      %v1459 = vunpack.c.l.b16 %v1436
      %v1460 = vunpack.c.l.b16 %v1437
      %v1461 = vunpack.c.l.b16 %v1438
      %v1462 = vunpack.c.l.b16 %v1439
      %v1463 = vunpack.c.l.b16 %v1440
      %v1464 = vunpack.c.l.b16 %v1441
      %v1465 = vunpack.c.l.b16 %v1442
      %v1466 = vunpack.c.l.b16 %v1443
      %v1467 = vpack.c.b16 %v1460, %v1459
      %v1468 = vpack.c.b16 %v1462, %v1461
      %v1469 = vpack.c.b16 %v1464, %v1463
      %v1470 = vpack.c.b16 %v1466, %v1465
      %vm1475 = vcmask 523264
      %v1477 = vsel %vm1475, %v1428, 0
      %v1480 = vsel %vm1475, %v1429, 0
      %v1483 = vsel %vm1475, %v1430, 0
      %v1486 = vsel %vm1475, %v1431, 0
      %v1489 = vsel %vm1475, %v1432, 0
      %v1492 = vsel %vm1475, %v1433, 0
      %v1495 = vsel %vm1475, %v1434, 0
      %v1498 = vsel %vm1475, %v1435, 0
      %1500 = vmatprep.subr.bf16.mxu0 0
      %1501 = vmatpush1.bf16.msra.mxu0 %v1467
      %1502 = vmatprep.subr.bf16.mxu0 0
      %1503 = vmatpush1.bf16.msra.mxu0 %v1468
      %1504 = vmatprep.subr.bf16.mxu0 0
      %1505 = vmatpush1.bf16.msra.mxu0 %v1469
      %1506 = vmatprep.subr.bf16.mxu0 0
      %1507 = vmatpush1.bf16.msra.mxu0 %v1470
      %1508 = vmatprep.subr.bf16.mxu0 0
      %1509 = vmatpush1.bf16.msra.mxu0 0
      %1510 = vmatprep.subr.bf16.mxu0 0
      %1511 = vmatpush1.bf16.msra.mxu0 0
      %1512 = vmatprep.subr.bf16.mxu0 0
      %1513 = vmatpush1.bf16.msra.mxu0 0
      %1514 = vmatprep.subr.bf16.mxu0 0
      %1515 = vmatpush1.bf16.msra.mxu0 0
      %1516 = vmatprep.subr.bf16.mxu0 0
      %1517 = vmatpush1.bf16.msra.mxu0 0
      %1518 = vmatprep.subr.bf16.mxu0 0
      %1519 = vmatpush1.bf16.msra.mxu0 0
      %1520 = vmatprep.subr.bf16.mxu0 0
      %1521 = vmatpush1.bf16.msra.mxu0 0
      %1522 = vmatprep.subr.bf16.mxu0 0
      %1523 = vmatpush1.bf16.msra.mxu0 0
      %1524 = vmatprep.subr.bf16.mxu0 0
      %1525 = vmatpush1.bf16.msra.mxu0 0
      %1526 = vmatprep.subr.bf16.mxu0 0
      %1527 = vmatpush1.bf16.msra.mxu0 0
      %1528 = vmatprep.subr.bf16.mxu0 0
      %1529 = vmatpush1.bf16.msra.mxu0 0
      %1530 = vmatprep.subr.bf16.mxu0 0
      %1531 = vmatpush1.bf16.msra.mxu0 0
      %1532 = vmatprep.mubr.bf16.mxu0 0
      %1533 = vmatmul.mubr.bf16.gmra.mrb[0].mxu0 %v1477
      %v1534 = vpop.f32.mrb[0].mxu0
      %v1535 = vadd.f32 %v1449, %v1534
      %v1536 = vpop.f32.mrb[0].mxu0
      %v1537 = vpop.f32.mrb[0].mxu0
      %v1538 = vadd.f32 %v1449, %v1537
      %v1539 = vpop.f32.mrb[0].mxu0
      %1540 = vmatprep.mubr.bf16.mxu0 0
      %1541 = vmatmul.mubr.bf16.gmra.mrb[0].mxu0 %v1480
      %v1542 = vpop.f32.mrb[0].mxu0
      %v1543 = vadd.f32 %v1449, %v1542
      %v1544 = vpop.f32.mrb[0].mxu0
      %v1545 = vpop.f32.mrb[0].mxu0
      %v1546 = vadd.f32 %v1449, %v1545
      %v1547 = vpop.f32.mrb[0].mxu0
      %1548 = vmatprep.mubr.bf16.mxu0 0
      %1549 = vmatmul.mubr.bf16.gmra.mrb[0].mxu0 %v1483
      %v1550 = vpop.f32.mrb[0].mxu0
      %v1551 = vadd.f32 %v1449, %v1550
      %v1552 = vpop.f32.mrb[0].mxu0
      %v1553 = vpop.f32.mrb[0].mxu0
      %v1554 = vadd.f32 %v1449, %v1553
      %v1555 = vpop.f32.mrb[0].mxu0
      %1556 = vmatprep.mubr.bf16.mxu0 0
      %1557 = vmatmul.mubr.bf16.gmra.mrb[0].mxu0 %v1486
      %v1558 = vpop.f32.mrb[0].mxu0
      %v1559 = vadd.f32 %v1449, %v1558
      %v1560 = vpop.f32.mrb[0].mxu0
      %v1561 = vpop.f32.mrb[0].mxu0
      %v1562 = vadd.f32 %v1449, %v1561
      %v1563 = vpop.f32.mrb[0].mxu0
      %1564 = vmatprep.mubr.bf16.mxu0 0
      %1565 = vmatmul.mubr.bf16.gmra.mrb[0].mxu0 %v1489
      %v1566 = vpop.f32.mrb[0].mxu0
      %v1567 = vadd.f32 %v1449, %v1566
      %v1568 = vpop.f32.mrb[0].mxu0
      %v1569 = vpop.f32.mrb[0].mxu0
      %v1570 = vadd.f32 %v1449, %v1569
      %v1571 = vpop.f32.mrb[0].mxu0
      %1572 = vmatprep.mubr.bf16.mxu0 0
      %1573 = vmatmul.mubr.bf16.gmra.mrb[0].mxu0 %v1492
      %v1574 = vpop.f32.mrb[0].mxu0
      %v1575 = vadd.f32 %v1449, %v1574
      %v1576 = vpop.f32.mrb[0].mxu0
      %v1577 = vpop.f32.mrb[0].mxu0
      %v1578 = vadd.f32 %v1449, %v1577
      %v1579 = vpop.f32.mrb[0].mxu0
      %1580 = vmatprep.mubr.bf16.mxu0 0
      %1581 = vmatmul.mubr.bf16.gmra.mrb[0].mxu0 %v1495
      %v1582 = vpop.f32.mrb[0].mxu0
      %v1583 = vadd.f32 %v1449, %v1582
      %v1584 = vpop.f32.mrb[0].mxu0
      %v1585 = vpop.f32.mrb[0].mxu0
      %v1586 = vadd.f32 %v1449, %v1585
      %v1587 = vpop.f32.mrb[0].mxu0
      %1588 = vmatprep.mubr.bf16.mxu0 0
      %1589 = vmatmul.mubr.bf16.gmra.mrb[0].mxu0 %v1498
      %v1590 = vpop.f32.mrb[0].mxu0
      %v1591 = vadd.f32 %v1449, %v1590
      %v1592 = vpop.f32.mrb[0].mxu0
      %v1593 = vpop.f32.mrb[0].mxu0
      %v1594 = vadd.f32 %v1449, %v1593
      %v1595 = vpop.f32.mrb[0].mxu0
      %1596 = vdwg.mxu0
      %v1597 = vmul.f32 %v1535, 0.5
      %v1598 = vmul.f32 %v1538, 0.5
      %v1599 = vmul.f32 %v1543, 0.5
      %v1600 = vmul.f32 %v1546, 0.5
      %v1601 = vmul.f32 %v1551, 0.5
      %v1602 = vmul.f32 %v1554, 0.5
      %v1603 = vmul.f32 %v1559, 0.5
      %v1604 = vmul.f32 %v1562, 0.5
      %v1605 = vmul.f32 %v1567, 0.5
      %v1606 = vmul.f32 %v1570, 0.5
      %v1607 = vmul.f32 %v1575, 0.5
      %v1608 = vmul.f32 %v1578, 0.5
      %v1609 = vmul.f32 %v1583, 0.5
      %v1610 = vmul.f32 %v1586, 0.5
      %v1611 = vmul.f32 %v1591, 0.5
      %v1612 = vmul.f32 %v1594, 0.5
      %v1613 = vmul.f32 %v1597, 1.442695
      %v1614 = vpow.pop %v1613
      %v1615 = vmul.f32 %v1598, 1.442695
      %v1616 = vpow.pop %v1615
      %v1617 = vmul.f32 %v1599, 1.442695
      %v1618 = vpow.pop %v1617
      %v1619 = vmul.f32 %v1600, 1.442695
      %v1620 = vpow.pop %v1619
      %v1621 = vmul.f32 %v1601, 1.442695
      %v1622 = vpow.pop %v1621
      %v1623 = vmul.f32 %v1602, 1.442695
      %v1624 = vpow.pop %v1623
      %v1625 = vmul.f32 %v1603, 1.442695
      %v1626 = vpow.pop %v1625
      %v1627 = vmul.f32 %v1604, 1.442695
      %v1628 = vpow.pop %v1627
      %v1629 = vmul.f32 %v1605, 1.442695
      %v1630 = vpow.pop %v1629
      %v1631 = vmul.f32 %v1606, 1.442695
      %v1632 = vpow.pop %v1631
      %v1633 = vmul.f32 %v1607, 1.442695
      %v1634 = vpow.pop %v1633
      %v1635 = vmul.f32 %v1608, 1.442695
      %v1636 = vpow.pop %v1635
      %v1637 = vmul.f32 %v1609, 1.442695
      %v1638 = vpow.pop %v1637
      %v1639 = vmul.f32 %v1610, 1.442695
      %v1640 = vpow.pop %v1639
      %v1641 = vmul.f32 %v1611, 1.442695
      %v1642 = vpow.pop %v1641
      %v1643 = vmul.f32 %v1612, 1.442695
      %v1644 = vpow.pop %v1643
      %v1645 = vld [vmem:[%s416] sm:$0xff]
      %v1646 = vld [vmem:[%s416 + $0x8] sm:$0xff]
      %v1647 = vld [vmem:[%s416 + $0x10] sm:$0xff]
      %v1648 = vld [vmem:[%s416 + $0x18] sm:$0xff]
      %v1649 = vld [vmem:[%s416 + $0x20] sm:$0xff]
      %v1650 = vld [vmem:[%s416 + $0x28] sm:$0xff]
      %v1651 = vld [vmem:[%s416 + $0x30] sm:$0xff]
      %v1652 = vld [vmem:[%s416 + $0x38] sm:$0xff]
      %v1653 = vld [vmem:[%s416 + $0x40] sm:$0xff]
      %v1654 = vld [vmem:[%s416 + $0x48] sm:$0xff]
      %v1655 = vld [vmem:[%s416 + $0x50] sm:$0xff]
      %v1656 = vld [vmem:[%s416 + $0x58] sm:$0xff]
      %v1657 = vld [vmem:[%s416 + $0x60] sm:$0xff]
      %v1658 = vld [vmem:[%s416 + $0x68] sm:$0xff]
      %v1659 = vld [vmem:[%s416 + $0x70] sm:$0xff]
      %v1660 = vld [vmem:[%s416 + $0x78] sm:$0xff]
      %1677 = vrot.lane.b32.xlu0 %v1614, 112
      %v1678 = vpop.permute.xlu0 %1677
      %1679 = vrot.lane.b32.xlu0 %v1616, 112
      %v1680 = vpop.permute.xlu0 %1679
      %1681 = vrot.lane.b32.xlu0 %v1618, 112
      %v1682 = vpop.permute.xlu0 %1681
      %1683 = vrot.lane.b32.xlu0 %v1620, 112
      %v1684 = vpop.permute.xlu0 %1683
      %1685 = vrot.lane.b32.xlu0 %v1622, 112
      %v1686 = vpop.permute.xlu0 %1685
      %1687 = vrot.lane.b32.xlu0 %v1624, 112
      %v1688 = vpop.permute.xlu0 %1687
      %1689 = vrot.lane.b32.xlu0 %v1626, 112
      %v1690 = vpop.permute.xlu0 %1689
      %1691 = vrot.lane.b32.xlu0 %v1628, 112
      %v1692 = vpop.permute.xlu0 %1691
      %1693 = vrot.lane.b32.xlu0 %v1630, 112
      %v1694 = vpop.permute.xlu0 %1693
      %1695 = vrot.lane.b32.xlu0 %v1632, 112
      %v1696 = vpop.permute.xlu0 %1695
      %1697 = vrot.lane.b32.xlu0 %v1634, 112
      %v1698 = vpop.permute.xlu0 %1697
      %1699 = vrot.lane.b32.xlu0 %v1636, 112
      %v1700 = vpop.permute.xlu0 %1699
      %1701 = vrot.lane.b32.xlu0 %v1638, 112
      %v1702 = vpop.permute.xlu0 %1701
      %1703 = vrot.lane.b32.xlu0 %v1640, 112
      %v1704 = vpop.permute.xlu0 %1703
      %1705 = vrot.lane.b32.xlu0 %v1642, 112
      %v1706 = vpop.permute.xlu0 %1705
      %1707 = vrot.lane.b32.xlu0 %v1644, 112
      %v1708 = vpop.permute.xlu0 %1707
      %v1725 = vmul.f32 %v1645, %v1678
      %v1726 = vmul.f32 %v1646, %v1680
      %v1727 = vmul.f32 %v1647, %v1682
      %v1728 = vmul.f32 %v1648, %v1684
      %v1729 = vmul.f32 %v1649, %v1686
      %v1730 = vmul.f32 %v1650, %v1688
      %v1731 = vmul.f32 %v1651, %v1690
      %v1732 = vmul.f32 %v1652, %v1692
      %v1733 = vmul.f32 %v1653, %v1694
      %v1734 = vmul.f32 %v1654, %v1696
      %v1735 = vmul.f32 %v1655, %v1698
      %v1736 = vmul.f32 %v1656, %v1700
      %v1737 = vmul.f32 %v1657, %v1702
      %v1738 = vmul.f32 %v1658, %v1704
      %v1739 = vmul.f32 %v1659, %v1706
      %v1740 = vmul.f32 %v1660, %v1708
      %v1741 = vadd.f32 %v1725, %v1535
      %v1742 = vadd.f32 %v1726, %v1538
      %v1743 = vadd.f32 %v1727, %v1543
      %v1744 = vadd.f32 %v1728, %v1546
      %v1745 = vadd.f32 %v1729, %v1551
      %v1746 = vadd.f32 %v1730, %v1554
      %v1747 = vadd.f32 %v1731, %v1559
      %v1748 = vadd.f32 %v1732, %v1562
      %v1749 = vadd.f32 %v1733, %v1567
      %v1750 = vadd.f32 %v1734, %v1570
      %v1751 = vadd.f32 %v1735, %v1575
      %v1752 = vadd.f32 %v1736, %v1578
      %v1753 = vadd.f32 %v1737, %v1583
      %v1754 = vadd.f32 %v1738, %v1586
      %v1755 = vadd.f32 %v1739, %v1591
      %v1756 = vadd.f32 %v1740, %v1594
      %v1757 = vpack.c.bf16 %v1742, %v1741
      %v1758 = vpack.c.bf16 %v1744, %v1743
      %v1759 = vpack.c.bf16 %v1746, %v1745
      %v1760 = vpack.c.bf16 %v1748, %v1747
      %v1761 = vpack.c.bf16 %v1750, %v1749
      %v1762 = vpack.c.bf16 %v1752, %v1751
      %v1763 = vpack.c.bf16 %v1754, %v1753
      %v1764 = vpack.c.bf16 %v1756, %v1755
      %v1765 = vld [vmem:[%s6] sm:$0xf]
      %v1766 = vld [vmem:[%s6 + $0x4] sm:$0xf]
      %v1767 = vld [vmem:[%s7] sm:$0x1]
      %v1769 = vlaneseq
      %v1770 = vshrl.u32 %v1769, 7
      %v1771 = vsub.s32 0, %v1770
      %v1772 = vrot.slane %v1767, %v1771
      %v1776 = vunpack.c.l.b16 %v1765
      %v1777 = vunpack.c.l.b16 %v1766
      %v1778 = vpack.c.b16 %v1777, %v1776
      %v1781 = vsel %vm999, %v1757, 0
      %v1784 = vsel %vm999, %v1758, 0
      %v1787 = vsel %vm999, %v1759, 0
      %v1790 = vsel %vm999, %v1760, 0
      %v1793 = vsel %vm999, %v1761, 0
      %v1796 = vsel %vm999, %v1762, 0
      %v1799 = vsel %vm999, %v1763, 0
      %v1802 = vsel %vm999, %v1764, 0
      %1804 = vmatprep.subr.bf16.mxu0 0
      %1805 = vmatpush1.bf16.msra.mxu0 %v1778
      %1806 = vmatprep.subr.bf16.mxu0 0
      %1807 = vmatpush1.bf16.msra.mxu0 0
      %1808 = vmatprep.subr.bf16.mxu0 0
      %1809 = vmatpush1.bf16.msra.mxu0 0
      %1810 = vmatprep.subr.bf16.mxu0 0
      %1811 = vmatpush1.bf16.msra.mxu0 0
      %1812 = vmatprep.subr.bf16.mxu0 0
      %1813 = vmatpush1.bf16.msra.mxu0 0
      %1814 = vmatprep.subr.bf16.mxu0 0
      %1815 = vmatpush1.bf16.msra.mxu0 0
      %1816 = vmatprep.subr.bf16.mxu0 0
      %1817 = vmatpush1.bf16.msra.mxu0 0
      %1818 = vmatprep.subr.bf16.mxu0 0
      %1819 = vmatpush1.bf16.msra.mxu0 0
      %1820 = vmatprep.subr.bf16.mxu0 0
      %1821 = vmatpush1.bf16.msra.mxu0 0
      %1822 = vmatprep.subr.bf16.mxu0 0
      %1823 = vmatpush1.bf16.msra.mxu0 0
      %1824 = vmatprep.subr.bf16.mxu0 0
      %1825 = vmatpush1.bf16.msra.mxu0 0
      %1826 = vmatprep.subr.bf16.mxu0 0
      %1827 = vmatpush1.bf16.msra.mxu0 0
      %1828 = vmatprep.subr.bf16.mxu0 0
      %1829 = vmatpush1.bf16.msra.mxu0 0
      %1830 = vmatprep.subr.bf16.mxu0 0
      %1831 = vmatpush1.bf16.msra.mxu0 0
      %1832 = vmatprep.subr.bf16.mxu0 0
      %1833 = vmatpush1.bf16.msra.mxu0 0
      %1834 = vmatprep.subr.bf16.mxu0 0
      %1835 = vmatpush1.bf16.msra.mxu0 0
      %1836 = vmatprep.mubr.bf16.mxu0 0
      %1837 = vmatmul.mubr.bf16.gmra.mrb[0].mxu0 %v1781
      %v1838 = vpop.f32.mrb[0].mxu0
      %v1839 = vadd.f32 %v1772, %v1838
      %v1840 = vpop.f32.mrb[0].mxu0
      %v1841 = vpop.f32.mrb[0].mxu0
      %v1842 = vadd.f32 %v1772, %v1841
      %v1843 = vpop.f32.mrb[0].mxu0
      %1844 = vmatprep.mubr.bf16.mxu0 0
      %1845 = vmatmul.mubr.bf16.gmra.mrb[0].mxu0 %v1784
      %v1846 = vpop.f32.mrb[0].mxu0
      %v1847 = vadd.f32 %v1772, %v1846
      %v1848 = vpop.f32.mrb[0].mxu0
      %v1849 = vpop.f32.mrb[0].mxu0
      %v1850 = vadd.f32 %v1772, %v1849
      %v1851 = vpop.f32.mrb[0].mxu0
      %1852 = vmatprep.mubr.bf16.mxu0 0
      %1853 = vmatmul.mubr.bf16.gmra.mrb[0].mxu0 %v1787
      %v1854 = vpop.f32.mrb[0].mxu0
      %v1855 = vadd.f32 %v1772, %v1854
      %v1856 = vpop.f32.mrb[0].mxu0
      %v1857 = vpop.f32.mrb[0].mxu0
      %v1858 = vadd.f32 %v1772, %v1857
      %v1859 = vpop.f32.mrb[0].mxu0
      %1860 = vmatprep.mubr.bf16.mxu0 0
      %1861 = vmatmul.mubr.bf16.gmra.mrb[0].mxu0 %v1790
      %v1862 = vpop.f32.mrb[0].mxu0
      %v1863 = vadd.f32 %v1772, %v1862
      %v1864 = vpop.f32.mrb[0].mxu0
      %v1865 = vpop.f32.mrb[0].mxu0
      %v1866 = vadd.f32 %v1772, %v1865
      %v1867 = vpop.f32.mrb[0].mxu0
      %1868 = vmatprep.mubr.bf16.mxu0 0
      %1869 = vmatmul.mubr.bf16.gmra.mrb[0].mxu0 %v1793
      %v1870 = vpop.f32.mrb[0].mxu0
      %v1871 = vadd.f32 %v1772, %v1870
      %v1872 = vpop.f32.mrb[0].mxu0
      %v1873 = vpop.f32.mrb[0].mxu0
      %v1874 = vadd.f32 %v1772, %v1873
      %v1875 = vpop.f32.mrb[0].mxu0
      %1876 = vmatprep.mubr.bf16.mxu0 0
      %1877 = vmatmul.mubr.bf16.gmra.mrb[0].mxu0 %v1796
      %v1878 = vpop.f32.mrb[0].mxu0
      %v1879 = vadd.f32 %v1772, %v1878
      %v1880 = vpop.f32.mrb[0].mxu0
      %v1881 = vpop.f32.mrb[0].mxu0
      %v1882 = vadd.f32 %v1772, %v1881
      %v1883 = vpop.f32.mrb[0].mxu0
      %1884 = vmatprep.mubr.bf16.mxu0 0
      %1885 = vmatmul.mubr.bf16.gmra.mrb[0].mxu0 %v1799
      %v1886 = vpop.f32.mrb[0].mxu0
      %v1887 = vadd.f32 %v1772, %v1886
      %v1888 = vpop.f32.mrb[0].mxu0
      %v1889 = vpop.f32.mrb[0].mxu0
      %v1890 = vadd.f32 %v1772, %v1889
      %v1891 = vpop.f32.mrb[0].mxu0
      %1892 = vmatprep.mubr.bf16.mxu0 0
      %1893 = vmatmul.mubr.bf16.gmra.mrb[0].mxu0 %v1802
      %v1894 = vpop.f32.mrb[0].mxu0
      %v1895 = vadd.f32 %v1772, %v1894
      %v1896 = vpop.f32.mrb[0].mxu0
      %v1897 = vpop.f32.mrb[0].mxu0
      %v1898 = vadd.f32 %v1772, %v1897
      %v1899 = vpop.f32.mrb[0].mxu0
      %1900 = vdwg.mxu0
      %v1901 = vmax.f32 %v1839, 0.0
      %v1902 = vmax.f32 %v1842, 0.0
      %v1903 = vmax.f32 %v1847, 0.0
      %v1904 = vmax.f32 %v1850, 0.0
      %v1905 = vmax.f32 %v1855, 0.0
      %v1906 = vmax.f32 %v1858, 0.0
      %v1907 = vmax.f32 %v1863, 0.0
      %v1908 = vmax.f32 %v1866, 0.0
      %v1909 = vmax.f32 %v1871, 0.0
      %v1910 = vmax.f32 %v1874, 0.0
      %v1911 = vmax.f32 %v1879, 0.0
      %v1912 = vmax.f32 %v1882, 0.0
      %v1913 = vmax.f32 %v1887, 0.0
      %v1914 = vmax.f32 %v1890, 0.0
      %v1915 = vmax.f32 %v1895, 0.0
      %v1916 = vmax.f32 %v1898, 0.0
      %v1917 = vpack.c.bf16 %v1902, %v1901
      %v1918 = vpack.c.bf16 %v1904, %v1903
      %v1919 = vpack.c.bf16 %v1906, %v1905
      %v1920 = vpack.c.bf16 %v1908, %v1907
      %v1921 = vpack.c.bf16 %v1910, %v1909
      %v1922 = vpack.c.bf16 %v1912, %v1911
      %v1923 = vpack.c.bf16 %v1914, %v1913
      %v1924 = vpack.c.bf16 %v1916, %v1915
      %v1925 = vld [vmem:[%s8] sm:$0xff]
      %v1926 = vld [vmem:[%s8 + $0x8] sm:$0xff]
      %v1927 = vld [vmem:[%s8 + $0x10] sm:$0xff]
      %v1928 = vld [vmem:[%s8 + $0x18] sm:$0xf]
      %v1929 = vld [vmem:[%s8 + $0x1c] sm:$0xff]
      %v1930 = vld [vmem:[%s8 + $0x24] sm:$0xff]
      %v1931 = vld [vmem:[%s8 + $0x2c] sm:$0xff]
      %v1932 = vld [vmem:[%s8 + $0x34] sm:$0xf]
      %v1933 = vld [vmem:[%s8 + $0x38] sm:$0xff]
      %v1934 = vld [vmem:[%s8 + $0x40] sm:$0xff]
      %v1935 = vld [vmem:[%s8 + $0x48] sm:$0xff]
      %v1936 = vld [vmem:[%s8 + $0x50] sm:$0xf]
      %v1937 = vld [vmem:[%s8 + $0x54] sm:$0xff]
      %v1938 = vld [vmem:[%s8 + $0x5c] sm:$0xff]
      %v1939 = vld [vmem:[%s8 + $0x64] sm:$0xff]
      %v1940 = vld [vmem:[%s8 + $0x6c] sm:$0xf]
      %v1941 = vld [vmem:[%s8 + $0x70] sm:$0xff]
      %v1942 = vld [vmem:[%s8 + $0x78] sm:$0xff]
      %v1943 = vld [vmem:[%s8 + $0x80] sm:$0xff]
      %v1944 = vld [vmem:[%s8 + $0x88] sm:$0xf]
      %v1945 = vld [vmem:[%s8 + $0x8c] sm:$0xff]
      %v1946 = vld [vmem:[%s8 + $0x94] sm:$0xff]
      %v1947 = vld [vmem:[%s8 + $0x9c] sm:$0xff]
      %v1948 = vld [vmem:[%s8 + $0xa4] sm:$0xf]
      %v1949 = vld [vmem:[%s8 + $0xa8] sm:$0xff]
      %v1950 = vld [vmem:[%s8 + $0xb0] sm:$0xff]
      %v1951 = vld [vmem:[%s8 + $0xb8] sm:$0xff]
      %v1952 = vld [vmem:[%s8 + $0xc0] sm:$0xf]
      %v1953 = vld [vmem:[%s8 + $0xc4] sm:$0xff]
      %v1954 = vld [vmem:[%s8 + $0xcc] sm:$0xff]
      %v1955 = vld [vmem:[%s8 + $0xd4] sm:$0xff]
      %v1956 = vld [vmem:[%s8 + $0xdc] sm:$0xf]
      %v1957 = vld [vmem:[%s9] sm:$0x7f]
      %v1959 = vlaneseq
      %v1960 = vshrl.u32 %v1959, 7
      %v1961 = vsub.s32 0, %v1960
      %v1962 = vrot.slane %v1957, %v1961
      %v1963 = vlaneseq
      %v1964 = vshrl.u32 %v1963, 7
      %v1965 = vsub.s32 1, %v1964
      %v1966 = vrot.slane %v1957, %v1965
      %v1967 = vlaneseq
      %v1968 = vshrl.u32 %v1967, 7
      %v1969 = vsub.s32 2, %v1968
      %v1970 = vrot.slane %v1957, %v1969
      %v1971 = vlaneseq
      %v1972 = vshrl.u32 %v1971, 7
      %v1973 = vsub.s32 3, %v1972
      %v1974 = vrot.slane %v1957, %v1973
      %v1975 = vlaneseq
      %v1976 = vshrl.u32 %v1975, 7
      %v1977 = vsub.s32 4, %v1976
      %v1978 = vrot.slane %v1957, %v1977
      %v1979 = vlaneseq
      %v1980 = vshrl.u32 %v1979, 7
      %v1981 = vsub.s32 5, %v1980
      %v1982 = vrot.slane %v1957, %v1981
      %v1983 = vlaneseq
      %v1984 = vshrl.u32 %v1983, 7
      %v1985 = vsub.s32 6, %v1984
      %v1986 = vrot.slane %v1957, %v1985
      %v2026 = vunpack.c.l.b16 %v1925
      %v2027 = vunpack.c.h.b16 %v1925
      %v2028 = vunpack.c.l.b16 %v1926
      %v2029 = vunpack.c.h.b16 %v1926
      %v2030 = vunpack.c.l.b16 %v1927
      %v2031 = vunpack.c.h.b16 %v1927
      %v2032 = vunpack.c.l.b16 %v1928
      %v2033 = vunpack.c.l.b16 %v1929
      %v2034 = vunpack.c.h.b16 %v1929
      %v2035 = vunpack.c.l.b16 %v1930
      %v2036 = vunpack.c.h.b16 %v1930
      %v2037 = vunpack.c.l.b16 %v1931
      %v2038 = vunpack.c.h.b16 %v1931
      %v2039 = vunpack.c.l.b16 %v1932
      %v2040 = vunpack.c.l.b16 %v1933
      %v2041 = vunpack.c.h.b16 %v1933
      %v2042 = vunpack.c.l.b16 %v1934
      %v2043 = vunpack.c.h.b16 %v1934
      %v2044 = vunpack.c.l.b16 %v1935
      %v2045 = vunpack.c.h.b16 %v1935
      %v2046 = vunpack.c.l.b16 %v1936
      %v2047 = vunpack.c.l.b16 %v1937
      %v2048 = vunpack.c.h.b16 %v1937
      %v2049 = vunpack.c.l.b16 %v1938
      %v2050 = vunpack.c.h.b16 %v1938
      %v2051 = vunpack.c.l.b16 %v1939
      %v2052 = vunpack.c.h.b16 %v1939
      %v2053 = vunpack.c.l.b16 %v1940
      %v2054 = vunpack.c.l.b16 %v1941
      %v2055 = vunpack.c.h.b16 %v1941
      %v2056 = vunpack.c.l.b16 %v1942
      %v2057 = vunpack.c.h.b16 %v1942
      %v2058 = vunpack.c.l.b16 %v1943
      %v2059 = vunpack.c.h.b16 %v1943
      %v2060 = vunpack.c.l.b16 %v1944
      %v2061 = vunpack.c.l.b16 %v1945
      %v2062 = vunpack.c.h.b16 %v1945
      %v2063 = vunpack.c.l.b16 %v1946
      %v2064 = vunpack.c.h.b16 %v1946
      %v2065 = vunpack.c.l.b16 %v1947
      %v2066 = vunpack.c.h.b16 %v1947
      %v2067 = vunpack.c.l.b16 %v1948
      %v2068 = vunpack.c.l.b16 %v1949
      %v2069 = vunpack.c.h.b16 %v1949
      %v2070 = vunpack.c.l.b16 %v1950
      %v2071 = vunpack.c.h.b16 %v1950
      %v2072 = vunpack.c.l.b16 %v1951
      %v2073 = vunpack.c.h.b16 %v1951
      %v2074 = vunpack.c.l.b16 %v1952
      %v2075 = vunpack.c.l.b16 %v1953
      %v2076 = vunpack.c.h.b16 %v1953
      %v2077 = vunpack.c.l.b16 %v1954
      %v2078 = vunpack.c.h.b16 %v1954
      %v2079 = vunpack.c.l.b16 %v1955
      %v2080 = vunpack.c.h.b16 %v1955
      %v2081 = vunpack.c.l.b16 %v1956
      %v2082 = vpack.c.b16 %v2033, %v2026
      %v2083 = vpack.c.b16 %v2034, %v2027
      %v2084 = vpack.c.b16 %v2035, %v2028
      %v2085 = vpack.c.b16 %v2036, %v2029
      %v2086 = vpack.c.b16 %v2037, %v2030
      %v2087 = vpack.c.b16 %v2038, %v2031
      %v2088 = vpack.c.b16 %v2039, %v2032
      %v2089 = vpack.c.b16 %v2047, %v2040
      %v2090 = vpack.c.b16 %v2048, %v2041
      %v2091 = vpack.c.b16 %v2049, %v2042
      %v2092 = vpack.c.b16 %v2050, %v2043
      %v2093 = vpack.c.b16 %v2051, %v2044
      %v2094 = vpack.c.b16 %v2052, %v2045
      %v2095 = vpack.c.b16 %v2053, %v2046
      %v2096 = vpack.c.b16 %v2061, %v2054
      %v2097 = vpack.c.b16 %v2062, %v2055
      %v2098 = vpack.c.b16 %v2063, %v2056
      %v2099 = vpack.c.b16 %v2064, %v2057
      %v2100 = vpack.c.b16 %v2065, %v2058
      %v2101 = vpack.c.b16 %v2066, %v2059
      %v2102 = vpack.c.b16 %v2067, %v2060
      %v2103 = vpack.c.b16 %v2075, %v2068
      %v2104 = vpack.c.b16 %v2076, %v2069
      %v2105 = vpack.c.b16 %v2077, %v2070
      %v2106 = vpack.c.b16 %v2078, %v2071
      %v2107 = vpack.c.b16 %v2079, %v2072
      %v2108 = vpack.c.b16 %v2080, %v2073
      %v2109 = vpack.c.b16 %v2081, %v2074
      %v2139 = vsel %vm1475, %v1917, 0
      %v2142 = vsel %vm1475, %v1918, 0
      %v2145 = vsel %vm1475, %v1919, 0
      %v2148 = vsel %vm1475, %v1920, 0
      %v2151 = vsel %vm1475, %v1921, 0
      %v2154 = vsel %vm1475, %v1922, 0
      %v2157 = vsel %vm1475, %v1923, 0
      %v2160 = vsel %vm1475, %v1924, 0
      %2162 = vmatprep.subr.bf16.mxu0 %v2083
      %2163 = vmatpush1.bf16.msra.mxu0 %v2082
      %2164 = vmatprep.subr.bf16.mxu0 %v2090
      %2165 = vmatpush1.bf16.msra.mxu0 %v2089
      %2166 = vmatprep.subr.bf16.mxu0 %v2097
      %2167 = vmatpush1.bf16.msra.mxu0 %v2096
      %2168 = vmatprep.subr.bf16.mxu0 %v2104
      %2169 = vmatpush1.bf16.msra.mxu0 %v2103
      %2170 = vmatprep.subr.bf16.mxu0 0
      %2171 = vmatpush1.bf16.msra.mxu0 0
      %2172 = vmatprep.subr.bf16.mxu0 0
      %2173 = vmatpush1.bf16.msra.mxu0 0
      %2174 = vmatprep.subr.bf16.mxu0 0
      %2175 = vmatpush1.bf16.msra.mxu0 0
      %2176 = vmatprep.subr.bf16.mxu0 0
      %2177 = vmatpush1.bf16.msra.mxu0 0
      %2178 = vmatprep.subr.bf16.mxu0 0
      %2179 = vmatpush1.bf16.msra.mxu0 0
      %2180 = vmatprep.subr.bf16.mxu0 0
      %2181 = vmatpush1.bf16.msra.mxu0 0
      %2182 = vmatprep.subr.bf16.mxu0 0
      %2183 = vmatpush1.bf16.msra.mxu0 0
      %2184 = vmatprep.subr.bf16.mxu0 0
      %2185 = vmatpush1.bf16.msra.mxu0 0
      %2186 = vmatprep.subr.bf16.mxu0 0
      %2187 = vmatpush1.bf16.msra.mxu0 0
      %2188 = vmatprep.subr.bf16.mxu0 0
      %2189 = vmatpush1.bf16.msra.mxu0 0
      %2190 = vmatprep.subr.bf16.mxu0 0
      %2191 = vmatpush1.bf16.msra.mxu0 0
      %2192 = vmatprep.subr.bf16.mxu0 0
      %2193 = vmatpush1.bf16.msra.mxu0 0
      %2194 = vmatprep.mubr.bf16.mxu0 0
      %2195 = vmatmul.mubr.bf16.gmra.mrb[0].mxu0 %v2139
      %v2196 = vpop.f32.mrb[0].mxu0
      %v2197 = vadd.f32 %v1962, %v2196
      %v2198 = vpop.f32.mrb[0].mxu0
      %v2199 = vadd.f32 %v1966, %v2198
      %v2200 = vpop.f32.mrb[0].mxu0
      %v2201 = vadd.f32 %v1962, %v2200
      %v2202 = vpop.f32.mrb[0].mxu0
      %v2203 = vadd.f32 %v1966, %v2202
      %2204 = vmatprep.mubr.bf16.mxu0 0
      %2205 = vmatmul.mubr.bf16.gmra.mrb[0].mxu0 %v2142
      %v2206 = vpop.f32.mrb[0].mxu0
      %v2207 = vadd.f32 %v1962, %v2206
      %v2208 = vpop.f32.mrb[0].mxu0
      %v2209 = vadd.f32 %v1966, %v2208
      %v2210 = vpop.f32.mrb[0].mxu0
      %v2211 = vadd.f32 %v1962, %v2210
      %v2212 = vpop.f32.mrb[0].mxu0
      %v2213 = vadd.f32 %v1966, %v2212
      %2214 = vmatprep.mubr.bf16.mxu0 0
      %2215 = vmatmul.mubr.bf16.gmra.mrb[0].mxu0 %v2145
      %v2216 = vpop.f32.mrb[0].mxu0
      %v2217 = vadd.f32 %v1962, %v2216
      %v2218 = vpop.f32.mrb[0].mxu0
      %v2219 = vadd.f32 %v1966, %v2218
      %v2220 = vpop.f32.mrb[0].mxu0
      %v2221 = vadd.f32 %v1962, %v2220
      %v2222 = vpop.f32.mrb[0].mxu0
      %v2223 = vadd.f32 %v1966, %v2222
      %2224 = vmatprep.mubr.bf16.mxu0 0
      %2225 = vmatmul.mubr.bf16.gmra.mrb[0].mxu0 %v2148
      %v2226 = vpop.f32.mrb[0].mxu0
      %v2227 = vadd.f32 %v1962, %v2226
      %v2228 = vpop.f32.mrb[0].mxu0
      %v2229 = vadd.f32 %v1966, %v2228
      %v2230 = vpop.f32.mrb[0].mxu0
      %v2231 = vadd.f32 %v1962, %v2230
      %v2232 = vpop.f32.mrb[0].mxu0
      %v2233 = vadd.f32 %v1966, %v2232
      %2234 = vmatprep.mubr.bf16.mxu0 0
      %2235 = vmatmul.mubr.bf16.gmra.mrb[0].mxu0 %v2151
      %v2236 = vpop.f32.mrb[0].mxu0
      %v2237 = vadd.f32 %v1962, %v2236
      %v2238 = vpop.f32.mrb[0].mxu0
      %v2239 = vadd.f32 %v1966, %v2238
      %v2240 = vpop.f32.mrb[0].mxu0
      %v2241 = vadd.f32 %v1962, %v2240
      %v2242 = vpop.f32.mrb[0].mxu0
      %v2243 = vadd.f32 %v1966, %v2242
      %2244 = vmatprep.mubr.bf16.mxu0 0
      %2245 = vmatmul.mubr.bf16.gmra.mrb[0].mxu0 %v2154
      %v2246 = vpop.f32.mrb[0].mxu0
      %v2247 = vadd.f32 %v1962, %v2246
      %v2248 = vpop.f32.mrb[0].mxu0
      %v2249 = vadd.f32 %v1966, %v2248
      %v2250 = vpop.f32.mrb[0].mxu0
      %v2251 = vadd.f32 %v1962, %v2250
      %v2252 = vpop.f32.mrb[0].mxu0
      %v2253 = vadd.f32 %v1966, %v2252
      %2254 = vmatprep.mubr.bf16.mxu0 0
      %2255 = vmatmul.mubr.bf16.gmra.mrb[0].mxu0 %v2157
      %v2256 = vpop.f32.mrb[0].mxu0
      %v2257 = vadd.f32 %v1962, %v2256
      %v2258 = vpop.f32.mrb[0].mxu0
      %v2259 = vadd.f32 %v1966, %v2258
      %v2260 = vpop.f32.mrb[0].mxu0
      %v2261 = vadd.f32 %v1962, %v2260
      %v2262 = vpop.f32.mrb[0].mxu0
      %v2263 = vadd.f32 %v1966, %v2262
      %2264 = vmatprep.mubr.bf16.mxu0 0
      %2265 = vmatmul.mubr.bf16.gmra.mrb[0].mxu0 %v2160
      %v2266 = vpop.f32.mrb[0].mxu0
      %v2267 = vadd.f32 %v1962, %v2266
      %v2268 = vpop.f32.mrb[0].mxu0
      %v2269 = vadd.f32 %v1966, %v2268
      %v2270 = vpop.f32.mrb[0].mxu0
      %v2271 = vadd.f32 %v1962, %v2270
      %v2272 = vpop.f32.mrb[0].mxu0
      %v2273 = vadd.f32 %v1966, %v2272
      %2274 = vdwg.mxu0
      %2275 = vmatprep.subr.bf16.mxu0 %v2085
      %2276 = vmatpush1.bf16.msra.mxu0 %v2084
      %2277 = vmatprep.subr.bf16.mxu0 %v2092
      %2278 = vmatpush1.bf16.msra.mxu0 %v2091
      %2279 = vmatprep.subr.bf16.mxu0 %v2099
      %2280 = vmatpush1.bf16.msra.mxu0 %v2098
      %2281 = vmatprep.subr.bf16.mxu0 %v2106
      %2282 = vmatpush1.bf16.msra.mxu0 %v2105
      %2283 = vmatprep.subr.bf16.mxu0 0
      %2284 = vmatpush1.bf16.msra.mxu0 0
      %2285 = vmatprep.subr.bf16.mxu0 0
      %2286 = vmatpush1.bf16.msra.mxu0 0
      %2287 = vmatprep.subr.bf16.mxu0 0
      %2288 = vmatpush1.bf16.msra.mxu0 0
      %2289 = vmatprep.subr.bf16.mxu0 0
      %2290 = vmatpush1.bf16.msra.mxu0 0
      %2291 = vmatprep.subr.bf16.mxu0 0
      %2292 = vmatpush1.bf16.msra.mxu0 0
      %2293 = vmatprep.subr.bf16.mxu0 0
      %2294 = vmatpush1.bf16.msra.mxu0 0
      %2295 = vmatprep.subr.bf16.mxu0 0
      %2296 = vmatpush1.bf16.msra.mxu0 0
      %2297 = vmatprep.subr.bf16.mxu0 0
      %2298 = vmatpush1.bf16.msra.mxu0 0
      %2299 = vmatprep.subr.bf16.mxu0 0
      %2300 = vmatpush1.bf16.msra.mxu0 0
      %2301 = vmatprep.subr.bf16.mxu0 0
      %2302 = vmatpush1.bf16.msra.mxu0 0
      %2303 = vmatprep.subr.bf16.mxu0 0
      %2304 = vmatpush1.bf16.msra.mxu0 0
      %2305 = vmatprep.subr.bf16.mxu0 0
      %2306 = vmatpush1.bf16.msra.mxu0 0
      %2307 = vmatprep.mubr.bf16.mxu0 0
      %2308 = vmatmul.mubr.bf16.gmra.mrb[0].mxu0 %v2139
      %v2309 = vpop.f32.mrb[0].mxu0
      %v2310 = vadd.f32 %v1970, %v2309
      %v2311 = vpop.f32.mrb[0].mxu0
      %v2312 = vadd.f32 %v1974, %v2311
      %v2313 = vpop.f32.mrb[0].mxu0
      %v2314 = vadd.f32 %v1970, %v2313
      %v2315 = vpop.f32.mrb[0].mxu0
      %v2316 = vadd.f32 %v1974, %v2315
      %2317 = vmatprep.mubr.bf16.mxu0 0
      %2318 = vmatmul.mubr.bf16.gmra.mrb[0].mxu0 %v2142
      %v2319 = vpop.f32.mrb[0].mxu0
      %v2320 = vadd.f32 %v1970, %v2319
      %v2321 = vpop.f32.mrb[0].mxu0
      %v2322 = vadd.f32 %v1974, %v2321
      %v2323 = vpop.f32.mrb[0].mxu0
      %v2324 = vadd.f32 %v1970, %v2323
      %v2325 = vpop.f32.mrb[0].mxu0
      %v2326 = vadd.f32 %v1974, %v2325
      %2327 = vmatprep.mubr.bf16.mxu0 0
      %2328 = vmatmul.mubr.bf16.gmra.mrb[0].mxu0 %v2145
      %v2329 = vpop.f32.mrb[0].mxu0
      %v2330 = vadd.f32 %v1970, %v2329
      %v2331 = vpop.f32.mrb[0].mxu0
      %v2332 = vadd.f32 %v1974, %v2331
      %v2333 = vpop.f32.mrb[0].mxu0
      %v2334 = vadd.f32 %v1970, %v2333
      %v2335 = vpop.f32.mrb[0].mxu0
      %v2336 = vadd.f32 %v1974, %v2335
      %2337 = vmatprep.mubr.bf16.mxu0 0
      %2338 = vmatmul.mubr.bf16.gmra.mrb[0].mxu0 %v2148
      %v2339 = vpop.f32.mrb[0].mxu0
      %v2340 = vadd.f32 %v1970, %v2339
      %v2341 = vpop.f32.mrb[0].mxu0
      %v2342 = vadd.f32 %v1974, %v2341
      %v2343 = vpop.f32.mrb[0].mxu0
      %v2344 = vadd.f32 %v1970, %v2343
      %v2345 = vpop.f32.mrb[0].mxu0
      %v2346 = vadd.f32 %v1974, %v2345
      %2347 = vmatprep.mubr.bf16.mxu0 0
      %2348 = vmatmul.mubr.bf16.gmra.mrb[0].mxu0 %v2151
      %v2349 = vpop.f32.mrb[0].mxu0
      %v2350 = vadd.f32 %v1970, %v2349
      %v2351 = vpop.f32.mrb[0].mxu0
      %v2352 = vadd.f32 %v1974, %v2351
      %v2353 = vpop.f32.mrb[0].mxu0
      %v2354 = vadd.f32 %v1970, %v2353
      %v2355 = vpop.f32.mrb[0].mxu0
      %v2356 = vadd.f32 %v1974, %v2355
      %2357 = vmatprep.mubr.bf16.mxu0 0
      %2358 = vmatmul.mubr.bf16.gmra.mrb[0].mxu0 %v2154
      %v2359 = vpop.f32.mrb[0].mxu0
      %v2360 = vadd.f32 %v1970, %v2359
      %v2361 = vpop.f32.mrb[0].mxu0
      %v2362 = vadd.f32 %v1974, %v2361
      %v2363 = vpop.f32.mrb[0].mxu0
      %v2364 = vadd.f32 %v1970, %v2363
      %v2365 = vpop.f32.mrb[0].mxu0
      %v2366 = vadd.f32 %v1974, %v2365
      %2367 = vmatprep.mubr.bf16.mxu0 0
      %2368 = vmatmul.mubr.bf16.gmra.mrb[0].mxu0 %v2157
      %v2369 = vpop.f32.mrb[0].mxu0
      %v2370 = vadd.f32 %v1970, %v2369
      %v2371 = vpop.f32.mrb[0].mxu0
      %v2372 = vadd.f32 %v1974, %v2371
      %v2373 = vpop.f32.mrb[0].mxu0
      %v2374 = vadd.f32 %v1970, %v2373
      %v2375 = vpop.f32.mrb[0].mxu0
      %v2376 = vadd.f32 %v1974, %v2375
      %2377 = vmatprep.mubr.bf16.mxu0 0
      %2378 = vmatmul.mubr.bf16.gmra.mrb[0].mxu0 %v2160
      %v2379 = vpop.f32.mrb[0].mxu0
      %v2380 = vadd.f32 %v1970, %v2379
      %v2381 = vpop.f32.mrb[0].mxu0
      %v2382 = vadd.f32 %v1974, %v2381
      %v2383 = vpop.f32.mrb[0].mxu0
      %v2384 = vadd.f32 %v1970, %v2383
      %v2385 = vpop.f32.mrb[0].mxu0
      %v2386 = vadd.f32 %v1974, %v2385
      %2387 = vdwg.mxu0
      %2388 = vmatprep.subr.bf16.mxu0 %v2087
      %2389 = vmatpush1.bf16.msra.mxu0 %v2086
      %2390 = vmatprep.subr.bf16.mxu0 %v2094
      %2391 = vmatpush1.bf16.msra.mxu0 %v2093
      %2392 = vmatprep.subr.bf16.mxu0 %v2101
      %2393 = vmatpush1.bf16.msra.mxu0 %v2100
      %2394 = vmatprep.subr.bf16.mxu0 %v2108
      %2395 = vmatpush1.bf16.msra.mxu0 %v2107
      %2396 = vmatprep.subr.bf16.mxu0 0
      %2397 = vmatpush1.bf16.msra.mxu0 0
      %2398 = vmatprep.subr.bf16.mxu0 0
      %2399 = vmatpush1.bf16.msra.mxu0 0
      %2400 = vmatprep.subr.bf16.mxu0 0
      %2401 = vmatpush1.bf16.msra.mxu0 0
      %2402 = vmatprep.subr.bf16.mxu0 0
      %2403 = vmatpush1.bf16.msra.mxu0 0
      %2404 = vmatprep.subr.bf16.mxu0 0
      %2405 = vmatpush1.bf16.msra.mxu0 0
      %2406 = vmatprep.subr.bf16.mxu0 0
      %2407 = vmatpush1.bf16.msra.mxu0 0
      %2408 = vmatprep.subr.bf16.mxu0 0
      %2409 = vmatpush1.bf16.msra.mxu0 0
      %2410 = vmatprep.subr.bf16.mxu0 0
      %2411 = vmatpush1.bf16.msra.mxu0 0
      %2412 = vmatprep.subr.bf16.mxu0 0
      %2413 = vmatpush1.bf16.msra.mxu0 0
      %2414 = vmatprep.subr.bf16.mxu0 0
      %2415 = vmatpush1.bf16.msra.mxu0 0
      %2416 = vmatprep.subr.bf16.mxu0 0
      %2417 = vmatpush1.bf16.msra.mxu0 0
      %2418 = vmatprep.subr.bf16.mxu0 0
      %2419 = vmatpush1.bf16.msra.mxu0 0
      %2420 = vmatprep.mubr.bf16.mxu0 0
      %2421 = vmatmul.mubr.bf16.gmra.mrb[0].mxu0 %v2139
      %v2422 = vpop.f32.mrb[0].mxu0
      %v2423 = vadd.f32 %v1978, %v2422
      %v2424 = vpop.f32.mrb[0].mxu0
      %v2425 = vadd.f32 %v1982, %v2424
      %v2426 = vpop.f32.mrb[0].mxu0
      %v2427 = vadd.f32 %v1978, %v2426
      %v2428 = vpop.f32.mrb[0].mxu0
      %v2429 = vadd.f32 %v1982, %v2428
      %2430 = vmatprep.mubr.bf16.mxu0 0
      %2431 = vmatmul.mubr.bf16.gmra.mrb[0].mxu0 %v2142
      %v2432 = vpop.f32.mrb[0].mxu0
      %v2433 = vadd.f32 %v1978, %v2432
      %v2434 = vpop.f32.mrb[0].mxu0
      %v2435 = vadd.f32 %v1982, %v2434
      %v2436 = vpop.f32.mrb[0].mxu0
      %v2437 = vadd.f32 %v1978, %v2436
      %v2438 = vpop.f32.mrb[0].mxu0
      %v2439 = vadd.f32 %v1982, %v2438
      %2440 = vmatprep.mubr.bf16.mxu0 0
      %2441 = vmatmul.mubr.bf16.gmra.mrb[0].mxu0 %v2145
      %v2442 = vpop.f32.mrb[0].mxu0
      %v2443 = vadd.f32 %v1978, %v2442
      %v2444 = vpop.f32.mrb[0].mxu0
      %v2445 = vadd.f32 %v1982, %v2444
      %v2446 = vpop.f32.mrb[0].mxu0
      %v2447 = vadd.f32 %v1978, %v2446
      %v2448 = vpop.f32.mrb[0].mxu0
      %v2449 = vadd.f32 %v1982, %v2448
      %2450 = vmatprep.mubr.bf16.mxu0 0
      %2451 = vmatmul.mubr.bf16.gmra.mrb[0].mxu0 %v2148
      %v2452 = vpop.f32.mrb[0].mxu0
      %v2453 = vadd.f32 %v1978, %v2452
      %v2454 = vpop.f32.mrb[0].mxu0
      %v2455 = vadd.f32 %v1982, %v2454
      %v2456 = vpop.f32.mrb[0].mxu0
      %v2457 = vadd.f32 %v1978, %v2456
      %v2458 = vpop.f32.mrb[0].mxu0
      %v2459 = vadd.f32 %v1982, %v2458
      %2460 = vmatprep.mubr.bf16.mxu0 0
      %2461 = vmatmul.mubr.bf16.gmra.mrb[0].mxu0 %v2151
      %v2462 = vpop.f32.mrb[0].mxu0
      %v2463 = vadd.f32 %v1978, %v2462
      %v2464 = vpop.f32.mrb[0].mxu0
      %v2465 = vadd.f32 %v1982, %v2464
      %v2466 = vpop.f32.mrb[0].mxu0
      %v2467 = vadd.f32 %v1978, %v2466
      %v2468 = vpop.f32.mrb[0].mxu0
      %v2469 = vadd.f32 %v1982, %v2468
      %2470 = vmatprep.mubr.bf16.mxu0 0
      %2471 = vmatmul.mubr.bf16.gmra.mrb[0].mxu0 %v2154
      %v2472 = vpop.f32.mrb[0].mxu0
      %v2473 = vadd.f32 %v1978, %v2472
      %v2474 = vpop.f32.mrb[0].mxu0
      %v2475 = vadd.f32 %v1982, %v2474
      %v2476 = vpop.f32.mrb[0].mxu0
      %v2477 = vadd.f32 %v1978, %v2476
      %v2478 = vpop.f32.mrb[0].mxu0
      %v2479 = vadd.f32 %v1982, %v2478
      %2480 = vmatprep.mubr.bf16.mxu0 0
      %2481 = vmatmul.mubr.bf16.gmra.mrb[0].mxu0 %v2157
      %v2482 = vpop.f32.mrb[0].mxu0
      %v2483 = vadd.f32 %v1978, %v2482
      %v2484 = vpop.f32.mrb[0].mxu0
      %v2485 = vadd.f32 %v1982, %v2484
      %v2486 = vpop.f32.mrb[0].mxu0
      %v2487 = vadd.f32 %v1978, %v2486
      %v2488 = vpop.f32.mrb[0].mxu0
      %v2489 = vadd.f32 %v1982, %v2488
      %2490 = vmatprep.mubr.bf16.mxu0 0
      %2491 = vmatmul.mubr.bf16.gmra.mrb[0].mxu0 %v2160
      %v2492 = vpop.f32.mrb[0].mxu0
      %v2493 = vadd.f32 %v1978, %v2492
      %v2494 = vpop.f32.mrb[0].mxu0
      %v2495 = vadd.f32 %v1982, %v2494
      %v2496 = vpop.f32.mrb[0].mxu0
      %v2497 = vadd.f32 %v1978, %v2496
      %v2498 = vpop.f32.mrb[0].mxu0
      %v2499 = vadd.f32 %v1982, %v2498
      %2500 = vdwg.mxu0
      %2501 = vmatprep.subr.bf16.mxu0 0
      %2502 = vmatpush1.bf16.msra.mxu0 %v2088
      %2503 = vmatprep.subr.bf16.mxu0 0
      %2504 = vmatpush1.bf16.msra.mxu0 %v2095
      %2505 = vmatprep.subr.bf16.mxu0 0
      %2506 = vmatpush1.bf16.msra.mxu0 %v2102
      %2507 = vmatprep.subr.bf16.mxu0 0
      %2508 = vmatpush1.bf16.msra.mxu0 %v2109
      %2509 = vmatprep.subr.bf16.mxu0 0
      %2510 = vmatpush1.bf16.msra.mxu0 0
      %2511 = vmatprep.subr.bf16.mxu0 0
      %2512 = vmatpush1.bf16.msra.mxu0 0
      %2513 = vmatprep.subr.bf16.mxu0 0
      %2514 = vmatpush1.bf16.msra.mxu0 0
      %2515 = vmatprep.subr.bf16.mxu0 0
      %2516 = vmatpush1.bf16.msra.mxu0 0
      %2517 = vmatprep.subr.bf16.mxu0 0
      %2518 = vmatpush1.bf16.msra.mxu0 0
      %2519 = vmatprep.subr.bf16.mxu0 0
      %2520 = vmatpush1.bf16.msra.mxu0 0
      %2521 = vmatprep.subr.bf16.mxu0 0
      %2522 = vmatpush1.bf16.msra.mxu0 0
      %2523 = vmatprep.subr.bf16.mxu0 0
      %2524 = vmatpush1.bf16.msra.mxu0 0
      %2525 = vmatprep.subr.bf16.mxu0 0
      %2526 = vmatpush1.bf16.msra.mxu0 0
      %2527 = vmatprep.subr.bf16.mxu0 0
      %2528 = vmatpush1.bf16.msra.mxu0 0
      %2529 = vmatprep.subr.bf16.mxu0 0
      %2530 = vmatpush1.bf16.msra.mxu0 0
      %2531 = vmatprep.subr.bf16.mxu0 0
      %2532 = vmatpush1.bf16.msra.mxu0 0
      %2533 = vmatprep.mubr.bf16.mxu0 0
      %2534 = vmatmul.mubr.bf16.gmra.mrb[0].mxu0 %v2139
      %v2535 = vpop.f32.mrb[0].mxu0
      %v2536 = vadd.f32 %v1986, %v2535
      %v2537 = vpop.f32.mrb[0].mxu0
      %v2538 = vpop.f32.mrb[0].mxu0
      %v2539 = vadd.f32 %v1986, %v2538
      %v2540 = vpop.f32.mrb[0].mxu0
      %2541 = vmatprep.mubr.bf16.mxu0 0
      %2542 = vmatmul.mubr.bf16.gmra.mrb[0].mxu0 %v2142
      %v2543 = vpop.f32.mrb[0].mxu0
      %v2544 = vadd.f32 %v1986, %v2543
      %v2545 = vpop.f32.mrb[0].mxu0
      %v2546 = vpop.f32.mrb[0].mxu0
      %v2547 = vadd.f32 %v1986, %v2546
      %v2548 = vpop.f32.mrb[0].mxu0
      %2549 = vmatprep.mubr.bf16.mxu0 0
      %2550 = vmatmul.mubr.bf16.gmra.mrb[0].mxu0 %v2145
      %v2551 = vpop.f32.mrb[0].mxu0
      %v2552 = vadd.f32 %v1986, %v2551
      %v2553 = vpop.f32.mrb[0].mxu0
      %v2554 = vpop.f32.mrb[0].mxu0
      %v2555 = vadd.f32 %v1986, %v2554
      %v2556 = vpop.f32.mrb[0].mxu0
      %2557 = vmatprep.mubr.bf16.mxu0 0
      %2558 = vmatmul.mubr.bf16.gmra.mrb[0].mxu0 %v2148
      %v2559 = vpop.f32.mrb[0].mxu0
      %v2560 = vadd.f32 %v1986, %v2559
      %v2561 = vpop.f32.mrb[0].mxu0
      %v2562 = vpop.f32.mrb[0].mxu0
      %v2563 = vadd.f32 %v1986, %v2562
      %v2564 = vpop.f32.mrb[0].mxu0
      %2565 = vmatprep.mubr.bf16.mxu0 0
      %2566 = vmatmul.mubr.bf16.gmra.mrb[0].mxu0 %v2151
      %v2567 = vpop.f32.mrb[0].mxu0
      %v2568 = vadd.f32 %v1986, %v2567
      %v2569 = vpop.f32.mrb[0].mxu0
      %v2570 = vpop.f32.mrb[0].mxu0
      %v2571 = vadd.f32 %v1986, %v2570
      %v2572 = vpop.f32.mrb[0].mxu0
      %2573 = vmatprep.mubr.bf16.mxu0 0
      %2574 = vmatmul.mubr.bf16.gmra.mrb[0].mxu0 %v2154
      %v2575 = vpop.f32.mrb[0].mxu0
      %v2576 = vadd.f32 %v1986, %v2575
      %v2577 = vpop.f32.mrb[0].mxu0
      %v2578 = vpop.f32.mrb[0].mxu0
      %v2579 = vadd.f32 %v1986, %v2578
      %v2580 = vpop.f32.mrb[0].mxu0
      %2581 = vmatprep.mubr.bf16.mxu0 0
      %2582 = vmatmul.mubr.bf16.gmra.mrb[0].mxu0 %v2157
      %v2583 = vpop.f32.mrb[0].mxu0
      %v2584 = vadd.f32 %v1986, %v2583
      %v2585 = vpop.f32.mrb[0].mxu0
      %v2586 = vpop.f32.mrb[0].mxu0
      %v2587 = vadd.f32 %v1986, %v2586
      %v2588 = vpop.f32.mrb[0].mxu0
      %2589 = vmatprep.mubr.bf16.mxu0 0
      %2590 = vmatmul.mubr.bf16.gmra.mrb[0].mxu0 %v2160
      %v2591 = vpop.f32.mrb[0].mxu0
      %v2592 = vadd.f32 %v1986, %v2591
      %v2593 = vpop.f32.mrb[0].mxu0
      %v2594 = vpop.f32.mrb[0].mxu0
      %v2595 = vadd.f32 %v1986, %v2594
      %v2596 = vpop.f32.mrb[0].mxu0
      %2597 = vdwg.mxu0
      %v2598 = vsub.f32 0.0, %v2197
      %v2599 = vsub.f32 0.0, %v2199
      %v2600 = vsub.f32 0.0, %v2310
      %v2601 = vsub.f32 0.0, %v2312
      %v2602 = vsub.f32 0.0, %v2423
      %v2603 = vsub.f32 0.0, %v2425
      %v2604 = vsub.f32 0.0, %v2536
      %v2605 = vsub.f32 0.0, %v2201
      %v2606 = vsub.f32 0.0, %v2203
      %v2607 = vsub.f32 0.0, %v2314
      %v2608 = vsub.f32 0.0, %v2316
      %v2609 = vsub.f32 0.0, %v2427
      %v2610 = vsub.f32 0.0, %v2429
      %v2611 = vsub.f32 0.0, %v2539
      %v2612 = vsub.f32 0.0, %v2207
      %v2613 = vsub.f32 0.0, %v2209
      %v2614 = vsub.f32 0.0, %v2320
      %v2615 = vsub.f32 0.0, %v2322
      %v2616 = vsub.f32 0.0, %v2433
      %v2617 = vsub.f32 0.0, %v2435
      %v2618 = vsub.f32 0.0, %v2544
      %v2619 = vsub.f32 0.0, %v2211
      %v2620 = vsub.f32 0.0, %v2213
      %v2621 = vsub.f32 0.0, %v2324
      %v2622 = vsub.f32 0.0, %v2326
      %v2623 = vsub.f32 0.0, %v2437
      %v2624 = vsub.f32 0.0, %v2439
      %v2625 = vsub.f32 0.0, %v2547
      %v2626 = vsub.f32 0.0, %v2217
      %v2627 = vsub.f32 0.0, %v2219
      %v2628 = vsub.f32 0.0, %v2330
      %v2629 = vsub.f32 0.0, %v2332
      %v2630 = vsub.f32 0.0, %v2443
      %v2631 = vsub.f32 0.0, %v2445
      %v2632 = vsub.f32 0.0, %v2552
      %v2633 = vsub.f32 0.0, %v2221
      %v2634 = vsub.f32 0.0, %v2223
      %v2635 = vsub.f32 0.0, %v2334
      %v2636 = vsub.f32 0.0, %v2336
      %v2637 = vsub.f32 0.0, %v2447
      %v2638 = vsub.f32 0.0, %v2449
      %v2639 = vsub.f32 0.0, %v2555
      %v2640 = vsub.f32 0.0, %v2227
      %v2641 = vsub.f32 0.0, %v2229
      %v2642 = vsub.f32 0.0, %v2340
      %v2643 = vsub.f32 0.0, %v2342
      %v2644 = vsub.f32 0.0, %v2453
      %v2645 = vsub.f32 0.0, %v2455
      %v2646 = vsub.f32 0.0, %v2560
      %v2647 = vsub.f32 0.0, %v2231
      %v2648 = vsub.f32 0.0, %v2233
      %v2649 = vsub.f32 0.0, %v2344
      %v2650 = vsub.f32 0.0, %v2346
      %v2651 = vsub.f32 0.0, %v2457
      %v2652 = vsub.f32 0.0, %v2459
      %v2653 = vsub.f32 0.0, %v2563
      %v2654 = vsub.f32 0.0, %v2237
      %v2655 = vsub.f32 0.0, %v2239
      %v2656 = vsub.f32 0.0, %v2350
      %v2657 = vsub.f32 0.0, %v2352
      %v2658 = vsub.f32 0.0, %v2463
      %v2659 = vsub.f32 0.0, %v2465
      %v2660 = vsub.f32 0.0, %v2568
      %v2661 = vsub.f32 0.0, %v2241
      %v2662 = vsub.f32 0.0, %v2243
      %v2663 = vsub.f32 0.0, %v2354
      %v2664 = vsub.f32 0.0, %v2356
      %v2665 = vsub.f32 0.0, %v2467
      %v2666 = vsub.f32 0.0, %v2469
      %v2667 = vsub.f32 0.0, %v2571
      %v2668 = vsub.f32 0.0, %v2247
      %v2669 = vsub.f32 0.0, %v2249
      %v2670 = vsub.f32 0.0, %v2360
      %v2671 = vsub.f32 0.0, %v2362
      %v2672 = vsub.f32 0.0, %v2473
      %v2673 = vsub.f32 0.0, %v2475
      %v2674 = vsub.f32 0.0, %v2576
      %v2675 = vsub.f32 0.0, %v2251
      %v2676 = vsub.f32 0.0, %v2253
      %v2677 = vsub.f32 0.0, %v2364
      %v2678 = vsub.f32 0.0, %v2366
      %v2679 = vsub.f32 0.0, %v2477
      %v2680 = vsub.f32 0.0, %v2479
      %v2681 = vsub.f32 0.0, %v2579
      %v2682 = vsub.f32 0.0, %v2257
      %v2683 = vsub.f32 0.0, %v2259
      %v2684 = vsub.f32 0.0, %v2370
      %v2685 = vsub.f32 0.0, %v2372
      %v2686 = vsub.f32 0.0, %v2483
      %v2687 = vsub.f32 0.0, %v2485
      %v2688 = vsub.f32 0.0, %v2584
      %v2689 = vsub.f32 0.0, %v2261
      %v2690 = vsub.f32 0.0, %v2263
      %v2691 = vsub.f32 0.0, %v2374
      %v2692 = vsub.f32 0.0, %v2376
      %v2693 = vsub.f32 0.0, %v2487
      %v2694 = vsub.f32 0.0, %v2489
      %v2695 = vsub.f32 0.0, %v2587
      %v2696 = vsub.f32 0.0, %v2267
      %v2697 = vsub.f32 0.0, %v2269
      %v2698 = vsub.f32 0.0, %v2380
      %v2699 = vsub.f32 0.0, %v2382
      %v2700 = vsub.f32 0.0, %v2493
      %v2701 = vsub.f32 0.0, %v2495
      %v2702 = vsub.f32 0.0, %v2592
      %v2703 = vsub.f32 0.0, %v2271
      %v2704 = vsub.f32 0.0, %v2273
      %v2705 = vsub.f32 0.0, %v2384
      %v2706 = vsub.f32 0.0, %v2386
      %v2707 = vsub.f32 0.0, %v2497
      %v2708 = vsub.f32 0.0, %v2499
      %v2709 = vsub.f32 0.0, %v2595
      %v2710 = vmul.f32 %v2598, 1.442695
      %v2711 = vpow.pop %v2710
      %v2712 = vmul.f32 %v2599, 1.442695
      %v2713 = vpow.pop %v2712
      %v2714 = vmul.f32 %v2600, 1.442695
      %v2715 = vpow.pop %v2714
      %v2716 = vmul.f32 %v2601, 1.442695
      %v2717 = vpow.pop %v2716
      %v2718 = vmul.f32 %v2602, 1.442695
      %v2719 = vpow.pop %v2718
      %v2720 = vmul.f32 %v2603, 1.442695
      %v2721 = vpow.pop %v2720
      %v2722 = vmul.f32 %v2604, 1.442695
      %v2723 = vpow.pop %v2722
      %v2724 = vmul.f32 %v2605, 1.442695
      %v2725 = vpow.pop %v2724
      %v2726 = vmul.f32 %v2606, 1.442695
      %v2727 = vpow.pop %v2726
      %v2728 = vmul.f32 %v2607, 1.442695
      %v2729 = vpow.pop %v2728
      %v2730 = vmul.f32 %v2608, 1.442695
      %v2731 = vpow.pop %v2730
      %v2732 = vmul.f32 %v2609, 1.442695
      %v2733 = vpow.pop %v2732
      %v2734 = vmul.f32 %v2610, 1.442695
      %v2735 = vpow.pop %v2734
      %v2736 = vmul.f32 %v2611, 1.442695
      %v2737 = vpow.pop %v2736
      %v2738 = vmul.f32 %v2612, 1.442695
      %v2739 = vpow.pop %v2738
      %v2740 = vmul.f32 %v2613, 1.442695
      %v2741 = vpow.pop %v2740
      %v2742 = vmul.f32 %v2614, 1.442695
      %v2743 = vpow.pop %v2742
      %v2744 = vmul.f32 %v2615, 1.442695
      %v2745 = vpow.pop %v2744
      %v2746 = vmul.f32 %v2616, 1.442695
      %v2747 = vpow.pop %v2746
      %v2748 = vmul.f32 %v2617, 1.442695
      %v2749 = vpow.pop %v2748
      %v2750 = vmul.f32 %v2618, 1.442695
      %v2751 = vpow.pop %v2750
      %v2752 = vmul.f32 %v2619, 1.442695
      %v2753 = vpow.pop %v2752
      %v2754 = vmul.f32 %v2620, 1.442695
      %v2755 = vpow.pop %v2754
      %v2756 = vmul.f32 %v2621, 1.442695
      %v2757 = vpow.pop %v2756
      %v2758 = vmul.f32 %v2622, 1.442695
      %v2759 = vpow.pop %v2758
      %v2760 = vmul.f32 %v2623, 1.442695
      %v2761 = vpow.pop %v2760
      %v2762 = vmul.f32 %v2624, 1.442695
      %v2763 = vpow.pop %v2762
      %v2764 = vmul.f32 %v2625, 1.442695
      %v2765 = vpow.pop %v2764
      %v2766 = vmul.f32 %v2626, 1.442695
      %v2767 = vpow.pop %v2766
      %v2768 = vmul.f32 %v2627, 1.442695
      %v2769 = vpow.pop %v2768
      %v2770 = vmul.f32 %v2628, 1.442695
      %v2771 = vpow.pop %v2770
      %v2772 = vmul.f32 %v2629, 1.442695
      %v2773 = vpow.pop %v2772
      %v2774 = vmul.f32 %v2630, 1.442695
      %v2775 = vpow.pop %v2774
      %v2776 = vmul.f32 %v2631, 1.442695
      %v2777 = vpow.pop %v2776
      %v2778 = vmul.f32 %v2632, 1.442695
      %v2779 = vpow.pop %v2778
      %v2780 = vmul.f32 %v2633, 1.442695
      %v2781 = vpow.pop %v2780
      %v2782 = vmul.f32 %v2634, 1.442695
      %v2783 = vpow.pop %v2782
      %v2784 = vmul.f32 %v2635, 1.442695
      %v2785 = vpow.pop %v2784
      %v2786 = vmul.f32 %v2636, 1.442695
      %v2787 = vpow.pop %v2786
      %v2788 = vmul.f32 %v2637, 1.442695
      %v2789 = vpow.pop %v2788
      %v2790 = vmul.f32 %v2638, 1.442695
      %v2791 = vpow.pop %v2790
      %v2792 = vmul.f32 %v2639, 1.442695
      %v2793 = vpow.pop %v2792
      %v2794 = vmul.f32 %v2640, 1.442695
      %v2795 = vpow.pop %v2794
      %v2796 = vmul.f32 %v2641, 1.442695
      %v2797 = vpow.pop %v2796
      %v2798 = vmul.f32 %v2642, 1.442695
      %v2799 = vpow.pop %v2798
      %v2800 = vmul.f32 %v2643, 1.442695
      %v2801 = vpow.pop %v2800
      %v2802 = vmul.f32 %v2644, 1.442695
      %v2803 = vpow.pop %v2802
      %v2804 = vmul.f32 %v2645, 1.442695
      %v2805 = vpow.pop %v2804
      %v2806 = vmul.f32 %v2646, 1.442695
      %v2807 = vpow.pop %v2806
      %v2808 = vmul.f32 %v2647, 1.442695
      %v2809 = vpow.pop %v2808
      %v2810 = vmul.f32 %v2648, 1.442695
      %v2811 = vpow.pop %v2810
      %v2812 = vmul.f32 %v2649, 1.442695
      %v2813 = vpow.pop %v2812
      %v2814 = vmul.f32 %v2650, 1.442695
      %v2815 = vpow.pop %v2814
      %v2816 = vmul.f32 %v2651, 1.442695
      %v2817 = vpow.pop %v2816
      %v2818 = vmul.f32 %v2652, 1.442695
      %v2819 = vpow.pop %v2818
      %v2820 = vmul.f32 %v2653, 1.442695
      %v2821 = vpow.pop %v2820
      %v2822 = vmul.f32 %v2654, 1.442695
      %v2823 = vpow.pop %v2822
      %v2824 = vmul.f32 %v2655, 1.442695
      %v2825 = vpow.pop %v2824
      %v2826 = vmul.f32 %v2656, 1.442695
      %v2827 = vpow.pop %v2826
      %v2828 = vmul.f32 %v2657, 1.442695
      %v2829 = vpow.pop %v2828
      %v2830 = vmul.f32 %v2658, 1.442695
      %v2831 = vpow.pop %v2830
      %v2832 = vmul.f32 %v2659, 1.442695
      %v2833 = vpow.pop %v2832
      %v2834 = vmul.f32 %v2660, 1.442695
      %v2835 = vpow.pop %v2834
      %v2836 = vmul.f32 %v2661, 1.442695
      %v2837 = vpow.pop %v2836
      %v2838 = vmul.f32 %v2662, 1.442695
      %v2839 = vpow.pop %v2838
      %v2840 = vmul.f32 %v2663, 1.442695
      %v2841 = vpow.pop %v2840
      %v2842 = vmul.f32 %v2664, 1.442695
      %v2843 = vpow.pop %v2842
      %v2844 = vmul.f32 %v2665, 1.442695
      %v2845 = vpow.pop %v2844
      %v2846 = vmul.f32 %v2666, 1.442695
      %v2847 = vpow.pop %v2846
      %v2848 = vmul.f32 %v2667, 1.442695
      %v2849 = vpow.pop %v2848
      %v2850 = vmul.f32 %v2668, 1.442695
      %v2851 = vpow.pop %v2850
      %v2852 = vmul.f32 %v2669, 1.442695
      %v2853 = vpow.pop %v2852
      %v2854 = vmul.f32 %v2670, 1.442695
      %v2855 = vpow.pop %v2854
      %v2856 = vmul.f32 %v2671, 1.442695
      %v2857 = vpow.pop %v2856
      %v2858 = vmul.f32 %v2672, 1.442695
      %v2859 = vpow.pop %v2858
      %v2860 = vmul.f32 %v2673, 1.442695
      %v2861 = vpow.pop %v2860
      %v2862 = vmul.f32 %v2674, 1.442695
      %v2863 = vpow.pop %v2862
      %v2864 = vmul.f32 %v2675, 1.442695
      %v2865 = vpow.pop %v2864
      %v2866 = vmul.f32 %v2676, 1.442695
      %v2867 = vpow.pop %v2866
      %v2868 = vmul.f32 %v2677, 1.442695
      %v2869 = vpow.pop %v2868
      %v2870 = vmul.f32 %v2678, 1.442695
      %v2871 = vpow.pop %v2870
      %v2872 = vmul.f32 %v2679, 1.442695
      %v2873 = vpow.pop %v2872
      %v2874 = vmul.f32 %v2680, 1.442695
      %v2875 = vpow.pop %v2874
      %v2876 = vmul.f32 %v2681, 1.442695
      %v2877 = vpow.pop %v2876
      %v2878 = vmul.f32 %v2682, 1.442695
      %v2879 = vpow.pop %v2878
      %v2880 = vmul.f32 %v2683, 1.442695
      %v2881 = vpow.pop %v2880
      %v2882 = vmul.f32 %v2684, 1.442695
      %v2883 = vpow.pop %v2882
      %v2884 = vmul.f32 %v2685, 1.442695
      %v2885 = vpow.pop %v2884
      %v2886 = vmul.f32 %v2686, 1.442695
      %v2887 = vpow.pop %v2886
      %v2888 = vmul.f32 %v2687, 1.442695
      %v2889 = vpow.pop %v2888
      %v2890 = vmul.f32 %v2688, 1.442695
      %v2891 = vpow.pop %v2890
      %v2892 = vmul.f32 %v2689, 1.442695
      %v2893 = vpow.pop %v2892
      %v2894 = vmul.f32 %v2690, 1.442695
      %v2895 = vpow.pop %v2894
      %v2896 = vmul.f32 %v2691, 1.442695
      %v2897 = vpow.pop %v2896
      %v2898 = vmul.f32 %v2692, 1.442695
      %v2899 = vpow.pop %v2898
      %v2900 = vmul.f32 %v2693, 1.442695
      %v2901 = vpow.pop %v2900
      %v2902 = vmul.f32 %v2694, 1.442695
      %v2903 = vpow.pop %v2902
      %v2904 = vmul.f32 %v2695, 1.442695
      %v2905 = vpow.pop %v2904
      %v2906 = vmul.f32 %v2696, 1.442695
      %v2907 = vpow.pop %v2906
      %v2908 = vmul.f32 %v2697, 1.442695
      %v2909 = vpow.pop %v2908
      %v2910 = vmul.f32 %v2698, 1.442695
      %v2911 = vpow.pop %v2910
      %v2912 = vmul.f32 %v2699, 1.442695
      %v2913 = vpow.pop %v2912
      %v2914 = vmul.f32 %v2700, 1.442695
      %v2915 = vpow.pop %v2914
      %v2916 = vmul.f32 %v2701, 1.442695
      %v2917 = vpow.pop %v2916
      %v2918 = vmul.f32 %v2702, 1.442695
      %v2919 = vpow.pop %v2918
      %v2920 = vmul.f32 %v2703, 1.442695
      %v2921 = vpow.pop %v2920
      %v2922 = vmul.f32 %v2704, 1.442695
      %v2923 = vpow.pop %v2922
      %v2924 = vmul.f32 %v2705, 1.442695
      %v2925 = vpow.pop %v2924
      %v2926 = vmul.f32 %v2706, 1.442695
      %v2927 = vpow.pop %v2926
      %v2928 = vmul.f32 %v2707, 1.442695
      %v2929 = vpow.pop %v2928
      %v2930 = vmul.f32 %v2708, 1.442695
      %v2931 = vpow.pop %v2930
      %v2932 = vmul.f32 %v2709, 1.442695
      %v2933 = vpow.pop %v2932
      %v2934 = vadd.f32 %v2711, 1.0
      %v2935 = vadd.f32 %v2713, 1.0
      %v2936 = vadd.f32 %v2715, 1.0
      %v2937 = vadd.f32 %v2717, 1.0
      %v2938 = vadd.f32 %v2719, 1.0
      %v2939 = vadd.f32 %v2721, 1.0
      %v2940 = vadd.f32 %v2723, 1.0
      %v2941 = vadd.f32 %v2725, 1.0
      %v2942 = vadd.f32 %v2727, 1.0
      %v2943 = vadd.f32 %v2729, 1.0
      %v2944 = vadd.f32 %v2731, 1.0
      %v2945 = vadd.f32 %v2733, 1.0
      %v2946 = vadd.f32 %v2735, 1.0
      %v2947 = vadd.f32 %v2737, 1.0
      %v2948 = vadd.f32 %v2739, 1.0
      %v2949 = vadd.f32 %v2741, 1.0
      %v2950 = vadd.f32 %v2743, 1.0
      %v2951 = vadd.f32 %v2745, 1.0
      %v2952 = vadd.f32 %v2747, 1.0
      %v2953 = vadd.f32 %v2749, 1.0
      %v2954 = vadd.f32 %v2751, 1.0
      %v2955 = vadd.f32 %v2753, 1.0
      %v2956 = vadd.f32 %v2755, 1.0
      %v2957 = vadd.f32 %v2757, 1.0
      %v2958 = vadd.f32 %v2759, 1.0
      %v2959 = vadd.f32 %v2761, 1.0
      %v2960 = vadd.f32 %v2763, 1.0
      %v2961 = vadd.f32 %v2765, 1.0
      %v2962 = vadd.f32 %v2767, 1.0
      %v2963 = vadd.f32 %v2769, 1.0
      %v2964 = vadd.f32 %v2771, 1.0
      %v2965 = vadd.f32 %v2773, 1.0
      %v2966 = vadd.f32 %v2775, 1.0
      %v2967 = vadd.f32 %v2777, 1.0
      %v2968 = vadd.f32 %v2779, 1.0
      %v2969 = vadd.f32 %v2781, 1.0
      %v2970 = vadd.f32 %v2783, 1.0
      %v2971 = vadd.f32 %v2785, 1.0
      %v2972 = vadd.f32 %v2787, 1.0
      %v2973 = vadd.f32 %v2789, 1.0
      %v2974 = vadd.f32 %v2791, 1.0
      %v2975 = vadd.f32 %v2793, 1.0
      %v2976 = vadd.f32 %v2795, 1.0
      %v2977 = vadd.f32 %v2797, 1.0
      %v2978 = vadd.f32 %v2799, 1.0
      %v2979 = vadd.f32 %v2801, 1.0
      %v2980 = vadd.f32 %v2803, 1.0
      %v2981 = vadd.f32 %v2805, 1.0
      %v2982 = vadd.f32 %v2807, 1.0
      %v2983 = vadd.f32 %v2809, 1.0
      %v2984 = vadd.f32 %v2811, 1.0
      %v2985 = vadd.f32 %v2813, 1.0
      %v2986 = vadd.f32 %v2815, 1.0
      %v2987 = vadd.f32 %v2817, 1.0
      %v2988 = vadd.f32 %v2819, 1.0
      %v2989 = vadd.f32 %v2821, 1.0
      %v2990 = vadd.f32 %v2823, 1.0
      %v2991 = vadd.f32 %v2825, 1.0
      %v2992 = vadd.f32 %v2827, 1.0
      %v2993 = vadd.f32 %v2829, 1.0
      %v2994 = vadd.f32 %v2831, 1.0
      %v2995 = vadd.f32 %v2833, 1.0
      %v2996 = vadd.f32 %v2835, 1.0
      %v2997 = vadd.f32 %v2837, 1.0
      %v2998 = vadd.f32 %v2839, 1.0
      %v2999 = vadd.f32 %v2841, 1.0
      %v3000 = vadd.f32 %v2843, 1.0
      %v3001 = vadd.f32 %v2845, 1.0
      %v3002 = vadd.f32 %v2847, 1.0
      %v3003 = vadd.f32 %v2849, 1.0
      %v3004 = vadd.f32 %v2851, 1.0
      %v3005 = vadd.f32 %v2853, 1.0
      %v3006 = vadd.f32 %v2855, 1.0
      %v3007 = vadd.f32 %v2857, 1.0
      %v3008 = vadd.f32 %v2859, 1.0
      %v3009 = vadd.f32 %v2861, 1.0
      %v3010 = vadd.f32 %v2863, 1.0
      %v3011 = vadd.f32 %v2865, 1.0
      %v3012 = vadd.f32 %v2867, 1.0
      %v3013 = vadd.f32 %v2869, 1.0
      %v3014 = vadd.f32 %v2871, 1.0
      %v3015 = vadd.f32 %v2873, 1.0
      %v3016 = vadd.f32 %v2875, 1.0
      %v3017 = vadd.f32 %v2877, 1.0
      %v3018 = vadd.f32 %v2879, 1.0
      %v3019 = vadd.f32 %v2881, 1.0
      %v3020 = vadd.f32 %v2883, 1.0
      %v3021 = vadd.f32 %v2885, 1.0
      %v3022 = vadd.f32 %v2887, 1.0
      %v3023 = vadd.f32 %v2889, 1.0
      %v3024 = vadd.f32 %v2891, 1.0
      %v3025 = vadd.f32 %v2893, 1.0
      %v3026 = vadd.f32 %v2895, 1.0
      %v3027 = vadd.f32 %v2897, 1.0
      %v3028 = vadd.f32 %v2899, 1.0
      %v3029 = vadd.f32 %v2901, 1.0
      %v3030 = vadd.f32 %v2903, 1.0
      %v3031 = vadd.f32 %v2905, 1.0
      %v3032 = vadd.f32 %v2907, 1.0
      %v3033 = vadd.f32 %v2909, 1.0
      %v3034 = vadd.f32 %v2911, 1.0
      %v3035 = vadd.f32 %v2913, 1.0
      %v3036 = vadd.f32 %v2915, 1.0
      %v3037 = vadd.f32 %v2917, 1.0
      %v3038 = vadd.f32 %v2919, 1.0
      %v3039 = vadd.f32 %v2921, 1.0
      %v3040 = vadd.f32 %v2923, 1.0
      %v3041 = vadd.f32 %v2925, 1.0
      %v3042 = vadd.f32 %v2927, 1.0
      %v3043 = vadd.f32 %v2929, 1.0
      %v3044 = vadd.f32 %v2931, 1.0
      %v3045 = vadd.f32 %v2933, 1.0
      %v3046 = vrcp.pop %v2934
      %v3047 = vrcp.pop %v2935
      %v3048 = vrcp.pop %v2936
      %v3049 = vrcp.pop %v2937
      %v3050 = vrcp.pop %v2938
      %v3051 = vrcp.pop %v2939
      %v3052 = vrcp.pop %v2940
      %v3053 = vrcp.pop %v2941
      %v3054 = vrcp.pop %v2942
      %v3055 = vrcp.pop %v2943
      %v3056 = vrcp.pop %v2944
      %v3057 = vrcp.pop %v2945
      %v3058 = vrcp.pop %v2946
      %v3059 = vrcp.pop %v2947
      %v3060 = vrcp.pop %v2948
      %v3061 = vrcp.pop %v2949
      %v3062 = vrcp.pop %v2950
      %v3063 = vrcp.pop %v2951
      %v3064 = vrcp.pop %v2952
      %v3065 = vrcp.pop %v2953
      %v3066 = vrcp.pop %v2954
      %v3067 = vrcp.pop %v2955
      %v3068 = vrcp.pop %v2956
      %v3069 = vrcp.pop %v2957
      %v3070 = vrcp.pop %v2958
      %v3071 = vrcp.pop %v2959
      %v3072 = vrcp.pop %v2960
      %v3073 = vrcp.pop %v2961
      %v3074 = vrcp.pop %v2962
      %v3075 = vrcp.pop %v2963
      %v3076 = vrcp.pop %v2964
      %v3077 = vrcp.pop %v2965
      %v3078 = vrcp.pop %v2966
      %v3079 = vrcp.pop %v2967
      %v3080 = vrcp.pop %v2968
      %v3081 = vrcp.pop %v2969
      %v3082 = vrcp.pop %v2970
      %v3083 = vrcp.pop %v2971
      %v3084 = vrcp.pop %v2972
      %v3085 = vrcp.pop %v2973
      %v3086 = vrcp.pop %v2974
      %v3087 = vrcp.pop %v2975
      %v3088 = vrcp.pop %v2976
      %v3089 = vrcp.pop %v2977
      %v3090 = vrcp.pop %v2978
      %v3091 = vrcp.pop %v2979
      %v3092 = vrcp.pop %v2980
      %v3093 = vrcp.pop %v2981
      %v3094 = vrcp.pop %v2982
      %v3095 = vrcp.pop %v2983
      %v3096 = vrcp.pop %v2984
      %v3097 = vrcp.pop %v2985
      %v3098 = vrcp.pop %v2986
      %v3099 = vrcp.pop %v2987
      %v3100 = vrcp.pop %v2988
      %v3101 = vrcp.pop %v2989
      %v3102 = vrcp.pop %v2990
      %v3103 = vrcp.pop %v2991
      %v3104 = vrcp.pop %v2992
      %v3105 = vrcp.pop %v2993
      %v3106 = vrcp.pop %v2994
      %v3107 = vrcp.pop %v2995
      %v3108 = vrcp.pop %v2996
      %v3109 = vrcp.pop %v2997
      %v3110 = vrcp.pop %v2998
      %v3111 = vrcp.pop %v2999
      %v3112 = vrcp.pop %v3000
      %v3113 = vrcp.pop %v3001
      %v3114 = vrcp.pop %v3002
      %v3115 = vrcp.pop %v3003
      %v3116 = vrcp.pop %v3004
      %v3117 = vrcp.pop %v3005
      %v3118 = vrcp.pop %v3006
      %v3119 = vrcp.pop %v3007
      %v3120 = vrcp.pop %v3008
      %v3121 = vrcp.pop %v3009
      %v3122 = vrcp.pop %v3010
      %v3123 = vrcp.pop %v3011
      %v3124 = vrcp.pop %v3012
      %v3125 = vrcp.pop %v3013
      %v3126 = vrcp.pop %v3014
      %v3127 = vrcp.pop %v3015
      %v3128 = vrcp.pop %v3016
      %v3129 = vrcp.pop %v3017
      %v3130 = vrcp.pop %v3018
      %v3131 = vrcp.pop %v3019
      %v3132 = vrcp.pop %v3020
      %v3133 = vrcp.pop %v3021
      %v3134 = vrcp.pop %v3022
      %v3135 = vrcp.pop %v3023
      %v3136 = vrcp.pop %v3024
      %v3137 = vrcp.pop %v3025
      %v3138 = vrcp.pop %v3026
      %v3139 = vrcp.pop %v3027
      %v3140 = vrcp.pop %v3028
      %v3141 = vrcp.pop %v3029
      %v3142 = vrcp.pop %v3030
      %v3143 = vrcp.pop %v3031
      %v3144 = vrcp.pop %v3032
      %v3145 = vrcp.pop %v3033
      %v3146 = vrcp.pop %v3034
      %v3147 = vrcp.pop %v3035
      %v3148 = vrcp.pop %v3036
      %v3149 = vrcp.pop %v3037
      %v3150 = vrcp.pop %v3038
      %v3151 = vrcp.pop %v3039
      %v3152 = vrcp.pop %v3040
      %v3153 = vrcp.pop %v3041
      %v3154 = vrcp.pop %v3042
      %v3155 = vrcp.pop %v3043
      %v3156 = vrcp.pop %v3044
      %v3157 = vrcp.pop %v3045
      %v3158 = vpack.c.bf16 %v3053, %v3046
      %v3159 = vpack.c.bf16 %v3054, %v3047
      %v3160 = vpack.c.bf16 %v3055, %v3048
      %v3161 = vpack.c.bf16 %v3056, %v3049
      %v3162 = vpack.c.bf16 %v3057, %v3050
      %v3163 = vpack.c.bf16 %v3058, %v3051
      %v3164 = vpack.c.bf16 %v3059, %v3052
      %v3165 = vpack.c.bf16 %v3067, %v3060
      %v3166 = vpack.c.bf16 %v3068, %v3061
      %v3167 = vpack.c.bf16 %v3069, %v3062
      %v3168 = vpack.c.bf16 %v3070, %v3063
      %v3169 = vpack.c.bf16 %v3071, %v3064
      %v3170 = vpack.c.bf16 %v3072, %v3065
      %v3171 = vpack.c.bf16 %v3073, %v3066
      %v3172 = vpack.c.bf16 %v3081, %v3074
      %v3173 = vpack.c.bf16 %v3082, %v3075
      %v3174 = vpack.c.bf16 %v3083, %v3076
      %v3175 = vpack.c.bf16 %v3084, %v3077
      %v3176 = vpack.c.bf16 %v3085, %v3078
      %v3177 = vpack.c.bf16 %v3086, %v3079
      %v3178 = vpack.c.bf16 %v3087, %v3080
      %v3179 = vpack.c.bf16 %v3095, %v3088
      %v3180 = vpack.c.bf16 %v3096, %v3089
      %v3181 = vpack.c.bf16 %v3097, %v3090
      %v3182 = vpack.c.bf16 %v3098, %v3091
      %v3183 = vpack.c.bf16 %v3099, %v3092
      %v3184 = vpack.c.bf16 %v3100, %v3093
      %v3185 = vpack.c.bf16 %v3101, %v3094
      %v3186 = vpack.c.bf16 %v3109, %v3102
      %v3187 = vpack.c.bf16 %v3110, %v3103
      %v3188 = vpack.c.bf16 %v3111, %v3104
      %v3189 = vpack.c.bf16 %v3112, %v3105
      %v3190 = vpack.c.bf16 %v3113, %v3106
      %v3191 = vpack.c.bf16 %v3114, %v3107
      %v3192 = vpack.c.bf16 %v3115, %v3108
      %v3193 = vpack.c.bf16 %v3123, %v3116
      %v3194 = vpack.c.bf16 %v3124, %v3117
      %v3195 = vpack.c.bf16 %v3125, %v3118
      %v3196 = vpack.c.bf16 %v3126, %v3119
      %v3197 = vpack.c.bf16 %v3127, %v3120
      %v3198 = vpack.c.bf16 %v3128, %v3121
      %v3199 = vpack.c.bf16 %v3129, %v3122
      %v3200 = vpack.c.bf16 %v3137, %v3130
      %v3201 = vpack.c.bf16 %v3138, %v3131
      %v3202 = vpack.c.bf16 %v3139, %v3132
      %v3203 = vpack.c.bf16 %v3140, %v3133
      %v3204 = vpack.c.bf16 %v3141, %v3134
      %v3205 = vpack.c.bf16 %v3142, %v3135
      %v3206 = vpack.c.bf16 %v3143, %v3136
      %v3207 = vpack.c.bf16 %v3151, %v3144
      %v3208 = vpack.c.bf16 %v3152, %v3145
      %v3209 = vpack.c.bf16 %v3153, %v3146
      %v3210 = vpack.c.bf16 %v3154, %v3147
      %v3211 = vpack.c.bf16 %v3155, %v3148
      %v3212 = vpack.c.bf16 %v3156, %v3149
      %v3213 = vpack.c.bf16 %v3157, %v3150
      %v3270 = vunpack.c.l.b16 %v3158
      %v3271 = vunpack.c.l.b16 %v3159
      %v3272 = vunpack.c.l.b16 %v3160
      %v3273 = vunpack.c.l.b16 %v3161
      %v3274 = vunpack.c.l.b16 %v3162
      %v3275 = vunpack.c.l.b16 %v3163
      %v3276 = vunpack.c.l.b16 %v3164
      %v3277 = vunpack.c.h.b16 %v3158
      %v3278 = vunpack.c.h.b16 %v3159
      %v3279 = vunpack.c.h.b16 %v3160
      %v3280 = vunpack.c.h.b16 %v3161
      %v3281 = vunpack.c.h.b16 %v3162
      %v3282 = vunpack.c.h.b16 %v3163
      %v3283 = vunpack.c.h.b16 %v3164
      %v3284 = vunpack.c.l.b16 %v3165
      %v3285 = vunpack.c.l.b16 %v3166
      %v3286 = vunpack.c.l.b16 %v3167
      %v3287 = vunpack.c.l.b16 %v3168
      %v3288 = vunpack.c.l.b16 %v3169
      %v3289 = vunpack.c.l.b16 %v3170
      %v3290 = vunpack.c.l.b16 %v3171
      %v3291 = vunpack.c.h.b16 %v3165
      %v3292 = vunpack.c.h.b16 %v3166
      %v3293 = vunpack.c.h.b16 %v3167
      %v3294 = vunpack.c.h.b16 %v3168
      %v3295 = vunpack.c.h.b16 %v3169
      %v3296 = vunpack.c.h.b16 %v3170
      %v3297 = vunpack.c.h.b16 %v3171
      %v3298 = vunpack.c.l.b16 %v3172
      %v3299 = vunpack.c.l.b16 %v3173
      %v3300 = vunpack.c.l.b16 %v3174
      %v3301 = vunpack.c.l.b16 %v3175
      %v3302 = vunpack.c.l.b16 %v3176
      %v3303 = vunpack.c.l.b16 %v3177
      %v3304 = vunpack.c.l.b16 %v3178
      %v3305 = vunpack.c.h.b16 %v3172
      %v3306 = vunpack.c.h.b16 %v3173
      %v3307 = vunpack.c.h.b16 %v3174
      %v3308 = vunpack.c.h.b16 %v3175
      %v3309 = vunpack.c.h.b16 %v3176
      %v3310 = vunpack.c.h.b16 %v3177
      %v3311 = vunpack.c.h.b16 %v3178
      %v3312 = vunpack.c.l.b16 %v3179
      %v3313 = vunpack.c.l.b16 %v3180
      %v3314 = vunpack.c.l.b16 %v3181
      %v3315 = vunpack.c.l.b16 %v3182
      %v3316 = vunpack.c.l.b16 %v3183
      %v3317 = vunpack.c.l.b16 %v3184
      %v3318 = vunpack.c.l.b16 %v3185
      %v3319 = vunpack.c.h.b16 %v3179
      %v3320 = vunpack.c.h.b16 %v3180
      %v3321 = vunpack.c.h.b16 %v3181
      %v3322 = vunpack.c.h.b16 %v3182
      %v3323 = vunpack.c.h.b16 %v3183
      %v3324 = vunpack.c.h.b16 %v3184
      %v3325 = vunpack.c.h.b16 %v3185
      %v3326 = vunpack.c.l.b16 %v3186
      %v3327 = vunpack.c.l.b16 %v3187
      %v3328 = vunpack.c.l.b16 %v3188
      %v3329 = vunpack.c.l.b16 %v3189
      %v3330 = vunpack.c.l.b16 %v3190
      %v3331 = vunpack.c.l.b16 %v3191
      %v3332 = vunpack.c.l.b16 %v3192
      %v3333 = vunpack.c.h.b16 %v3186
      %v3334 = vunpack.c.h.b16 %v3187
      %v3335 = vunpack.c.h.b16 %v3188
      %v3336 = vunpack.c.h.b16 %v3189
      %v3337 = vunpack.c.h.b16 %v3190
      %v3338 = vunpack.c.h.b16 %v3191
      %v3339 = vunpack.c.h.b16 %v3192
      %v3340 = vunpack.c.l.b16 %v3193
      %v3341 = vunpack.c.l.b16 %v3194
      %v3342 = vunpack.c.l.b16 %v3195
      %v3343 = vunpack.c.l.b16 %v3196
      %v3344 = vunpack.c.l.b16 %v3197
      %v3345 = vunpack.c.l.b16 %v3198
      %v3346 = vunpack.c.l.b16 %v3199
      %v3347 = vunpack.c.h.b16 %v3193
      %v3348 = vunpack.c.h.b16 %v3194
      %v3349 = vunpack.c.h.b16 %v3195
      %v3350 = vunpack.c.h.b16 %v3196
      %v3351 = vunpack.c.h.b16 %v3197
      %v3352 = vunpack.c.h.b16 %v3198
      %v3353 = vunpack.c.h.b16 %v3199
      %v3354 = vunpack.c.l.b16 %v3200
      %v3355 = vunpack.c.l.b16 %v3201
      %v3356 = vunpack.c.l.b16 %v3202
      %v3357 = vunpack.c.l.b16 %v3203
      %v3358 = vunpack.c.l.b16 %v3204
      %v3359 = vunpack.c.l.b16 %v3205
      %v3360 = vunpack.c.l.b16 %v3206
      %v3361 = vunpack.c.h.b16 %v3200
      %v3362 = vunpack.c.h.b16 %v3201
      %v3363 = vunpack.c.h.b16 %v3202
      %v3364 = vunpack.c.h.b16 %v3203
      %v3365 = vunpack.c.h.b16 %v3204
      %v3366 = vunpack.c.h.b16 %v3205
      %v3367 = vunpack.c.h.b16 %v3206
      %v3368 = vunpack.c.l.b16 %v3207
      %v3369 = vunpack.c.l.b16 %v3208
      %v3370 = vunpack.c.l.b16 %v3209
      %v3371 = vunpack.c.l.b16 %v3210
      %v3372 = vunpack.c.l.b16 %v3211
      %v3373 = vunpack.c.l.b16 %v3212
      %v3374 = vunpack.c.l.b16 %v3213
      %v3375 = vunpack.c.h.b16 %v3207
      %v3376 = vunpack.c.h.b16 %v3208
      %v3377 = vunpack.c.h.b16 %v3209
      %v3378 = vunpack.c.h.b16 %v3210
      %v3379 = vunpack.c.h.b16 %v3211
      %v3380 = vunpack.c.h.b16 %v3212
      %v3381 = vunpack.c.h.b16 %v3213
      %v3382 = vpack.c.b16 %v3271, %v3270
      %v3383 = vpack.c.b16 %v3273, %v3272
      %v3384 = vpack.c.b16 %v3275, %v3274
      %v3385 = vpack.c.b16 %v3276, %v3276
      %v3386 = vpack.c.b16 %v3278, %v3277
      %v3387 = vpack.c.b16 %v3280, %v3279
      %v3388 = vpack.c.b16 %v3282, %v3281
      %v3389 = vpack.c.b16 %v3283, %v3283
      %v3390 = vpack.c.b16 %v3285, %v3284
      %v3391 = vpack.c.b16 %v3287, %v3286
      %v3392 = vpack.c.b16 %v3289, %v3288
      %v3393 = vpack.c.b16 %v3290, %v3290
      %v3394 = vpack.c.b16 %v3292, %v3291
      %v3395 = vpack.c.b16 %v3294, %v3293
      %v3396 = vpack.c.b16 %v3296, %v3295
      %v3397 = vpack.c.b16 %v3297, %v3297
      %v3398 = vpack.c.b16 %v3299, %v3298
      %v3399 = vpack.c.b16 %v3301, %v3300
      %v3400 = vpack.c.b16 %v3303, %v3302
      %v3401 = vpack.c.b16 %v3304, %v3304
      %v3402 = vpack.c.b16 %v3306, %v3305
      %v3403 = vpack.c.b16 %v3308, %v3307
      %v3404 = vpack.c.b16 %v3310, %v3309
      %v3405 = vpack.c.b16 %v3311, %v3311
      %v3406 = vpack.c.b16 %v3313, %v3312
      %v3407 = vpack.c.b16 %v3315, %v3314
      %v3408 = vpack.c.b16 %v3317, %v3316
      %v3409 = vpack.c.b16 %v3318, %v3318
      %v3410 = vpack.c.b16 %v3320, %v3319
      %v3411 = vpack.c.b16 %v3322, %v3321
      %v3412 = vpack.c.b16 %v3324, %v3323
      %v3413 = vpack.c.b16 %v3325, %v3325
      %v3414 = vpack.c.b16 %v3327, %v3326
      %v3415 = vpack.c.b16 %v3329, %v3328
      %v3416 = vpack.c.b16 %v3331, %v3330
      %v3417 = vpack.c.b16 %v3332, %v3332
      %v3418 = vpack.c.b16 %v3334, %v3333
      %v3419 = vpack.c.b16 %v3336, %v3335
      %v3420 = vpack.c.b16 %v3338, %v3337
      %v3421 = vpack.c.b16 %v3339, %v3339
      %v3422 = vpack.c.b16 %v3341, %v3340
      %v3423 = vpack.c.b16 %v3343, %v3342
      %v3424 = vpack.c.b16 %v3345, %v3344
      %v3425 = vpack.c.b16 %v3346, %v3346
      %v3426 = vpack.c.b16 %v3348, %v3347
      %v3427 = vpack.c.b16 %v3350, %v3349
      %v3428 = vpack.c.b16 %v3352, %v3351
      %v3429 = vpack.c.b16 %v3353, %v3353
      %v3430 = vpack.c.b16 %v3355, %v3354
      %v3431 = vpack.c.b16 %v3357, %v3356
      %v3432 = vpack.c.b16 %v3359, %v3358
      %v3433 = vpack.c.b16 %v3360, %v3360
      %v3434 = vpack.c.b16 %v3362, %v3361
      %v3435 = vpack.c.b16 %v3364, %v3363
      %v3436 = vpack.c.b16 %v3366, %v3365
      %v3437 = vpack.c.b16 %v3367, %v3367
      %v3438 = vpack.c.b16 %v3369, %v3368
      %v3439 = vpack.c.b16 %v3371, %v3370
      %v3440 = vpack.c.b16 %v3373, %v3372
      %v3441 = vpack.c.b16 %v3374, %v3374
      %v3442 = vpack.c.b16 %v3376, %v3375
      %v3443 = vpack.c.b16 %v3378, %v3377
      %v3444 = vpack.c.b16 %v3380, %v3379
      %v3445 = vpack.c.b16 %v3381, %v3381
      %3510 = vst [vmem:[%s423] sm:$0xff] %v3382
      %3511 = vst [vmem:[%s423 + $0x8] sm:$0xff] %v3383
      %3512 = vst [vmem:[%s423 + $0x10] sm:$0xff] %v3384
      %vm3513 = vcmask 125952
      %3514 = vst.msk [vmem:[%s423 + $0x18] sm:$0xf] %vm3513, %v3385
      %3515 = vst [vmem:[%s423 + $0x1c] sm:$0xff] %v3386
      %3516 = vst [vmem:[%s423 + $0x24] sm:$0xff] %v3387
      %3517 = vst [vmem:[%s423 + $0x2c] sm:$0xff] %v3388
      %3518 = vst.msk [vmem:[%s423 + $0x34] sm:$0xf] %vm3513, %v3389
      %3519 = vst [vmem:[%s423 + $0x38] sm:$0xff] %v3390
      %3520 = vst [vmem:[%s423 + $0x40] sm:$0xff] %v3391
      %3521 = vst [vmem:[%s423 + $0x48] sm:$0xff] %v3392
      %3522 = vst.msk [vmem:[%s423 + $0x50] sm:$0xf] %vm3513, %v3393
      %3523 = vst [vmem:[%s423 + $0x54] sm:$0xff] %v3394
      %3524 = vst [vmem:[%s423 + $0x5c] sm:$0xff] %v3395
      %3525 = vst [vmem:[%s423 + $0x64] sm:$0xff] %v3396
      %3526 = vst.msk [vmem:[%s423 + $0x6c] sm:$0xf] %vm3513, %v3397
      %3527 = vst [vmem:[%s423 + $0x70] sm:$0xff] %v3398
      %3528 = vst [vmem:[%s423 + $0x78] sm:$0xff] %v3399
      %3529 = vst [vmem:[%s423 + $0x80] sm:$0xff] %v3400
      %3530 = vst.msk [vmem:[%s423 + $0x88] sm:$0xf] %vm3513, %v3401
      %3531 = vst [vmem:[%s423 + $0x8c] sm:$0xff] %v3402
      %3532 = vst [vmem:[%s423 + $0x94] sm:$0xff] %v3403
      %3533 = vst [vmem:[%s423 + $0x9c] sm:$0xff] %v3404
      %3534 = vst.msk [vmem:[%s423 + $0xa4] sm:$0xf] %vm3513, %v3405
      %3535 = vst [vmem:[%s423 + $0xa8] sm:$0xff] %v3406
      %3536 = vst [vmem:[%s423 + $0xb0] sm:$0xff] %v3407
      %3537 = vst [vmem:[%s423 + $0xb8] sm:$0xff] %v3408
      %3538 = vst.msk [vmem:[%s423 + $0xc0] sm:$0xf] %vm3513, %v3409
      %3539 = vst [vmem:[%s423 + $0xc4] sm:$0xff] %v3410
      %3540 = vst [vmem:[%s423 + $0xcc] sm:$0xff] %v3411
      %3541 = vst [vmem:[%s423 + $0xd4] sm:$0xff] %v3412
      %3542 = vst.msk [vmem:[%s423 + $0xdc] sm:$0xf] %vm3513, %v3413
      %3543 = vst [vmem:[%s423 + $0xe0] sm:$0xff] %v3414
      %3544 = vst [vmem:[%s423 + $0xe8] sm:$0xff] %v3415
      %3545 = vst [vmem:[%s423 + $0xf0] sm:$0xff] %v3416
      %3546 = vst.msk [vmem:[%s423 + $0xf8] sm:$0xf] %vm3513, %v3417
      %3547 = vst [vmem:[%s423 + $0xfc] sm:$0xff] %v3418
      %3548 = vst [vmem:[%s423 + $0x104] sm:$0xff] %v3419
      %3549 = vst [vmem:[%s423 + $0x10c] sm:$0xff] %v3420
      %3550 = vst.msk [vmem:[%s423 + $0x114] sm:$0xf] %vm3513, %v3421
      %3551 = vst [vmem:[%s423 + $0x118] sm:$0xff] %v3422
      %3552 = vst [vmem:[%s423 + $0x120] sm:$0xff] %v3423
      %3553 = vst [vmem:[%s423 + $0x128] sm:$0xff] %v3424
      %3554 = vst.msk [vmem:[%s423 + $0x130] sm:$0xf] %vm3513, %v3425
      %3555 = vst [vmem:[%s423 + $0x134] sm:$0xff] %v3426
      %3556 = vst [vmem:[%s423 + $0x13c] sm:$0xff] %v3427
      %3557 = vst [vmem:[%s423 + $0x144] sm:$0xff] %v3428
      %3558 = vst.msk [vmem:[%s423 + $0x14c] sm:$0xf] %vm3513, %v3429
      %3559 = vst [vmem:[%s423 + $0x150] sm:$0xff] %v3430
      %3560 = vst [vmem:[%s423 + $0x158] sm:$0xff] %v3431
      %3561 = vst [vmem:[%s423 + $0x160] sm:$0xff] %v3432
      %3562 = vst.msk [vmem:[%s423 + $0x168] sm:$0xf] %vm3513, %v3433
      %3563 = vst [vmem:[%s423 + $0x16c] sm:$0xff] %v3434
      %3564 = vst [vmem:[%s423 + $0x174] sm:$0xff] %v3435
      %3565 = vst [vmem:[%s423 + $0x17c] sm:$0xff] %v3436
      %3566 = vst.msk [vmem:[%s423 + $0x184] sm:$0xf] %vm3513, %v3437
      %3567 = vst [vmem:[%s423 + $0x188] sm:$0xff] %v3438
      %3568 = vst [vmem:[%s423 + $0x190] sm:$0xff] %v3439
      %3569 = vst [vmem:[%s423 + $0x198] sm:$0xff] %v3440
      %3570 = vst.msk [vmem:[%s423 + $0x1a0] sm:$0xf] %vm3513, %v3441
      %3571 = vst [vmem:[%s423 + $0x1a4] sm:$0xff] %v3442
      %3572 = vst [vmem:[%s423 + $0x1ac] sm:$0xff] %v3443
      %3573 = vst [vmem:[%s423 + $0x1b4] sm:$0xff] %v3444
      %3574 = vst.msk [vmem:[%s423 + $0x1bc] sm:$0xf] %vm3513, %v3445
      %vm3575 = vcmask 261120
      %3576 = vst.msk [vmem:[%s429] sm:$0xff] %vm3575, %v1535
      %3577 = vst.msk [vmem:[%s429 + $0x8] sm:$0xff] %vm3575, %v1538
      %3578 = vst.msk [vmem:[%s429 + $0x10] sm:$0xff] %vm3575, %v1543
      %3579 = vst.msk [vmem:[%s429 + $0x18] sm:$0xff] %vm3575, %v1546
      %3580 = vst.msk [vmem:[%s429 + $0x20] sm:$0xff] %vm3575, %v1551
      %3581 = vst.msk [vmem:[%s429 + $0x28] sm:$0xff] %vm3575, %v1554
      %3582 = vst.msk [vmem:[%s429 + $0x30] sm:$0xff] %vm3575, %v1559
      %3583 = vst.msk [vmem:[%s429 + $0x38] sm:$0xff] %vm3575, %v1562
      %3584 = vst.msk [vmem:[%s429 + $0x40] sm:$0xff] %vm3575, %v1567
      %3585 = vst.msk [vmem:[%s429 + $0x48] sm:$0xff] %vm3575, %v1570
      %3586 = vst.msk [vmem:[%s429 + $0x50] sm:$0xff] %vm3575, %v1575
      %3587 = vst.msk [vmem:[%s429 + $0x58] sm:$0xff] %vm3575, %v1578
      %3588 = vst.msk [vmem:[%s429 + $0x60] sm:$0xff] %vm3575, %v1583
      %3589 = vst.msk [vmem:[%s429 + $0x68] sm:$0xff] %vm3575, %v1586
      %3590 = vst.msk [vmem:[%s429 + $0x70] sm:$0xff] %vm3575, %v1591
      %3591 = vst.msk [vmem:[%s429 + $0x78] sm:$0xff] %vm3575, %v1594
      %s3592 = smul.u32 16, %s23
      %p3593 = scmp.lt.s32.totalorder %s3592, 31
      %s3594 = scalar_select %p3593, %s3592, 31
      %s3595 = smul.addr %s3594, 7
      %s3596 = smul.addr %s3595, 4
      %s3597 = scalar_lea.vmem %s10, %s3596
      %s3598 = smul.u32 16, %s23
      %p3599 = scmp.lt.s32.totalorder %s3598, 31
      %s3600 = scalar_select %p3599, %s3598, 31
      %s3601 = smul.addr %s3600, 8
      %s3602 = scalar_lea.vmem %s11, %s3601
      // Predicated region
      $region61: #{vae_forward.1} parent=59 // pred_check
        %p3603 = pneg %p261
      $region62: #{vae_forward.1} parent=59 // pred_check_branch
        %3605 = sbr.rel (%p3603) target = $region64
      $region63: #{vae_forward.1} parent=59 // pred_region
        %s3606 = smul.u32 16, %s23
      $region64: #{vae_forward.1} parent=59 // pred_fallthru
        _
      // Predicated region
      $region65: #{vae_forward.1} parent=59 // pred_check
        %p3607 = pneg %p287
      $region66: #{vae_forward.1} parent=59 // pred_check_branch
        %3609 = sbr.rel (%p3607) target = $region68
      $region67: #{vae_forward.1} parent=59 // pred_region
        %s3610 = smul.u32 16, %s23
      $region68: #{vae_forward.1} parent=59 // pred_fallthru
        _
    $region60: #{vae_forward.1} parent=5 // pred_fallthru
      _
    %p3611 = scmp.le.s32.totalorder 2, %s18
    // Predicated region
    $region69: #{vae_forward.1} parent=5 // pred_check
      %p3612 = pneg %p3611
    $region70: #{vae_forward.1} parent=5 // pred_check_branch
      %3614 = sbr.rel (%p3612) target = $region72
    $region71: #{vae_forward.1} parent=5 // pred_region
      %s3615 = ssub.s32 %s18, 2
      // Predicated region
      $region73: #{vae_forward.1} parent=71 // pred_check
        %p3616 = pneg %p267
      $region74: #{vae_forward.1} parent=71 // pred_check_branch
        %3618 = sbr.rel (%p3616) target = $region76
      $region75: #{vae_forward.1} parent=71 // pred_region
        %s3619 = smul.u32 16, %s24
        %p3620 = scmp.lt.s32.totalorder %s3619, 31
        %s3621 = scalar_select %p3620, %s3619, 31
        %s3622 = smul.addr %s3621, 7
        %s3623 = smul.addr %s3622, 4
        %s3624 = scalar_lea.vmem %s10, %s3623
      $region76: #{vae_forward.1} parent=71 // pred_fallthru
        _
      // Predicated region
      $region77: #{vae_forward.1} parent=71 // pred_check
        %p3625 = pneg %p293
      $region78: #{vae_forward.1} parent=71 // pred_check_branch
        %3627 = sbr.rel (%p3625) target = $region80
      $region79: #{vae_forward.1} parent=71 // pred_region
        %s3628 = smul.u32 16, %s24
        %p3629 = scmp.lt.s32.totalorder %s3628, 31
        %s3630 = scalar_select %p3629, %s3628, 31
        %s3631 = smul.addr %s3630, 8
        %s3632 = scalar_lea.vmem %s11, %s3631
      $region80: #{vae_forward.1} parent=71 // pred_fallthru
        _
    $region72: #{vae_forward.1} parent=5 // pred_fallthru
      _
  $region6: #{vae_forward.1} parent=0 // loop_footer
    %s22 = sadd.s32 1, %s18
  $region7: #{vae_forward.1} parent=0 // loop_footer_branch
    %17 = sbr.rel target = $region3
  $region8: #{vae_forward.1} parent=0 // loop_exit
    _

</llo_original>
